<compile_context>
chip_gen: v5e
topology: v5e:2x2
jax: 0.10.0
libtpu: 0.0.40
codegen_flags: <defaults>
</compile_context>

<pallas_src>
import functools

import jax
import jax.numpy as jnp
from jax.experimental import pallas as pl
from jax.experimental.pallas import tpu as pltpu

EMBED_DIM = 16
NUM_HEADS = 1
MAX_SEQ = int(128 * 88 * 4 / 64)      # 704 (LearnablePositionalEncoding default)
BN_EPS = 1e-5
LN_EPS = 1e-5

_TM = 512                              # lane tile for the M (=B*H*W) dimension
_VMEM_LIMIT = 32 * 1024 * 1024         # explicit scoped-VMEM limit (safe on v5e/v6e/v7x)
_USE_APPROX_RECIP = True               # ~1e-3 rel err; set False for exact divides


def _round_up(x, m):
  return ((x + m - 1) // m) * m


# --------------------------------------------------------------------------
# in-kernel helpers
# --------------------------------------------------------------------------
def _recip(x):
  if _USE_APPROX_RECIP:
    return pl.reciprocal(x, approx=True)
  return 1.0 / x


def _gelu_erf(x):
  """Exact (erf-based) GELU; erf via A&S 7.1.26, reciprocal on the EUP."""
  a1, a2, a3, a4, a5 = 0.254829592, -0.284496736, 1.421413741, -1.453152027, 1.061405429
  pc = 0.3275911
  z = x * 0.7071067811865476
  s = jnp.where(z >= 0, 1.0, -1.0)
  az = jnp.abs(z)
  t = _recip(1.0 + pc * az)
  poly = ((((a5 * t + a4) * t + a3) * t + a2) * t + a1) * t
  erf = s * (1.0 - poly * jnp.exp(-az * az))
  return 0.5 * x * (1.0 + erf)


def _layernorm_t(x, g, b):
  """LayerNorm over the feature axis of a (D, S) channel-major block."""
  mu = jnp.mean(x, axis=0, keepdims=True)
  xc = x - mu
  var = jnp.mean(xc * xc, axis=0, keepdims=True)
  return xc * jax.lax.rsqrt(var + LN_EPS) * g + b


# --------------------------------------------------------------------------
# Pallas kernel 1: lane-dense matmul  yt = act((Wt @ Xt) * scale + shift)
#   Xt block: (K, TM)   Wt resident: (Cout, K)   out block: (Cout, TM)
# --------------------------------------------------------------------------
def _mm_kernel(x_ref, w_ref, scale_ref, shift_ref, o_ref, *, act):
  y = jnp.dot(w_ref[...], x_ref[...], preferred_element_type=jnp.float32)
  y = y * scale_ref[...] + shift_ref[...]
  if act == "gelu":
    y = _gelu_erf(y)
  o_ref[...] = y


# Pallas kernel 2: same matmul with conv->BN->GELU->2x2-maxpool fused:
# the 4 phases of the conv output (the 2x2 pooling window) arrive stacked as
# x4_ref (4, K, TM); the kernel max-reduces them after the nonlinear epilogue.
def _mm_pool_kernel(x4_ref, w_ref, scale_ref, shift_ref, o_ref):
  w = w_ref[...]
  scale = scale_ref[...]
  shift = shift_ref[...]
  acc = None
  for ph in range(4):                      # static unroll over the 4 phases
    y = jnp.dot(w, x4_ref[ph], preferred_element_type=jnp.float32)
    y = _gelu_erf(y * scale + shift)
    acc = y if acc is None else jnp.maximum(acc, y)
  o_ref[...] = acc


def matmul_lane_dense(xt, wt, scale, shift, act="none", *, pooled=False, tm=_TM):
  """Gridded, pipelined, lane-dense matmul with fused bias/BN/GELU (and pool)."""
  m = xt.shape[-1]
  cout = wt.shape[0]
  tm = min(tm, _round_up(m, 128))
  m_pad = _round_up(m, tm)
  if m_pad != m:
    pad = [(0, 0)] * (xt.ndim - 1) + [(0, m_pad - m)]
    xt = jnp.pad(xt, pad)
  grid = (m_pad // tm,)
  if pooled:
    kernel = _mm_pool_kernel
    x_spec = pl.BlockSpec((4, xt.shape[1], tm), lambda i: (0, 0, i))
  else:
    kernel = functools.partial(_mm_kernel, act=act)
    x_spec = pl.BlockSpec((xt.shape[0], tm), lambda i: (0, i))
  out = pl.pallas_call(
      kernel,
      grid=grid,
      out_shape=jax.ShapeDtypeStruct((cout, m_pad), jnp.float32),
      in_specs=[x_spec,
                pl.BlockSpec(wt.shape, lambda i: (0, 0)),
                pl.BlockSpec((cout, 1), lambda i: (0, 0)),
                pl.BlockSpec((cout, 1), lambda i: (0, 0))],
      out_specs=pl.BlockSpec((cout, tm), lambda i: (0, i)),
      compiler_params=pltpu.CompilerParams(
          dimension_semantics=("parallel",),
          vmem_limit_bytes=_VMEM_LIMIT),
  )(xt, wt, scale.reshape(cout, 1), shift.reshape(cout, 1))
  return out[:, :m]


# --------------------------------------------------------------------------
# channel-major im2col glue (no 4x zero-insertion anywhere).
# TODO(synk): fuse im2col into the matmul kernel via haloed manual DMA so the
#             (K, M) patch matrix never materializes in HBM.
# --------------------------------------------------------------------------
def _im2col_cm(xp, taps, ho, wo, stride=1):
  """xp: (C, B, Hp, Wp) padded channel-major -> (len(taps)*C, B*ho*wo)."""
  c, b = xp.shape[0], xp.shape[1]
  cols = []
  for (dy, dx) in taps:
    sl = xp[:, :, dy:dy + stride * (ho - 1) + 1:stride,
            dx:dx + stride * (wo - 1) + 1:stride]
    cols.append(sl.reshape(c, b * ho * wo))
  return jnp.concatenate(cols, axis=0)


def conv3x3_pool_cm(x_cm, w_oihw, scale, shift):
  """3x3 conv (pad 1) + BN + GELU + 2x2 maxpool, all fused; channel-major I/O."""
  cin, b, h, w = x_cm.shape
  ho, wo = h // 2, w // 2
  cout = w_oihw.shape[0]
  xp = jnp.pad(x_cm, ((0, 0), (0, 0), (1, 1), (1, 1)))
  conv_taps = [(i, j) for i in range(3) for j in range(3)]
  phases = []
  for py in (0, 1):
    for px in (0, 1):
      taps = [(py + i, px + j) for (i, j) in conv_taps]
      phases.append(_im2col_cm(xp, taps, ho, wo, stride=2))
  x4 = jnp.stack(phases, axis=0)                       # (4, 9*Cin, B*ho*wo)
  wt = jnp.transpose(w_oihw, (0, 2, 3, 1)).reshape(cout, 9 * cin)
  y = matmul_lane_dense(x4, wt, scale, shift, pooled=True)
  return y.reshape(cout, b, ho, wo)


def conv3x3_cm(x_cm, w_oihw, scale, shift, act):
  """3x3 conv (pad 1) with fused bias/BN/act epilogue; channel-major I/O."""
  cin, b, h, w = x_cm.shape
  cout = w_oihw.shape[0]
  xp = jnp.pad(x_cm, ((0, 0), (0, 0), (1, 1), (1, 1)))
  taps = [(i, j) for i in range(3) for j in range(3)]
  xt = _im2col_cm(xp, taps, h, w, stride=1)            # (9*Cin, B*H*W)
  wt = jnp.transpose(w_oihw, (0, 2, 3, 1)).reshape(cout, 9 * cin)
  y = matmul_lane_dense(xt, wt, scale, shift, act)
  return y.reshape(cout, b, h, w)


def _deconv_s2_weight(w_iohw):
  """4-phase sub-pixel weight (4*Cout, 4*Cin) for stride-2 ConvTranspose 3x3."""
  cin, cout = w_iohw.shape[0], w_iohw.shape[1]
  rows = []
  for py in (0, 1):
    for px in (0, 1):
      blocks = []
      for dy in (0, 1):
        for dx in (0, 1):
          ky, kx = py - 2 * dy + 1, px - 2 * dx + 1
          if 0 <= ky < 3 and 0 <= kx < 3:
            blocks.append(jnp.transpose(w_iohw[:, :, ky, kx]))   # (Cout, Cin)
          else:
            blocks.append(jnp.zeros((cout, cin), jnp.float32))
      rows.append(jnp.concatenate(blocks, axis=1))               # (Cout, 4*Cin)
  return jnp.concatenate(rows, axis=0)                           # (4*Cout, 4*Cin)


def deconv3x3_s2_cm(x_cm, w_iohw, scale, shift, act):
  """ConvTranspose2d(3x3, stride=2, padding=1, output_padding=1) via the
  4-phase sub-pixel decomposition (no zero-inserted 2x tensor)."""
  cin, b, h, w = x_cm.shape
  cout = w_iohw.shape[1]
  xp = jnp.pad(x_cm, ((0, 0), (0, 0), (0, 1), (0, 1)))   # bottom/right halo only
  taps = [(0, 0), (0, 1), (1, 0), (1, 1)]
  pt = _im2col_cm(xp, taps, h, w, stride=1)              # (4*Cin, B*H*W)
  wt = _deconv_s2_weight(w_iohw)                         # (4*Cout, 4*Cin)
  y = matmul_lane_dense(pt, wt, jnp.tile(scale, 4), jnp.tile(shift, 4), act)
  y = y.reshape(2, 2, cout, b, h, w)                     # (py, px, c, b, m, n)
  y = jnp.transpose(y, (2, 3, 4, 0, 5, 1)).reshape(cout, b, 2 * h, 2 * w)
  return y


# --------------------------------------------------------------------------
# Pallas kernel 3: fused (pos-embed + pre-norm transformer layer + CNN skip),
# transposed (D, S) layout so everything but the (S,S) score matrix is
# lane-dense along S.  One grid step per batch element ("parallel").
# --------------------------------------------------------------------------
def _transformer_kernel(x_ref, pos_ref, ln1g_ref, ln1b_ref,
                        wq_ref, bq_ref, wk_ref, bk_ref, wv_ref, bv_ref,
                        wo_ref, bo_ref, ln2g_ref, ln2b_ref,
                        w1_ref, b1_ref, w2_ref, b2_ref, o_ref, *, head_scale):
  x_in = x_ref[0]                                   # (D, S) cnn features
  x = x_in + pos_ref[...]                           # learnable positional encoding

  # --- pre-norm single-head self-attention ---
  xn1 = _layernorm_t(x, ln1g_ref[...], ln1b_ref[...])
  q = jnp.dot(wq_ref[...], xn1, preferred_element_type=jnp.float32) + bq_ref[...]
  k = jnp.dot(wk_ref[...], xn1, preferred_element_type=jnp.float32) + bk_ref[...]
  v = jnp.dot(wv_ref[...], xn1, preferred_element_type=jnp.float32) + bv_ref[...]
  scores = jax.lax.dot_general(q, k, (((0,), (0,)), ((), ())),
                               preferred_element_type=jnp.float32) * head_scale
  scores = scores - jnp.max(scores, axis=-1, keepdims=True)
  e = jnp.exp(scores)
  attn = e * _recip(jnp.sum(e, axis=-1, keepdims=True))            # (S, S)
  ctx = jax.lax.dot_general(v, attn, (((1,), (1,)), ((), ())),
                            preferred_element_type=jnp.float32)    # (D, S)
  ctx = jnp.dot(wo_ref[...], ctx, preferred_element_type=jnp.float32) + bo_ref[...]
  x = x + ctx                                       # dropout = identity (eval)

  # --- pre-norm GELU MLP ---
  xn2 = _layernorm_t(x, ln2g_ref[...], ln2b_ref[...])
  f = jnp.dot(w1_ref[...], xn2, preferred_element_type=jnp.float32) + b1_ref[...]
  f = _gelu_erf(f)
  f = jnp.dot(w2_ref[...], f, preferred_element_type=jnp.float32) + b2_ref[...]
  x = x + f

  o_ref[0] = x + x_in                               # skip connection with cnn_features


def transformer_block(seq, pos_t, tp):
  b, d, s = seq.shape

  def full(a):
    nd = a.ndim
    return pl.BlockSpec(a.shape, lambda i, _n=nd: (0,) * _n)

  args = (seq, pos_t,
          tp["ln1_g"], tp["ln1_b"],
          tp["wq"], tp["bq"], tp["wk"], tp["bk"], tp["wv"], tp["bv"],
          tp["wo"], tp["bo"], tp["ln2_g"], tp["ln2_b"],
          tp["w1"], tp["b1"], tp["w2"], tp["b2"])
  in_specs = [pl.BlockSpec((1, d, s), lambda i: (i, 0, 0))]
  in_specs += [full(a) for a in args[1:]]
  return pl.pallas_call(
      functools.partial(_transformer_kernel,
                        head_scale=1.0 / float(d // NUM_HEADS) ** 0.5),
      grid=(b,),
      out_shape=jax.ShapeDtypeStruct((b, d, s), jnp.float32),
      in_specs=in_specs,
      out_specs=pl.BlockSpec((1, d, s), lambda i: (i, 0, 0)),
      compiler_params=pltpu.CompilerParams(
          dimension_semantics=("parallel",),
          vmem_limit_bytes=_VMEM_LIMIT),
  )(*args)


# --------------------------------------------------------------------------
# parameters (deterministic synthetic init, shapes match the PyTorch module)
# --------------------------------------------------------------------------
def init_params(key):
  ks = jax.random.split(key, 24)
  n = lambda k, s, std=0.05: std * jax.random.normal(k, s, jnp.float32)
  p = {}
  # encoder
  p["enc1_w"] = n(ks[0], (8, 1, 3, 3));   p["enc1_b"] = n(ks[1], (8,))
  p["bn1_g"] = jnp.ones((8,), jnp.float32);  p["bn1_b"] = n(ks[2], (8,), 0.01)
  p["enc2_w"] = n(ks[3], (16, 8, 3, 3));  p["enc2_b"] = n(ks[4], (16,))
  p["bn2_g"] = jnp.ones((16,), jnp.float32); p["bn2_b"] = n(ks[5], (16,), 0.01)
  # positional embedding (1, 704, 16), std=0.02
  p["pos"] = 0.02 * jax.random.normal(ks[6], (1, MAX_SEQ, EMBED_DIM), jnp.float32)
  # transformer encoder layer (d_model=16, nhead=1, ff=64, pre-norm, gelu)
  p["in_proj_w"] = n(ks[7], (3 * EMBED_DIM, EMBED_DIM))
  p["in_proj_b"] = n(ks[8], (3 * EMBED_DIM,))
  p["out_proj_w"] = n(ks[9], (EMBED_DIM, EMBED_DIM))
  p["out_proj_b"] = n(ks[10], (EMBED_DIM,))
  p["lin1_w"] = n(ks[11], (4 * EMBED_DIM, EMBED_DIM)); p["lin1_b"] = n(ks[12], (4 * EMBED_DIM,))
  p["lin2_w"] = n(ks[13], (EMBED_DIM, 4 * EMBED_DIM)); p["lin2_b"] = n(ks[14], (EMBED_DIM,))
  p["ln1_g"] = jnp.ones((EMBED_DIM,), jnp.float32); p["ln1_b"] = jnp.zeros((EMBED_DIM,), jnp.float32)
  p["ln2_g"] = jnp.ones((EMBED_DIM,), jnp.float32); p["ln2_b"] = jnp.zeros((EMBED_DIM,), jnp.float32)
  # decoder (ConvTranspose2d weights stored as (in, out, kh, kw) like PyTorch)
  p["dec1_w"] = n(ks[15], (16, 16, 3, 3)); p["dec1_b"] = n(ks[16], (16,))
  p["bn3_g"] = jnp.ones((16,), jnp.float32); p["bn3_b"] = jnp.zeros((16,), jnp.float32)
  p["dec2_w"] = n(ks[17], (16, 8, 3, 3));  p["dec2_b"] = n(ks[18], (8,))
  p["bn4_g"] = jnp.ones((8,), jnp.float32);  p["bn4_b"] = jnp.zeros((8,), jnp.float32)
  p["dec3_w"] = n(ks[19], (8, 1, 3, 3));   p["dec3_b"] = n(ks[20], (1,))
  return p


# --------------------------------------------------------------------------
# full forward pass (public I/O is NCHW like PyTorch)
# --------------------------------------------------------------------------
def hybrid_transformer_forward(x_nchw, p):
  b, cin, h, w = x_nchw.shape
  assert cin == 1 and h % 4 == 0 and w % 4 == 0, "expect 1-channel, /4-divisible input"
  x_cm = jnp.transpose(x_nchw, (1, 0, 2, 3)).astype(jnp.float32)   # channel-major (1,B,H,W)

  bn_scale = lambda g: g / jnp.sqrt(1.0 + BN_EPS)   # eval BN (mean=0, var=1)

  # --- encoder: (conv3x3 + BN + GELU + 2x2 maxpool) x 2, pool fused in-kernel ---
  s1 = bn_scale(p["bn1_g"])
  hcm = conv3x3_pool_cm(x_cm, p["enc1_w"], s1, p["enc1_b"] * s1 + p["bn1_b"])
  s2 = bn_scale(p["bn2_g"])
  hcm = conv3x3_pool_cm(hcm, p["enc2_w"], s2, p["enc2_b"] * s2 + p["bn2_b"])
  c, _, hh, ww = hcm.shape                          # cnn_features (C, B, H/4, W/4)
  s = hh * ww
  assert s <= MAX_SEQ, f"sequence length {s} exceeds positional table {MAX_SEQ}"

  # --- pos-embed + transformer layer + cnn skip (one fused Pallas kernel) ---
  seq = jnp.transpose(hcm.reshape(c, b, s), (1, 0, 2))        # (B, D, S)
  pos_t = jnp.transpose(p["pos"][0, :s, :])                   # (D, S)
  d = EMBED_DIM
  tp = {
      "ln1_g": p["ln1_g"].reshape(d, 1), "ln1_b": p["ln1_b"].reshape(d, 1),
      "wq": p["in_proj_w"][:d],          "bq": p["in_proj_b"][:d].reshape(d, 1),
      "wk": p["in_proj_w"][d:2 * d],     "bk": p["in_proj_b"][d:2 * d].reshape(d, 1),
      "wv": p["in_proj_w"][2 * d:],      "bv": p["in_proj_b"][2 * d:].reshape(d, 1),
      "wo": p["out_proj_w"],             "bo": p["out_proj_b"].reshape(d, 1),
      "ln2_g": p["ln2_g"].reshape(d, 1), "ln2_b": p["ln2_b"].reshape(d, 1),
      "w1": p["lin1_w"],                 "b1": p["lin1_b"].reshape(-1, 1),
      "w2": p["lin2_w"],                 "b2": p["lin2_b"].reshape(d, 1),
  }
  y = transformer_block(seq, pos_t, tp)                       # (B, D, S), skip included
  hcm = jnp.transpose(y, (1, 0, 2)).reshape(c, b, hh, ww)

  # --- decoder ---
  # dec1: ConvTranspose stride 1, pad 1 == 3x3 conv with flipped/transposed kernel
  w_dec1 = jnp.transpose(jnp.flip(p["dec1_w"], axis=(2, 3)), (1, 0, 2, 3))
  s3 = bn_scale(p["bn3_g"])
  hcm = conv3x3_cm(hcm, w_dec1, s3, p["dec1_b"] * s3 + p["bn3_b"], act="gelu")
  # dec2/dec3: stride-2 ConvTranspose via 4-phase sub-pixel decomposition
  s4 = bn_scale(p["bn4_g"])
  hcm = deconv3x3_s2_cm(hcm, p["dec2_w"], s4, p["dec2_b"] * s4 + p["bn4_b"], act="gelu")
  hcm = deconv3x3_s2_cm(hcm, p["dec3_w"], jnp.ones((1,), jnp.float32), p["dec3_b"],
                        act="none")
  return jnp.transpose(hcm, (1, 0, 2, 3))                     # -> NCHW


if __name__ == "__main__":
  key = jax.random.PRNGKey(0)
  kx, kp = jax.random.split(key)
  x = jax.random.normal(kx, (2, 1, 16, 16), jnp.float32)      # NCHW, like PyTorch
  params = init_params(kp)
  out = jax.jit(hybrid_transformer_forward)(x, params)
  out = jax.block_until_ready(out)
  assert out.shape == (2, 1, 16, 16), out.shape
  assert bool(jnp.all(jnp.isfinite(out)))
  print("KERNEL_OK")
</pallas_src>

<mosaic_0001>
module attributes {stable_mosaic.version = 11 : i64} {
  func.func @_mm_pool_kernel(%arg0: i32, %arg1: memref<4x9x128xf32, #tpu.memory_space<vmem>>, %arg2: memref<8x9xf32, #tpu.memory_space<vmem>>, %arg3: memref<8x1xf32, #tpu.memory_space<vmem>>, %arg4: memref<8x1xf32, #tpu.memory_space<vmem>>, %arg5: memref<8x128xf32, #tpu.memory_space<vmem>>) attributes {dimension_semantics = [#tpu.dimension_semantics<parallel>], iteration_bounds = array<i64: 1>, scalar_prefetch = 0 : i64, scratch_operands = 0 : i64, tpu.core_type = #tpu.core_type<tc>, window_params = [{transform_indices = @transform_0, window_bounds = array<i64: 4, 9, 128>}, {pipeline_mode = #tpu.pipeline_mode<synchronous>, transform_indices = @transform_1, window_bounds = array<i64: 8, 9>}, {pipeline_mode = #tpu.pipeline_mode<synchronous>, transform_indices = @transform_2, window_bounds = array<i64: 8, 1>}, {pipeline_mode = #tpu.pipeline_mode<synchronous>, transform_indices = @transform_3, window_bounds = array<i64: 8, 1>}, {transform_indices = @transform_4, window_bounds = array<i64: 8, 128>}]} {
    %c0 = arith.constant 0 : index
    %c0_0 = arith.constant 0 : index
    %0 = vector.load %arg2[%c0, %c0_0] : memref<8x9xf32, #tpu.memory_space<vmem>>, vector<8x9xf32>
    %c0_1 = arith.constant 0 : index
    %c0_2 = arith.constant 0 : index
    %1 = vector.load %arg3[%c0_1, %c0_2] : memref<8x1xf32, #tpu.memory_space<vmem>>, vector<8x1xf32>
    %c0_3 = arith.constant 0 : index
    %c0_4 = arith.constant 0 : index
    %2 = vector.load %arg4[%c0_3, %c0_4] : memref<8x1xf32, #tpu.memory_space<vmem>>, vector<8x1xf32>
    %c0_5 = arith.constant 0 : index
    %c0_6 = arith.constant 0 : index
    %c0_7 = arith.constant 0 : index
    %3 = vector.load %arg1[%c0_5, %c0_6, %c0_7] : memref<4x9x128xf32, #tpu.memory_space<vmem>>, vector<1x9x128xf32>
    %4 = vector.shape_cast %3 : vector<1x9x128xf32> to vector<9x128xf32>
    %cst = arith.constant dense<0.000000e+00> : vector<8x128xf32>
    %5 = tpu.matmul %0, %4, %cst {dimension_numbers = #tpu.dot_dimension_numbers<[1], [0], [0], [1], [0, 0, 1, 1], [], []>} : vector<8x9xf32>, vector<9x128xf32>, vector<8x128xf32> -> vector<8x128xf32>
    %6 = vector.broadcast %1 : vector<8x1xf32> to vector<8x128xf32>
    %7 = arith.mulf %5, %6 : vector<8x128xf32>
    %8 = vector.broadcast %2 : vector<8x1xf32> to vector<8x128xf32>
    %9 = arith.addf %7, %8 : vector<8x128xf32>
    %cst_8 = arith.constant 0.707106769 : f32
    %10 = vector.broadcast %cst_8 : f32 to vector<8x128xf32>
    %11 = arith.mulf %9, %10 : vector<8x128xf32>
    %cst_9 = arith.constant 0.000000e+00 : f32
    %12 = vector.broadcast %cst_9 : f32 to vector<8x128xf32>
    %13 = arith.cmpf oge, %11, %12 : vector<8x128xf32>
    %cst_10 = arith.constant 1.000000e+00 : f32
    %cst_11 = arith.constant -1.000000e+00 : f32
    %14 = vector.broadcast %cst_10 : f32 to vector<8x128xf32>
    %15 = vector.broadcast %cst_11 : f32 to vector<8x128xf32>
    %16 = arith.select %13, %14, %15 : vector<8x128xi1>, vector<8x128xf32>
    %17 = math.absf %11 : vector<8x128xf32>
    %cst_12 = arith.constant 0.327591091 : f32
    %18 = vector.broadcast %cst_12 : f32 to vector<8x128xf32>
    %19 = arith.mulf %18, %17 : vector<8x128xf32>
    %cst_13 = arith.constant 1.000000e+00 : f32
    %20 = vector.broadcast %cst_13 : f32 to vector<8x128xf32>
    %21 = arith.addf %20, %19 : vector<8x128xf32>
    %22 = tpu.reciprocal %21 {approx = true} : vector<8x128xf32> -> vector<8x128xf32>
    %cst_14 = arith.constant 1.06140542 : f32
    %23 = vector.broadcast %cst_14 : f32 to vector<8x128xf32>
    %24 = arith.mulf %23, %22 : vector<8x128xf32>
    %cst_15 = arith.constant -1.45315206 : f32
    %25 = vector.broadcast %cst_15 : f32 to vector<8x128xf32>
    %26 = arith.addf %24, %25 : vector<8x128xf32>
    %27 = arith.mulf %26, %22 : vector<8x128xf32>
    %cst_16 = arith.constant 1.42141378 : f32
    %28 = vector.broadcast %cst_16 : f32 to vector<8x128xf32>
    %29 = arith.addf %27, %28 : vector<8x128xf32>
    %30 = arith.mulf %29, %22 : vector<8x128xf32>
    %cst_17 = arith.constant -0.284496725 : f32
    %31 = vector.broadcast %cst_17 : f32 to vector<8x128xf32>
    %32 = arith.addf %30, %31 : vector<8x128xf32>
    %33 = arith.mulf %32, %22 : vector<8x128xf32>
    %cst_18 = arith.constant 0.254829586 : f32
    %34 = vector.broadcast %cst_18 : f32 to vector<8x128xf32>
    %35 = arith.addf %33, %34 : vector<8x128xf32>
    %36 = arith.mulf %35, %22 : vector<8x128xf32>
    %cst_19 = arith.constant 0.000000e+00 : f32
    %37 = vector.broadcast %cst_19 : f32 to vector<8x128xf32>
    %38 = arith.subf %37, %17 : vector<8x128xf32>
    %39 = arith.mulf %38, %17 : vector<8x128xf32>
    %40 = math.exp %39 : vector<8x128xf32>
    %41 = arith.mulf %36, %40 : vector<8x128xf32>
    %cst_20 = arith.constant 1.000000e+00 : f32
    %42 = vector.broadcast %cst_20 : f32 to vector<8x128xf32>
    %43 = arith.subf %42, %41 : vector<8x128xf32>
    %44 = arith.mulf %16, %43 : vector<8x128xf32>
    %cst_21 = arith.constant 5.000000e-01 : f32
    %45 = vector.broadcast %cst_21 : f32 to vector<8x128xf32>
    %46 = arith.mulf %45, %9 : vector<8x128xf32>
    %cst_22 = arith.constant 1.000000e+00 : f32
    %47 = vector.broadcast %cst_22 : f32 to vector<8x128xf32>
    %48 = arith.addf %47, %44 : vector<8x128xf32>
    %49 = arith.mulf %46, %48 : vector<8x128xf32>
    %c1 = arith.constant 1 : index
    %c0_23 = arith.constant 0 : index
    %c0_24 = arith.constant 0 : index
    %50 = vector.load %arg1[%c1, %c0_23, %c0_24] : memref<4x9x128xf32, #tpu.memory_space<vmem>>, vector<1x9x128xf32>
    %51 = vector.shape_cast %50 : vector<1x9x128xf32> to vector<9x128xf32>
    %cst_25 = arith.constant dense<0.000000e+00> : vector<8x128xf32>
    %52 = tpu.matmul %0, %51, %cst_25 {dimension_numbers = #tpu.dot_dimension_numbers<[1], [0], [0], [1], [0, 0, 1, 1], [], []>} : vector<8x9xf32>, vector<9x128xf32>, vector<8x128xf32> -> vector<8x128xf32>
    %53 = vector.broadcast %1 : vector<8x1xf32> to vector<8x128xf32>
    %54 = arith.mulf %52, %53 : vector<8x128xf32>
    %55 = vector.broadcast %2 : vector<8x1xf32> to vector<8x128xf32>
    %56 = arith.addf %54, %55 : vector<8x128xf32>
    %cst_26 = arith.constant 0.707106769 : f32
    %57 = vector.broadcast %cst_26 : f32 to vector<8x128xf32>
    %58 = arith.mulf %56, %57 : vector<8x128xf32>
    %cst_27 = arith.constant 0.000000e+00 : f32
    %59 = vector.broadcast %cst_27 : f32 to vector<8x128xf32>
    %60 = arith.cmpf oge, %58, %59 : vector<8x128xf32>
    %cst_28 = arith.constant 1.000000e+00 : f32
    %cst_29 = arith.constant -1.000000e+00 : f32
    %61 = vector.broadcast %cst_28 : f32 to vector<8x128xf32>
    %62 = vector.broadcast %cst_29 : f32 to vector<8x128xf32>
    %63 = arith.select %60, %61, %62 : vector<8x128xi1>, vector<8x128xf32>
    %64 = math.absf %58 : vector<8x128xf32>
    %cst_30 = arith.constant 0.327591091 : f32
    %65 = vector.broadcast %cst_30 : f32 to vector<8x128xf32>
    %66 = arith.mulf %65, %64 : vector<8x128xf32>
    %cst_31 = arith.constant 1.000000e+00 : f32
    %67 = vector.broadcast %cst_31 : f32 to vector<8x128xf32>
    %68 = arith.addf %67, %66 : vector<8x128xf32>
    %69 = tpu.reciprocal %68 {approx = true} : vector<8x128xf32> -> vector<8x128xf32>
    %cst_32 = arith.constant 1.06140542 : f32
    %70 = vector.broadcast %cst_32 : f32 to vector<8x128xf32>
    %71 = arith.mulf %70, %69 : vector<8x128xf32>
    %cst_33 = arith.constant -1.45315206 : f32
    %72 = vector.broadcast %cst_33 : f32 to vector<8x128xf32>
    %73 = arith.addf %71, %72 : vector<8x128xf32>
    %74 = arith.mulf %73, %69 : vector<8x128xf32>
    %cst_34 = arith.constant 1.42141378 : f32
    %75 = vector.broadcast %cst_34 : f32 to vector<8x128xf32>
    %76 = arith.addf %74, %75 : vector<8x128xf32>
    %77 = arith.mulf %76, %69 : vector<8x128xf32>
    %cst_35 = arith.constant -0.284496725 : f32
    %78 = vector.broadcast %cst_35 : f32 to vector<8x128xf32>
    %79 = arith.addf %77, %78 : vector<8x128xf32>
    %80 = arith.mulf %79, %69 : vector<8x128xf32>
    %cst_36 = arith.constant 0.254829586 : f32
    %81 = vector.broadcast %cst_36 : f32 to vector<8x128xf32>
    %82 = arith.addf %80, %81 : vector<8x128xf32>
    %83 = arith.mulf %82, %69 : vector<8x128xf32>
    %cst_37 = arith.constant 0.000000e+00 : f32
    %84 = vector.broadcast %cst_37 : f32 to vector<8x128xf32>
    %85 = arith.subf %84, %64 : vector<8x128xf32>
    %86 = arith.mulf %85, %64 : vector<8x128xf32>
    %87 = math.exp %86 : vector<8x128xf32>
    %88 = arith.mulf %83, %87 : vector<8x128xf32>
    %cst_38 = arith.constant 1.000000e+00 : f32
    %89 = vector.broadcast %cst_38 : f32 to vector<8x128xf32>
    %90 = arith.subf %89, %88 : vector<8x128xf32>
    %91 = arith.mulf %63, %90 : vector<8x128xf32>
    %cst_39 = arith.constant 5.000000e-01 : f32
    %92 = vector.broadcast %cst_39 : f32 to vector<8x128xf32>
    %93 = arith.mulf %92, %56 : vector<8x128xf32>
    %cst_40 = arith.constant 1.000000e+00 : f32
    %94 = vector.broadcast %cst_40 : f32 to vector<8x128xf32>
    %95 = arith.addf %94, %91 : vector<8x128xf32>
    %96 = arith.mulf %93, %95 : vector<8x128xf32>
    %97 = arith.maximumf %49, %96 : vector<8x128xf32>
    %c2 = arith.constant 2 : index
    %c0_41 = arith.constant 0 : index
    %c0_42 = arith.constant 0 : index
    %98 = vector.load %arg1[%c2, %c0_41, %c0_42] : memref<4x9x128xf32, #tpu.memory_space<vmem>>, vector<1x9x128xf32>
    %99 = vector.shape_cast %98 : vector<1x9x128xf32> to vector<9x128xf32>
    %cst_43 = arith.constant dense<0.000000e+00> : vector<8x128xf32>
    %100 = tpu.matmul %0, %99, %cst_43 {dimension_numbers = #tpu.dot_dimension_numbers<[1], [0], [0], [1], [0, 0, 1, 1], [], []>} : vector<8x9xf32>, vector<9x128xf32>, vector<8x128xf32> -> vector<8x128xf32>
    %101 = vector.broadcast %1 : vector<8x1xf32> to vector<8x128xf32>
    %102 = arith.mulf %100, %101 : vector<8x128xf32>
    %103 = vector.broadcast %2 : vector<8x1xf32> to vector<8x128xf32>
    %104 = arith.addf %102, %103 : vector<8x128xf32>
    %cst_44 = arith.constant 0.707106769 : f32
    %105 = vector.broadcast %cst_44 : f32 to vector<8x128xf32>
    %106 = arith.mulf %104, %105 : vector<8x128xf32>
    %cst_45 = arith.constant 0.000000e+00 : f32
    %107 = vector.broadcast %cst_45 : f32 to vector<8x128xf32>
    %108 = arith.cmpf oge, %106, %107 : vector<8x128xf32>
    %cst_46 = arith.constant 1.000000e+00 : f32
    %cst_47 = arith.constant -1.000000e+00 : f32
    %109 = vector.broadcast %cst_46 : f32 to vector<8x128xf32>
    %110 = vector.broadcast %cst_47 : f32 to vector<8x128xf32>
    %111 = arith.select %108, %109, %110 : vector<8x128xi1>, vector<8x128xf32>
    %112 = math.absf %106 : vector<8x128xf32>
    %cst_48 = arith.constant 0.327591091 : f32
    %113 = vector.broadcast %cst_48 : f32 to vector<8x128xf32>
    %114 = arith.mulf %113, %112 : vector<8x128xf32>
    %cst_49 = arith.constant 1.000000e+00 : f32
    %115 = vector.broadcast %cst_49 : f32 to vector<8x128xf32>
    %116 = arith.addf %115, %114 : vector<8x128xf32>
    %117 = tpu.reciprocal %116 {approx = true} : vector<8x128xf32> -> vector<8x128xf32>
    %cst_50 = arith.constant 1.06140542 : f32
    %118 = vector.broadcast %cst_50 : f32 to vector<8x128xf32>
    %119 = arith.mulf %118, %117 : vector<8x128xf32>
    %cst_51 = arith.constant -1.45315206 : f32
    %120 = vector.broadcast %cst_51 : f32 to vector<8x128xf32>
    %121 = arith.addf %119, %120 : vector<8x128xf32>
    %122 = arith.mulf %121, %117 : vector<8x128xf32>
    %cst_52 = arith.constant 1.42141378 : f32
    %123 = vector.broadcast %cst_52 : f32 to vector<8x128xf32>
    %124 = arith.addf %122, %123 : vector<8x128xf32>
    %125 = arith.mulf %124, %117 : vector<8x128xf32>
    %cst_53 = arith.constant -0.284496725 : f32
    %126 = vector.broadcast %cst_53 : f32 to vector<8x128xf32>
    %127 = arith.addf %125, %126 : vector<8x128xf32>
    %128 = arith.mulf %127, %117 : vector<8x128xf32>
    %cst_54 = arith.constant 0.254829586 : f32
    %129 = vector.broadcast %cst_54 : f32 to vector<8x128xf32>
    %130 = arith.addf %128, %129 : vector<8x128xf32>
    %131 = arith.mulf %130, %117 : vector<8x128xf32>
    %cst_55 = arith.constant 0.000000e+00 : f32
    %132 = vector.broadcast %cst_55 : f32 to vector<8x128xf32>
    %133 = arith.subf %132, %112 : vector<8x128xf32>
    %134 = arith.mulf %133, %112 : vector<8x128xf32>
    %135 = math.exp %134 : vector<8x128xf32>
    %136 = arith.mulf %131, %135 : vector<8x128xf32>
    %cst_56 = arith.constant 1.000000e+00 : f32
    %137 = vector.broadcast %cst_56 : f32 to vector<8x128xf32>
    %138 = arith.subf %137, %136 : vector<8x128xf32>
    %139 = arith.mulf %111, %138 : vector<8x128xf32>
    %cst_57 = arith.constant 5.000000e-01 : f32
    %140 = vector.broadcast %cst_57 : f32 to vector<8x128xf32>
    %141 = arith.mulf %140, %104 : vector<8x128xf32>
    %cst_58 = arith.constant 1.000000e+00 : f32
    %142 = vector.broadcast %cst_58 : f32 to vector<8x128xf32>
    %143 = arith.addf %142, %139 : vector<8x128xf32>
    %144 = arith.mulf %141, %143 : vector<8x128xf32>
    %145 = arith.maximumf %97, %144 : vector<8x128xf32>
    %c3 = arith.constant 3 : index
    %c0_59 = arith.constant 0 : index
    %c0_60 = arith.constant 0 : index
    %146 = vector.load %arg1[%c3, %c0_59, %c0_60] : memref<4x9x128xf32, #tpu.memory_space<vmem>>, vector<1x9x128xf32>
    %147 = vector.shape_cast %146 : vector<1x9x128xf32> to vector<9x128xf32>
    %cst_61 = arith.constant dense<0.000000e+00> : vector<8x128xf32>
    %148 = tpu.matmul %0, %147, %cst_61 {dimension_numbers = #tpu.dot_dimension_numbers<[1], [0], [0], [1], [0, 0, 1, 1], [], []>} : vector<8x9xf32>, vector<9x128xf32>, vector<8x128xf32> -> vector<8x128xf32>
    %149 = vector.broadcast %1 : vector<8x1xf32> to vector<8x128xf32>
    %150 = arith.mulf %148, %149 : vector<8x128xf32>
    %151 = vector.broadcast %2 : vector<8x1xf32> to vector<8x128xf32>
    %152 = arith.addf %150, %151 : vector<8x128xf32>
    %cst_62 = arith.constant 0.707106769 : f32
    %153 = vector.broadcast %cst_62 : f32 to vector<8x128xf32>
    %154 = arith.mulf %152, %153 : vector<8x128xf32>
    %cst_63 = arith.constant 0.000000e+00 : f32
    %155 = vector.broadcast %cst_63 : f32 to vector<8x128xf32>
    %156 = arith.cmpf oge, %154, %155 : vector<8x128xf32>
    %cst_64 = arith.constant 1.000000e+00 : f32
    %cst_65 = arith.constant -1.000000e+00 : f32
    %157 = vector.broadcast %cst_64 : f32 to vector<8x128xf32>
    %158 = vector.broadcast %cst_65 : f32 to vector<8x128xf32>
    %159 = arith.select %156, %157, %158 : vector<8x128xi1>, vector<8x128xf32>
    %160 = math.absf %154 : vector<8x128xf32>
    %cst_66 = arith.constant 0.327591091 : f32
    %161 = vector.broadcast %cst_66 : f32 to vector<8x128xf32>
    %162 = arith.mulf %161, %160 : vector<8x128xf32>
    %cst_67 = arith.constant 1.000000e+00 : f32
    %163 = vector.broadcast %cst_67 : f32 to vector<8x128xf32>
    %164 = arith.addf %163, %162 : vector<8x128xf32>
    %165 = tpu.reciprocal %164 {approx = true} : vector<8x128xf32> -> vector<8x128xf32>
    %cst_68 = arith.constant 1.06140542 : f32
    %166 = vector.broadcast %cst_68 : f32 to vector<8x128xf32>
    %167 = arith.mulf %166, %165 : vector<8x128xf32>
    %cst_69 = arith.constant -1.45315206 : f32
    %168 = vector.broadcast %cst_69 : f32 to vector<8x128xf32>
    %169 = arith.addf %167, %168 : vector<8x128xf32>
    %170 = arith.mulf %169, %165 : vector<8x128xf32>
    %cst_70 = arith.constant 1.42141378 : f32
    %171 = vector.broadcast %cst_70 : f32 to vector<8x128xf32>
    %172 = arith.addf %170, %171 : vector<8x128xf32>
    %173 = arith.mulf %172, %165 : vector<8x128xf32>
    %cst_71 = arith.constant -0.284496725 : f32
    %174 = vector.broadcast %cst_71 : f32 to vector<8x128xf32>
    %175 = arith.addf %173, %174 : vector<8x128xf32>
    %176 = arith.mulf %175, %165 : vector<8x128xf32>
    %cst_72 = arith.constant 0.254829586 : f32
    %177 = vector.broadcast %cst_72 : f32 to vector<8x128xf32>
    %178 = arith.addf %176, %177 : vector<8x128xf32>
    %179 = arith.mulf %178, %165 : vector<8x128xf32>
    %cst_73 = arith.constant 0.000000e+00 : f32
    %180 = vector.broadcast %cst_73 : f32 to vector<8x128xf32>
    %181 = arith.subf %180, %160 : vector<8x128xf32>
    %182 = arith.mulf %181, %160 : vector<8x128xf32>
    %183 = math.exp %182 : vector<8x128xf32>
    %184 = arith.mulf %179, %183 : vector<8x128xf32>
    %cst_74 = arith.constant 1.000000e+00 : f32
    %185 = vector.broadcast %cst_74 : f32 to vector<8x128xf32>
    %186 = arith.subf %185, %184 : vector<8x128xf32>
    %187 = arith.mulf %159, %186 : vector<8x128xf32>
    %cst_75 = arith.constant 5.000000e-01 : f32
    %188 = vector.broadcast %cst_75 : f32 to vector<8x128xf32>
    %189 = arith.mulf %188, %152 : vector<8x128xf32>
    %cst_76 = arith.constant 1.000000e+00 : f32
    %190 = vector.broadcast %cst_76 : f32 to vector<8x128xf32>
    %191 = arith.addf %190, %187 : vector<8x128xf32>
    %192 = arith.mulf %189, %191 : vector<8x128xf32>
    %193 = arith.maximumf %145, %192 : vector<8x128xf32>
    %c0_77 = arith.constant 0 : index
    %c0_78 = arith.constant 0 : index
    %194 = vector.load %arg5[%c0_77, %c0_78] : memref<8x128xf32, #tpu.memory_space<vmem>>, vector<8x128xf32>
    tpu.vector_store %arg5[%c0_77, %c0_78], %193 {strides = array<i32>} : memref<8x128xf32, #tpu.memory_space<vmem>>, vector<8x128xf32>,
    return
  }
  func.func @transform_0(%arg0: i32) -> (i32, i32, i32) {
    %c0_i32 = arith.constant 0 : i32
    %c0_i32_0 = arith.constant 0 : i32
    %c0_i32_1 = arith.constant 0 : i32
    return %c0_i32, %c0_i32_0, %arg0 : i32, i32, i32
  }
  func.func @transform_1(%arg0: i32) -> (i32, i32) {
    %c0_i32 = arith.constant 0 : i32
    %c0_i32_0 = arith.constant 0 : i32
    %c0_i32_1 = arith.constant 0 : i32
    return %c0_i32, %c0_i32_0 : i32, i32
  }
  func.func @transform_2(%arg0: i32) -> (i32, i32) {
    %c0_i32 = arith.constant 0 : i32
    %c0_i32_0 = arith.constant 0 : i32
    %c0_i32_1 = arith.constant 0 : i32
    return %c0_i32, %c0_i32_0 : i32, i32
  }
  func.func @transform_3(%arg0: i32) -> (i32, i32) {
    %c0_i32 = arith.constant 0 : i32
    %c0_i32_0 = arith.constant 0 : i32
    %c0_i32_1 = arith.constant 0 : i32
    return %c0_i32, %c0_i32_0 : i32, i32
  }
  func.func @transform_4(%arg0: i32) -> (i32, i32) {
    %c0_i32 = arith.constant 0 : i32
    %c0_i32_0 = arith.constant 0 : i32
    return %c0_i32, %arg0 : i32, i32
  }
}

module attributes {stable_mosaic.version = 11 : i64} {
  func.func @_mm_pool_kernel(%arg0: i32, %arg1: memref<4x72x128xf32, #tpu.memory_space<vmem>>, %arg2: memref<16x72xf32, #tpu.memory_space<vmem>>, %arg3: memref<16x1xf32, #tpu.memory_space<vmem>>, %arg4: memref<16x1xf32, #tpu.memory_space<vmem>>, %arg5: memref<16x128xf32, #tpu.memory_space<vmem>>) attributes {dimension_semantics = [#tpu.dimension_semantics<parallel>], iteration_bounds = array<i64: 1>, scalar_prefetch = 0 : i64, scratch_operands = 0 : i64, tpu.core_type = #tpu.core_type<tc>, window_params = [{transform_indices = @transform_0, window_bounds = array<i64: 4, 72, 128>}, {pipeline_mode = #tpu.pipeline_mode<synchronous>, transform_indices = @transform_1, window_bounds = array<i64: 16, 72>}, {pipeline_mode = #tpu.pipeline_mode<synchronous>, transform_indices = @transform_2, window_bounds = array<i64: 16, 1>}, {pipeline_mode = #tpu.pipeline_mode<synchronous>, transform_indices = @transform_3, window_bounds = array<i64: 16, 1>}, {transform_indices = @transform_4, window_bounds = array<i64: 16, 128>}]} {
    %c0 = arith.constant 0 : index
    %c0_0 = arith.constant 0 : index
    %0 = vector.load %arg2[%c0, %c0_0] : memref<16x72xf32, #tpu.memory_space<vmem>>, vector<16x72xf32>
    %c0_1 = arith.constant 0 : index
    %c0_2 = arith.constant 0 : index
    %1 = vector.load %arg3[%c0_1, %c0_2] : memref<16x1xf32, #tpu.memory_space<vmem>>, vector<16x1xf32>
    %c0_3 = arith.constant 0 : index
    %c0_4 = arith.constant 0 : index
    %2 = vector.load %arg4[%c0_3, %c0_4] : memref<16x1xf32, #tpu.memory_space<vmem>>, vector<16x1xf32>
    %c0_5 = arith.constant 0 : index
    %c0_6 = arith.constant 0 : index
    %c0_7 = arith.constant 0 : index
    %3 = vector.load %arg1[%c0_5, %c0_6, %c0_7] : memref<4x72x128xf32, #tpu.memory_space<vmem>>, vector<1x72x128xf32>
    %4 = vector.shape_cast %3 : vector<1x72x128xf32> to vector<72x128xf32>
    %cst = arith.constant dense<0.000000e+00> : vector<16x128xf32>
    %5 = tpu.matmul %0, %4, %cst {dimension_numbers = #tpu.dot_dimension_numbers<[1], [0], [0], [1], [0, 0, 1, 1], [], []>} : vector<16x72xf32>, vector<72x128xf32>, vector<16x128xf32> -> vector<16x128xf32>
    %6 = vector.broadcast %1 : vector<16x1xf32> to vector<16x128xf32>
    %7 = arith.mulf %5, %6 : vector<16x128xf32>
    %8 = vector.broadcast %2 : vector<16x1xf32> to vector<16x128xf32>
    %9 = arith.addf %7, %8 : vector<16x128xf32>
    %cst_8 = arith.constant 0.707106769 : f32
    %10 = vector.broadcast %cst_8 : f32 to vector<16x128xf32>
    %11 = arith.mulf %9, %10 : vector<16x128xf32>
    %cst_9 = arith.constant 0.000000e+00 : f32
    %12 = vector.broadcast %cst_9 : f32 to vector<16x128xf32>
    %13 = arith.cmpf oge, %11, %12 : vector<16x128xf32>
    %cst_10 = arith.constant 1.000000e+00 : f32
    %cst_11 = arith.constant -1.000000e+00 : f32
    %14 = vector.broadcast %cst_10 : f32 to vector<16x128xf32>
    %15 = vector.broadcast %cst_11 : f32 to vector<16x128xf32>
    %16 = arith.select %13, %14, %15 : vector<16x128xi1>, vector<16x128xf32>
    %17 = math.absf %11 : vector<16x128xf32>
    %cst_12 = arith.constant 0.327591091 : f32
    %18 = vector.broadcast %cst_12 : f32 to vector<16x128xf32>
    %19 = arith.mulf %18, %17 : vector<16x128xf32>
    %cst_13 = arith.constant 1.000000e+00 : f32
    %20 = vector.broadcast %cst_13 : f32 to vector<16x128xf32>
    %21 = arith.addf %20, %19 : vector<16x128xf32>
    %22 = tpu.reciprocal %21 {approx = true} : vector<16x128xf32> -> vector<16x128xf32>
    %cst_14 = arith.constant 1.06140542 : f32
    %23 = vector.broadcast %cst_14 : f32 to vector<16x128xf32>
    %24 = arith.mulf %23, %22 : vector<16x128xf32>
    %cst_15 = arith.constant -1.45315206 : f32
    %25 = vector.broadcast %cst_15 : f32 to vector<16x128xf32>
    %26 = arith.addf %24, %25 : vector<16x128xf32>
    %27 = arith.mulf %26, %22 : vector<16x128xf32>
    %cst_16 = arith.constant 1.42141378 : f32
    %28 = vector.broadcast %cst_16 : f32 to vector<16x128xf32>
    %29 = arith.addf %27, %28 : vector<16x128xf32>
    %30 = arith.mulf %29, %22 : vector<16x128xf32>
    %cst_17 = arith.constant -0.284496725 : f32
    %31 = vector.broadcast %cst_17 : f32 to vector<16x128xf32>
    %32 = arith.addf %30, %31 : vector<16x128xf32>
    %33 = arith.mulf %32, %22 : vector<16x128xf32>
    %cst_18 = arith.constant 0.254829586 : f32
    %34 = vector.broadcast %cst_18 : f32 to vector<16x128xf32>
    %35 = arith.addf %33, %34 : vector<16x128xf32>
    %36 = arith.mulf %35, %22 : vector<16x128xf32>
    %cst_19 = arith.constant 0.000000e+00 : f32
    %37 = vector.broadcast %cst_19 : f32 to vector<16x128xf32>
    %38 = arith.subf %37, %17 : vector<16x128xf32>
    %39 = arith.mulf %38, %17 : vector<16x128xf32>
    %40 = math.exp %39 : vector<16x128xf32>
    %41 = arith.mulf %36, %40 : vector<16x128xf32>
    %cst_20 = arith.constant 1.000000e+00 : f32
    %42 = vector.broadcast %cst_20 : f32 to vector<16x128xf32>
    %43 = arith.subf %42, %41 : vector<16x128xf32>
    %44 = arith.mulf %16, %43 : vector<16x128xf32>
    %cst_21 = arith.constant 5.000000e-01 : f32
    %45 = vector.broadcast %cst_21 : f32 to vector<16x128xf32>
    %46 = arith.mulf %45, %9 : vector<16x128xf32>
    %cst_22 = arith.constant 1.000000e+00 : f32
    %47 = vector.broadcast %cst_22 : f32 to vector<16x128xf32>
    %48 = arith.addf %47, %44 : vector<16x128xf32>
    %49 = arith.mulf %46, %48 : vector<16x128xf32>
    %c1 = arith.constant 1 : index
    %c0_23 = arith.constant 0 : index
    %c0_24 = arith.constant 0 : index
    %50 = vector.load %arg1[%c1, %c0_23, %c0_24] : memref<4x72x128xf32, #tpu.memory_space<vmem>>, vector<1x72x128xf32>
    %51 = vector.shape_cast %50 : vector<1x72x128xf32> to vector<72x128xf32>
    %cst_25 = arith.constant dense<0.000000e+00> : vector<16x128xf32>
    %52 = tpu.matmul %0, %51, %cst_25 {dimension_numbers = #tpu.dot_dimension_numbers<[1], [0], [0], [1], [0, 0, 1, 1], [], []>} : vector<16x72xf32>, vector<72x128xf32>, vector<16x128xf32> -> vector<16x128xf32>
    %53 = vector.broadcast %1 : vector<16x1xf32> to vector<16x128xf32>
    %54 = arith.mulf %52, %53 : vector<16x128xf32>
    %55 = vector.broadcast %2 : vector<16x1xf32> to vector<16x128xf32>
    %56 = arith.addf %54, %55 : vector<16x128xf32>
    %cst_26 = arith.constant 0.707106769 : f32
    %57 = vector.broadcast %cst_26 : f32 to vector<16x128xf32>
    %58 = arith.mulf %56, %57 : vector<16x128xf32>
    %cst_27 = arith.constant 0.000000e+00 : f32
    %59 = vector.broadcast %cst_27 : f32 to vector<16x128xf32>
    %60 = arith.cmpf oge, %58, %59 : vector<16x128xf32>
    %cst_28 = arith.constant 1.000000e+00 : f32
    %cst_29 = arith.constant -1.000000e+00 : f32
    %61 = vector.broadcast %cst_28 : f32 to vector<16x128xf32>
    %62 = vector.broadcast %cst_29 : f32 to vector<16x128xf32>
    %63 = arith.select %60, %61, %62 : vector<16x128xi1>, vector<16x128xf32>
    %64 = math.absf %58 : vector<16x128xf32>
    %cst_30 = arith.constant 0.327591091 : f32
    %65 = vector.broadcast %cst_30 : f32 to vector<16x128xf32>
    %66 = arith.mulf %65, %64 : vector<16x128xf32>
    %cst_31 = arith.constant 1.000000e+00 : f32
    %67 = vector.broadcast %cst_31 : f32 to vector<16x128xf32>
    %68 = arith.addf %67, %66 : vector<16x128xf32>
    %69 = tpu.reciprocal %68 {approx = true} : vector<16x128xf32> -> vector<16x128xf32>
    %cst_32 = arith.constant 1.06140542 : f32
    %70 = vector.broadcast %cst_32 : f32 to vector<16x128xf32>
    %71 = arith.mulf %70, %69 : vector<16x128xf32>
    %cst_33 = arith.constant -1.45315206 : f32
    %72 = vector.broadcast %cst_33 : f32 to vector<16x128xf32>
    %73 = arith.addf %71, %72 : vector<16x128xf32>
    %74 = arith.mulf %73, %69 : vector<16x128xf32>
    %cst_34 = arith.constant 1.42141378 : f32
    %75 = vector.broadcast %cst_34 : f32 to vector<16x128xf32>
    %76 = arith.addf %74, %75 : vector<16x128xf32>
    %77 = arith.mulf %76, %69 : vector<16x128xf32>
    %cst_35 = arith.constant -0.284496725 : f32
    %78 = vector.broadcast %cst_35 : f32 to vector<16x128xf32>
    %79 = arith.addf %77, %78 : vector<16x128xf32>
    %80 = arith.mulf %79, %69 : vector<16x128xf32>
    %cst_36 = arith.constant 0.254829586 : f32
    %81 = vector.broadcast %cst_36 : f32 to vector<16x128xf32>
    %82 = arith.addf %80, %81 : vector<16x128xf32>
    %83 = arith.mulf %82, %69 : vector<16x128xf32>
    %cst_37 = arith.constant 0.000000e+00 : f32
    %84 = vector.broadcast %cst_37 : f32 to vector<16x128xf32>
    %85 = arith.subf %84, %64 : vector<16x128xf32>
    %86 = arith.mulf %85, %64 : vector<16x128xf32>
    %87 = math.exp %86 : vector<16x128xf32>
    %88 = arith.mulf %83, %87 : vector<16x128xf32>
    %cst_38 = arith.constant 1.000000e+00 : f32
    %89 = vector.broadcast %cst_38 : f32 to vector<16x128xf32>
    %90 = arith.subf %89, %88 : vector<16x128xf32>
    %91 = arith.mulf %63, %90 : vector<16x128xf32>
    %cst_39 = arith.constant 5.000000e-01 : f32
    %92 = vector.broadcast %cst_39 : f32 to vector<16x128xf32>
    %93 = arith.mulf %92, %56 : vector<16x128xf32>
    %cst_40 = arith.constant 1.000000e+00 : f32
    %94 = vector.broadcast %cst_40 : f32 to vector<16x128xf32>
    %95 = arith.addf %94, %91 : vector<16x128xf32>
    %96 = arith.mulf %93, %95 : vector<16x128xf32>
    %97 = arith.maximumf %49, %96 : vector<16x128xf32>
    %c2 = arith.constant 2 : index
    %c0_41 = arith.constant 0 : index
    %c0_42 = arith.constant 0 : index
    %98 = vector.load %arg1[%c2, %c0_41, %c0_42] : memref<4x72x128xf32, #tpu.memory_space<vmem>>, vector<1x72x128xf32>
    %99 = vector.shape_cast %98 : vector<1x72x128xf32> to vector<72x128xf32>
    %cst_43 = arith.constant dense<0.000000e+00> : vector<16x128xf32>
    %100 = tpu.matmul %0, %99, %cst_43 {dimension_numbers = #tpu.dot_dimension_numbers<[1], [0], [0], [1], [0, 0, 1, 1], [], []>} : vector<16x72xf32>, vector<72x128xf32>, vector<16x128xf32> -> vector<16x128xf32>
    %101 = vector.broadcast %1 : vector<16x1xf32> to vector<16x128xf32>
    %102 = arith.mulf %100, %101 : vector<16x128xf32>
    %103 = vector.broadcast %2 : vector<16x1xf32> to vector<16x128xf32>
    %104 = arith.addf %102, %103 : vector<16x128xf32>
    %cst_44 = arith.constant 0.707106769 : f32
    %105 = vector.broadcast %cst_44 : f32 to vector<16x128xf32>
    %106 = arith.mulf %104, %105 : vector<16x128xf32>
    %cst_45 = arith.constant 0.000000e+00 : f32
    %107 = vector.broadcast %cst_45 : f32 to vector<16x128xf32>
    %108 = arith.cmpf oge, %106, %107 : vector<16x128xf32>
    %cst_46 = arith.constant 1.000000e+00 : f32
    %cst_47 = arith.constant -1.000000e+00 : f32
    %109 = vector.broadcast %cst_46 : f32 to vector<16x128xf32>
    %110 = vector.broadcast %cst_47 : f32 to vector<16x128xf32>
    %111 = arith.select %108, %109, %110 : vector<16x128xi1>, vector<16x128xf32>
    %112 = math.absf %106 : vector<16x128xf32>
    %cst_48 = arith.constant 0.327591091 : f32
    %113 = vector.broadcast %cst_48 : f32 to vector<16x128xf32>
    %114 = arith.mulf %113, %112 : vector<16x128xf32>
    %cst_49 = arith.constant 1.000000e+00 : f32
    %115 = vector.broadcast %cst_49 : f32 to vector<16x128xf32>
    %116 = arith.addf %115, %114 : vector<16x128xf32>
    %117 = tpu.reciprocal %116 {approx = true} : vector<16x128xf32> -> vector<16x128xf32>
    %cst_50 = arith.constant 1.06140542 : f32
    %118 = vector.broadcast %cst_50 : f32 to vector<16x128xf32>
    %119 = arith.mulf %118, %117 : vector<16x128xf32>
    %cst_51 = arith.constant -1.45315206 : f32
    %120 = vector.broadcast %cst_51 : f32 to vector<16x128xf32>
    %121 = arith.addf %119, %120 : vector<16x128xf32>
    %122 = arith.mulf %121, %117 : vector<16x128xf32>
    %cst_52 = arith.constant 1.42141378 : f32
    %123 = vector.broadcast %cst_52 : f32 to vector<16x128xf32>
    %124 = arith.addf %122, %123 : vector<16x128xf32>
    %125 = arith.mulf %124, %117 : vector<16x128xf32>
    %cst_53 = arith.constant -0.284496725 : f32
    %126 = vector.broadcast %cst_53 : f32 to vector<16x128xf32>
    %127 = arith.addf %125, %126 : vector<16x128xf32>
    %128 = arith.mulf %127, %117 : vector<16x128xf32>
    %cst_54 = arith.constant 0.254829586 : f32
    %129 = vector.broadcast %cst_54 : f32 to vector<16x128xf32>
    %130 = arith.addf %128, %129 : vector<16x128xf32>
    %131 = arith.mulf %130, %117 : vector<16x128xf32>
    %cst_55 = arith.constant 0.000000e+00 : f32
    %132 = vector.broadcast %cst_55 : f32 to vector<16x128xf32>
    %133 = arith.subf %132, %112 : vector<16x128xf32>
    %134 = arith.mulf %133, %112 : vector<16x128xf32>
    %135 = math.exp %134 : vector<16x128xf32>
    %136 = arith.mulf %131, %135 : vector<16x128xf32>
    %cst_56 = arith.constant 1.000000e+00 : f32
    %137 = vector.broadcast %cst_56 : f32 to vector<16x128xf32>
    %138 = arith.subf %137, %136 : vector<16x128xf32>
    %139 = arith.mulf %111, %138 : vector<16x128xf32>
    %cst_57 = arith.constant 5.000000e-01 : f32
    %140 = vector.broadcast %cst_57 : f32 to vector<16x128xf32>
    %141 = arith.mulf %140, %104 : vector<16x128xf32>
    %cst_58 = arith.constant 1.000000e+00 : f32
    %142 = vector.broadcast %cst_58 : f32 to vector<16x128xf32>
    %143 = arith.addf %142, %139 : vector<16x128xf32>
    %144 = arith.mulf %141, %143 : vector<16x128xf32>
    %145 = arith.maximumf %97, %144 : vector<16x128xf32>
    %c3 = arith.constant 3 : index
    %c0_59 = arith.constant 0 : index
    %c0_60 = arith.constant 0 : index
    %146 = vector.load %arg1[%c3, %c0_59, %c0_60] : memref<4x72x128xf32, #tpu.memory_space<vmem>>, vector<1x72x128xf32>
    %147 = vector.shape_cast %146 : vector<1x72x128xf32> to vector<72x128xf32>
    %cst_61 = arith.constant dense<0.000000e+00> : vector<16x128xf32>
    %148 = tpu.matmul %0, %147, %cst_61 {dimension_numbers = #tpu.dot_dimension_numbers<[1], [0], [0], [1], [0, 0, 1, 1], [], []>} : vector<16x72xf32>, vector<72x128xf32>, vector<16x128xf32> -> vector<16x128xf32>
    %149 = vector.broadcast %1 : vector<16x1xf32> to vector<16x128xf32>
    %150 = arith.mulf %148, %149 : vector<16x128xf32>
    %151 = vector.broadcast %2 : vector<16x1xf32> to vector<16x128xf32>
    %152 = arith.addf %150, %151 : vector<16x128xf32>
    %cst_62 = arith.constant 0.707106769 : f32
    %153 = vector.broadcast %cst_62 : f32 to vector<16x128xf32>
    %154 = arith.mulf %152, %153 : vector<16x128xf32>
    %cst_63 = arith.constant 0.000000e+00 : f32
    %155 = vector.broadcast %cst_63 : f32 to vector<16x128xf32>
    %156 = arith.cmpf oge, %154, %155 : vector<16x128xf32>
    %cst_64 = arith.constant 1.000000e+00 : f32
    %cst_65 = arith.constant -1.000000e+00 : f32
    %157 = vector.broadcast %cst_64 : f32 to vector<16x128xf32>
    %158 = vector.broadcast %cst_65 : f32 to vector<16x128xf32>
    %159 = arith.select %156, %157, %158 : vector<16x128xi1>, vector<16x128xf32>
    %160 = math.absf %154 : vector<16x128xf32>
    %cst_66 = arith.constant 0.327591091 : f32
    %161 = vector.broadcast %cst_66 : f32 to vector<16x128xf32>
    %162 = arith.mulf %161, %160 : vector<16x128xf32>
    %cst_67 = arith.constant 1.000000e+00 : f32
    %163 = vector.broadcast %cst_67 : f32 to vector<16x128xf32>
    %164 = arith.addf %163, %162 : vector<16x128xf32>
    %165 = tpu.reciprocal %164 {approx = true} : vector<16x128xf32> -> vector<16x128xf32>
    %cst_68 = arith.constant 1.06140542 : f32
    %166 = vector.broadcast %cst_68 : f32 to vector<16x128xf32>
    %167 = arith.mulf %166, %165 : vector<16x128xf32>
    %cst_69 = arith.constant -1.45315206 : f32
    %168 = vector.broadcast %cst_69 : f32 to vector<16x128xf32>
    %169 = arith.addf %167, %168 : vector<16x128xf32>
    %170 = arith.mulf %169, %165 : vector<16x128xf32>
    %cst_70 = arith.constant 1.42141378 : f32
    %171 = vector.broadcast %cst_70 : f32 to vector<16x128xf32>
    %172 = arith.addf %170, %171 : vector<16x128xf32>
    %173 = arith.mulf %172, %165 : vector<16x128xf32>
    %cst_71 = arith.constant -0.284496725 : f32
    %174 = vector.broadcast %cst_71 : f32 to vector<16x128xf32>
    %175 = arith.addf %173, %174 : vector<16x128xf32>
    %176 = arith.mulf %175, %165 : vector<16x128xf32>
    %cst_72 = arith.constant 0.254829586 : f32
    %177 = vector.broadcast %cst_72 : f32 to vector<16x128xf32>
    %178 = arith.addf %176, %177 : vector<16x128xf32>
    %179 = arith.mulf %178, %165 : vector<16x128xf32>
    %cst_73 = arith.constant 0.000000e+00 : f32
    %180 = vector.broadcast %cst_73 : f32 to vector<16x128xf32>
    %181 = arith.subf %180, %160 : vector<16x128xf32>
    %182 = arith.mulf %181, %160 : vector<16x128xf32>
    %183 = math.exp %182 : vector<16x128xf32>
    %184 = arith.mulf %179, %183 : vector<16x128xf32>
    %cst_74 = arith.constant 1.000000e+00 : f32
    %185 = vector.broadcast %cst_74 : f32 to vector<16x128xf32>
    %186 = arith.subf %185, %184 : vector<16x128xf32>
    %187 = arith.mulf %159, %186 : vector<16x128xf32>
    %cst_75 = arith.constant 5.000000e-01 : f32
    %188 = vector.broadcast %cst_75 : f32 to vector<16x128xf32>
    %189 = arith.mulf %188, %152 : vector<16x128xf32>
    %cst_76 = arith.constant 1.000000e+00 : f32
    %190 = vector.broadcast %cst_76 : f32 to vector<16x128xf32>
    %191 = arith.addf %190, %187 : vector<16x128xf32>
    %192 = arith.mulf %189, %191 : vector<16x128xf32>
    %193 = arith.maximumf %145, %192 : vector<16x128xf32>
    %c0_77 = arith.constant 0 : index
    %c0_78 = arith.constant 0 : index
    %194 = vector.load %arg5[%c0_77, %c0_78] : memref<16x128xf32, #tpu.memory_space<vmem>>, vector<16x128xf32>
    tpu.vector_store %arg5[%c0_77, %c0_78], %193 {strides = array<i32>} : memref<16x128xf32, #tpu.memory_space<vmem>>, vector<16x128xf32>,
    return
  }
  func.func @transform_0(%arg0: i32) -> (i32, i32, i32) {
    %c0_i32 = arith.constant 0 : i32
    %c0_i32_0 = arith.constant 0 : i32
    %c0_i32_1 = arith.constant 0 : i32
    return %c0_i32, %c0_i32_0, %arg0 : i32, i32, i32
  }
  func.func @transform_1(%arg0: i32) -> (i32, i32) {
    %c0_i32 = arith.constant 0 : i32
    %c0_i32_0 = arith.constant 0 : i32
    %c0_i32_1 = arith.constant 0 : i32
    return %c0_i32, %c0_i32_0 : i32, i32
  }
  func.func @transform_2(%arg0: i32) -> (i32, i32) {
    %c0_i32 = arith.constant 0 : i32
    %c0_i32_0 = arith.constant 0 : i32
    %c0_i32_1 = arith.constant 0 : i32
    return %c0_i32, %c0_i32_0 : i32, i32
  }
  func.func @transform_3(%arg0: i32) -> (i32, i32) {
    %c0_i32 = arith.constant 0 : i32
    %c0_i32_0 = arith.constant 0 : i32
    %c0_i32_1 = arith.constant 0 : i32
    return %c0_i32, %c0_i32_0 : i32, i32
  }
  func.func @transform_4(%arg0: i32) -> (i32, i32) {
    %c0_i32 = arith.constant 0 : i32
    %c0_i32_0 = arith.constant 0 : i32
    return %c0_i32, %arg0 : i32, i32
  }
}

module attributes {stable_mosaic.version = 11 : i64} {
  func.func @_transformer_kernel(%arg0: i32, %arg1: memref<1x16x16xf32, #tpu.memory_space<vmem>>, %arg2: memref<16x16xf32, #tpu.memory_space<vmem>>, %arg3: memref<16x1xf32, #tpu.memory_space<vmem>>, %arg4: memref<16x1xf32, #tpu.memory_space<vmem>>, %arg5: memref<16x16xf32, #tpu.memory_space<vmem>>, %arg6: memref<16x1xf32, #tpu.memory_space<vmem>>, %arg7: memref<16x16xf32, #tpu.memory_space<vmem>>, %arg8: memref<16x1xf32, #tpu.memory_space<vmem>>, %arg9: memref<16x16xf32, #tpu.memory_space<vmem>>, %arg10: memref<16x1xf32, #tpu.memory_space<vmem>>, %arg11: memref<16x16xf32, #tpu.memory_space<vmem>>, %arg12: memref<16x1xf32, #tpu.memory_space<vmem>>, %arg13: memref<16x1xf32, #tpu.memory_space<vmem>>, %arg14: memref<16x1xf32, #tpu.memory_space<vmem>>, %arg15: memref<64x16xf32, #tpu.memory_space<vmem>>, %arg16: memref<64x1xf32, #tpu.memory_space<vmem>>, %arg17: memref<16x64xf32, #tpu.memory_space<vmem>>, %arg18: memref<16x1xf32, #tpu.memory_space<vmem>>, %arg19: memref<1x16x16xf32, #tpu.memory_space<vmem>>) attributes {dimension_semantics = [#tpu.dimension_semantics<parallel>], iteration_bounds = array<i64: 2>, scalar_prefetch = 0 : i64, scratch_operands = 0 : i64, tpu.core_type = #tpu.core_type<tc>, window_params = [{transform_indices = @transform_0, window_bounds = array<i64: 1, 16, 16>}, {pipeline_mode = #tpu.pipeline_mode<synchronous>, transform_indices = @transform_1, window_bounds = array<i64: 16, 16>}, {pipeline_mode = #tpu.pipeline_mode<synchronous>, transform_indices = @transform_2, window_bounds = array<i64: 16, 1>}, {pipeline_mode = #tpu.pipeline_mode<synchronous>, transform_indices = @transform_3, window_bounds = array<i64: 16, 1>}, {pipeline_mode = #tpu.pipeline_mode<synchronous>, transform_indices = @transform_4, window_bounds = array<i64: 16, 16>}, {pipeline_mode = #tpu.pipeline_mode<synchronous>, transform_indices = @transform_5, window_bounds = array<i64: 16, 1>}, {pipeline_mode = #tpu.pipeline_mode<synchronous>, transform_indices = @transform_6, window_bounds = array<i64: 16, 16>}, {pipeline_mode = #tpu.pipeline_mode<synchronous>, transform_indices = @transform_7, window_bounds = array<i64: 16, 1>}, {pipeline_mode = #tpu.pipeline_mode<synchronous>, transform_indices = @transform_8, window_bounds = array<i64: 16, 16>}, {pipeline_mode = #tpu.pipeline_mode<synchronous>, transform_indices = @transform_9, window_bounds = array<i64: 16, 1>}, {pipeline_mode = #tpu.pipeline_mode<synchronous>, transform_indices = @transform_10, window_bounds = array<i64: 16, 16>}, {pipeline_mode = #tpu.pipeline_mode<synchronous>, transform_indices = @transform_11, window_bounds = array<i64: 16, 1>}, {pipeline_mode = #tpu.pipeline_mode<synchronous>, transform_indices = @transform_12, window_bounds = array<i64: 16, 1>}, {pipeline_mode = #tpu.pipeline_mode<synchronous>, transform_indices = @transform_13, window_bounds = array<i64: 16, 1>}, {pipeline_mode = #tpu.pipeline_mode<synchronous>, transform_indices = @transform_14, window_bounds = array<i64: 64, 16>}, {pipeline_mode = #tpu.pipeline_mode<synchronous>, transform_indices = @transform_15, window_bounds = array<i64: 64, 1>}, {pipeline_mode = #tpu.pipeline_mode<synchronous>, transform_indices = @transform_16, window_bounds = array<i64: 16, 64>}, {pipeline_mode = #tpu.pipeline_mode<synchronous>, transform_indices = @transform_17, window_bounds = array<i64: 16, 1>}, {transform_indices = @transform_18, window_bounds = array<i64: 1, 16, 16>}]} {
    %c0 = arith.constant 0 : index
    %c0_0 = arith.constant 0 : index
    %c0_1 = arith.constant 0 : index
    %0 = vector.load %arg1[%c0, %c0_0, %c0_1] : memref<1x16x16xf32, #tpu.memory_space<vmem>>, vector<1x16x16xf32>
    %1 = vector.shape_cast %0 : vector<1x16x16xf32> to vector<16x16xf32>
    %c0_2 = arith.constant 0 : index
    %c0_3 = arith.constant 0 : index
    %2 = vector.load %arg2[%c0_2, %c0_3] : memref<16x16xf32, #tpu.memory_space<vmem>>, vector<16x16xf32>
    %3 = arith.addf %1, %2 : vector<16x16xf32>
    %c0_4 = arith.constant 0 : index
    %c0_5 = arith.constant 0 : index
    %4 = vector.load %arg3[%c0_4, %c0_5] : memref<16x1xf32, #tpu.memory_space<vmem>>, vector<16x1xf32>
    %c0_6 = arith.constant 0 : index
    %c0_7 = arith.constant 0 : index
    %5 = vector.load %arg4[%c0_6, %c0_7] : memref<16x1xf32, #tpu.memory_space<vmem>>, vector<16x1xf32>
    %cst = arith.constant dense<0.000000e+00> : vector<16xf32>
    %6 = vector.multi_reduction <add>, %3, %cst [0] : vector<16x16xf32> to vector<16xf32>
    %7 = vector.shape_cast %6 : vector<16xf32> to vector<1x16xf32>
    %cst_8 = arith.constant 1.600000e+01 : f32
    %8 = vector.broadcast %cst_8 : f32 to vector<1x16xf32>
    %9 = arith.divf %7, %8 : vector<1x16xf32>
    %10 = vector.broadcast %9 : vector<1x16xf32> to vector<16x16xf32>
    %11 = arith.subf %3, %10 : vector<16x16xf32>
    %12 = arith.mulf %11, %11 : vector<16x16xf32>
    %cst_9 = arith.constant dense<0.000000e+00> : vector<16xf32>
    %13 = vector.multi_reduction <add>, %12, %cst_9 [0] : vector<16x16xf32> to vector<16xf32>
    %14 = vector.shape_cast %13 : vector<16xf32> to vector<1x16xf32>
    %cst_10 = arith.constant 1.600000e+01 : f32
    %15 = vector.broadcast %cst_10 : f32 to vector<1x16xf32>
    %16 = arith.divf %14, %15 : vector<1x16xf32>
    %cst_11 = arith.constant 9.99999974E-6 : f32
    %17 = vector.broadcast %cst_11 : f32 to vector<1x16xf32>
    %18 = arith.addf %16, %17 : vector<1x16xf32>
    %19 = math.rsqrt %18 : vector<1x16xf32>
    %20 = vector.broadcast %19 : vector<1x16xf32> to vector<16x16xf32>
    %21 = arith.mulf %11, %20 : vector<16x16xf32>
    %22 = vector.broadcast %4 : vector<16x1xf32> to vector<16x16xf32>
    %23 = arith.mulf %21, %22 : vector<16x16xf32>
    %24 = vector.broadcast %5 : vector<16x1xf32> to vector<16x16xf32>
    %25 = arith.addf %23, %24 : vector<16x16xf32>
    %c0_12 = arith.constant 0 : index
    %c0_13 = arith.constant 0 : index
    %26 = vector.load %arg5[%c0_12, %c0_13] : memref<16x16xf32, #tpu.memory_space<vmem>>, vector<16x16xf32>
    %cst_14 = arith.constant dense<0.000000e+00> : vector<16x16xf32>
    %27 = tpu.matmul %26, %25, %cst_14 {dimension_numbers = #tpu.dot_dimension_numbers<[1], [0], [0], [1], [0, 0, 1, 1], [], []>} : vector<16x16xf32>, vector<16x16xf32>, vector<16x16xf32> -> vector<16x16xf32>
    %c0_15 = arith.constant 0 : index
    %c0_16 = arith.constant 0 : index
    %28 = vector.load %arg6[%c0_15, %c0_16] : memref<16x1xf32, #tpu.memory_space<vmem>>, vector<16x1xf32>
    %29 = vector.broadcast %28 : vector<16x1xf32> to vector<16x16xf32>
    %30 = arith.addf %27, %29 : vector<16x16xf32>
    %c0_17 = arith.constant 0 : index
    %c0_18 = arith.constant 0 : index
    %31 = vector.load %arg7[%c0_17, %c0_18] : memref<16x16xf32, #tpu.memory_space<vmem>>, vector<16x16xf32>
    %cst_19 = arith.constant dense<0.000000e+00> : vector<16x16xf32>
    %32 = tpu.matmul %31, %25, %cst_19 {dimension_numbers = #tpu.dot_dimension_numbers<[1], [0], [0], [1], [0, 0, 1, 1], [], []>} : vector<16x16xf32>, vector<16x16xf32>, vector<16x16xf32> -> vector<16x16xf32>
    %c0_20 = arith.constant 0 : index
    %c0_21 = arith.constant 0 : index
    %33 = vector.load %arg8[%c0_20, %c0_21] : memref<16x1xf32, #tpu.memory_space<vmem>>, vector<16x1xf32>
    %34 = vector.broadcast %33 : vector<16x1xf32> to vector<16x16xf32>
    %35 = arith.addf %32, %34 : vector<16x16xf32>
    %c0_22 = arith.constant 0 : index
    %c0_23 = arith.constant 0 : index
    %36 = vector.load %arg9[%c0_22, %c0_23] : memref<16x16xf32, #tpu.memory_space<vmem>>, vector<16x16xf32>
    %cst_24 = arith.constant dense<0.000000e+00> : vector<16x16xf32>
    %37 = tpu.matmul %36, %25, %cst_24 {dimension_numbers = #tpu.dot_dimension_numbers<[1], [0], [0], [1], [0, 0, 1, 1], [], []>} : vector<16x16xf32>, vector<16x16xf32>, vector<16x16xf32> -> vector<16x16xf32>
    %c0_25 = arith.constant 0 : index
    %c0_26 = arith.constant 0 : index
    %38 = vector.load %arg10[%c0_25, %c0_26] : memref<16x1xf32, #tpu.memory_space<vmem>>, vector<16x1xf32>
    %39 = vector.broadcast %38 : vector<16x1xf32> to vector<16x16xf32>
    %40 = arith.addf %37, %39 : vector<16x16xf32>
    %cst_27 = arith.constant dense<0.000000e+00> : vector<16x16xf32>
    %41 = tpu.matmul %30, %35, %cst_27 {dimension_numbers = #tpu.dot_dimension_numbers<[0], [0], [1], [1], [0, 1, 1, 1], [], []>} : vector<16x16xf32>, vector<16x16xf32>, vector<16x16xf32> -> vector<16x16xf32>
    %cst_28 = arith.constant 2.500000e-01 : f32
    %42 = vector.broadcast %cst_28 : f32 to vector<16x16xf32>
    %43 = arith.mulf %41, %42 : vector<16x16xf32>
    %cst_29 = arith.constant dense<0xFF800000> : vector<16xf32>
    %44 = vector.multi_reduction <maximumf>, %43, %cst_29 [1] : vector<16x16xf32> to vector<16xf32>
    %45 = vector.shape_cast %44 : vector<16xf32> to vector<16x1xf32>
    %46 = vector.broadcast %45 : vector<16x1xf32> to vector<16x16xf32>
    %47 = arith.subf %43, %46 : vector<16x16xf32>
    %48 = math.exp %47 : vector<16x16xf32>
    %cst_30 = arith.constant dense<0.000000e+00> : vector<16xf32>
    %49 = vector.multi_reduction <add>, %48, %cst_30 [1] : vector<16x16xf32> to vector<16xf32>
    %50 = vector.shape_cast %49 : vector<16xf32> to vector<16x1xf32>
    %51 = tpu.reciprocal %50 {approx = true} : vector<16x1xf32> -> vector<16x1xf32>
    %52 = vector.broadcast %51 : vector<16x1xf32> to vector<16x16xf32>
    %53 = arith.mulf %48, %52 : vector<16x16xf32>
    %cst_31 = arith.constant dense<0.000000e+00> : vector<16x16xf32>
    %54 = tpu.matmul %40, %53, %cst_31 {dimension_numbers = #tpu.dot_dimension_numbers<[1], [1], [0], [0], [0, 0, 1, 0], [], []>} : vector<16x16xf32>, vector<16x16xf32>, vector<16x16xf32> -> vector<16x16xf32>
    %c0_32 = arith.constant 0 : index
    %c0_33 = arith.constant 0 : index
    %55 = vector.load %arg11[%c0_32, %c0_33] : memref<16x16xf32, #tpu.memory_space<vmem>>, vector<16x16xf32>
    %cst_34 = arith.constant dense<0.000000e+00> : vector<16x16xf32>
    %56 = tpu.matmul %55, %54, %cst_34 {dimension_numbers = #tpu.dot_dimension_numbers<[1], [0], [0], [1], [0, 0, 1, 1], [], []>} : vector<16x16xf32>, vector<16x16xf32>, vector<16x16xf32> -> vector<16x16xf32>
    %c0_35 = arith.constant 0 : index
    %c0_36 = arith.constant 0 : index
    %57 = vector.load %arg12[%c0_35, %c0_36] : memref<16x1xf32, #tpu.memory_space<vmem>>, vector<16x1xf32>
    %58 = vector.broadcast %57 : vector<16x1xf32> to vector<16x16xf32>
    %59 = arith.addf %56, %58 : vector<16x16xf32>
    %60 = arith.addf %3, %59 : vector<16x16xf32>
    %c0_37 = arith.constant 0 : index
    %c0_38 = arith.constant 0 : index
    %61 = vector.load %arg13[%c0_37, %c0_38] : memref<16x1xf32, #tpu.memory_space<vmem>>, vector<16x1xf32>
    %c0_39 = arith.constant 0 : index
    %c0_40 = arith.constant 0 : index
    %62 = vector.load %arg14[%c0_39, %c0_40] : memref<16x1xf32, #tpu.memory_space<vmem>>, vector<16x1xf32>
    %cst_41 = arith.constant dense<0.000000e+00> : vector<16xf32>
    %63 = vector.multi_reduction <add>, %60, %cst_41 [0] : vector<16x16xf32> to vector<16xf32>
    %64 = vector.shape_cast %63 : vector<16xf32> to vector<1x16xf32>
    %cst_42 = arith.constant 1.600000e+01 : f32
    %65 = vector.broadcast %cst_42 : f32 to vector<1x16xf32>
    %66 = arith.divf %64, %65 : vector<1x16xf32>
    %67 = vector.broadcast %66 : vector<1x16xf32> to vector<16x16xf32>
    %68 = arith.subf %60, %67 : vector<16x16xf32>
    %69 = arith.mulf %68, %68 : vector<16x16xf32>
    %cst_43 = arith.constant dense<0.000000e+00> : vector<16xf32>
    %70 = vector.multi_reduction <add>, %69, %cst_43 [0] : vector<16x16xf32> to vector<16xf32>
    %71 = vector.shape_cast %70 : vector<16xf32> to vector<1x16xf32>
    %cst_44 = arith.constant 1.600000e+01 : f32
    %72 = vector.broadcast %cst_44 : f32 to vector<1x16xf32>
    %73 = arith.divf %71, %72 : vector<1x16xf32>
    %cst_45 = arith.constant 9.99999974E-6 : f32
    %74 = vector.broadcast %cst_45 : f32 to vector<1x16xf32>
    %75 = arith.addf %73, %74 : vector<1x16xf32>
    %76 = math.rsqrt %75 : vector<1x16xf32>
    %77 = vector.broadcast %76 : vector<1x16xf32> to vector<16x16xf32>
    %78 = arith.mulf %68, %77 : vector<16x16xf32>
    %79 = vector.broadcast %61 : vector<16x1xf32> to vector<16x16xf32>
    %80 = arith.mulf %78, %79 : vector<16x16xf32>
    %81 = vector.broadcast %62 : vector<16x1xf32> to vector<16x16xf32>
    %82 = arith.addf %80, %81 : vector<16x16xf32>
    %c0_46 = arith.constant 0 : index
    %c0_47 = arith.constant 0 : index
    %83 = vector.load %arg15[%c0_46, %c0_47] : memref<64x16xf32, #tpu.memory_space<vmem>>, vector<64x16xf32>
    %cst_48 = arith.constant dense<0.000000e+00> : vector<64x16xf32>
    %84 = tpu.matmul %83, %82, %cst_48 {dimension_numbers = #tpu.dot_dimension_numbers<[1], [0], [0], [1], [0, 0, 1, 1], [], []>} : vector<64x16xf32>, vector<16x16xf32>, vector<64x16xf32> -> vector<64x16xf32>
    %c0_49 = arith.constant 0 : index
    %c0_50 = arith.constant 0 : index
    %85 = vector.load %arg16[%c0_49, %c0_50] : memref<64x1xf32, #tpu.memory_space<vmem>>, vector<64x1xf32>
    %86 = vector.broadcast %85 : vector<64x1xf32> to vector<64x16xf32>
    %87 = arith.addf %84, %86 : vector<64x16xf32>
    %cst_51 = arith.constant 0.707106769 : f32
    %88 = vector.broadcast %cst_51 : f32 to vector<64x16xf32>
    %89 = arith.mulf %87, %88 : vector<64x16xf32>
    %cst_52 = arith.constant 0.000000e+00 : f32
    %90 = vector.broadcast %cst_52 : f32 to vector<64x16xf32>
    %91 = arith.cmpf oge, %89, %90 : vector<64x16xf32>
    %cst_53 = arith.constant 1.000000e+00 : f32
    %cst_54 = arith.constant -1.000000e+00 : f32
    %92 = vector.broadcast %cst_53 : f32 to vector<64x16xf32>
    %93 = vector.broadcast %cst_54 : f32 to vector<64x16xf32>
    %94 = arith.select %91, %92, %93 : vector<64x16xi1>, vector<64x16xf32>
    %95 = math.absf %89 : vector<64x16xf32>
    %cst_55 = arith.constant 0.327591091 : f32
    %96 = vector.broadcast %cst_55 : f32 to vector<64x16xf32>
    %97 = arith.mulf %96, %95 : vector<64x16xf32>
    %cst_56 = arith.constant 1.000000e+00 : f32
    %98 = vector.broadcast %cst_56 : f32 to vector<64x16xf32>
    %99 = arith.addf %98, %97 : vector<64x16xf32>
    %100 = tpu.reciprocal %99 {approx = true} : vector<64x16xf32> -> vector<64x16xf32>
    %cst_57 = arith.constant 1.06140542 : f32
    %101 = vector.broadcast %cst_57 : f32 to vector<64x16xf32>
    %102 = arith.mulf %101, %100 : vector<64x16xf32>
    %cst_58 = arith.constant -1.45315206 : f32
    %103 = vector.broadcast %cst_58 : f32 to vector<64x16xf32>
    %104 = arith.addf %102, %103 : vector<64x16xf32>
    %105 = arith.mulf %104, %100 : vector<64x16xf32>
    %cst_59 = arith.constant 1.42141378 : f32
    %106 = vector.broadcast %cst_59 : f32 to vector<64x16xf32>
    %107 = arith.addf %105, %106 : vector<64x16xf32>
    %108 = arith.mulf %107, %100 : vector<64x16xf32>
    %cst_60 = arith.constant -0.284496725 : f32
    %109 = vector.broadcast %cst_60 : f32 to vector<64x16xf32>
    %110 = arith.addf %108, %109 : vector<64x16xf32>
    %111 = arith.mulf %110, %100 : vector<64x16xf32>
    %cst_61 = arith.constant 0.254829586 : f32
    %112 = vector.broadcast %cst_61 : f32 to vector<64x16xf32>
    %113 = arith.addf %111, %112 : vector<64x16xf32>
    %114 = arith.mulf %113, %100 : vector<64x16xf32>
    %cst_62 = arith.constant 0.000000e+00 : f32
    %115 = vector.broadcast %cst_62 : f32 to vector<64x16xf32>
    %116 = arith.subf %115, %95 : vector<64x16xf32>
    %117 = arith.mulf %116, %95 : vector<64x16xf32>
    %118 = math.exp %117 : vector<64x16xf32>
    %119 = arith.mulf %114, %118 : vector<64x16xf32>
    %cst_63 = arith.constant 1.000000e+00 : f32
    %120 = vector.broadcast %cst_63 : f32 to vector<64x16xf32>
    %121 = arith.subf %120, %119 : vector<64x16xf32>
    %122 = arith.mulf %94, %121 : vector<64x16xf32>
    %cst_64 = arith.constant 5.000000e-01 : f32
    %123 = vector.broadcast %cst_64 : f32 to vector<64x16xf32>
    %124 = arith.mulf %123, %87 : vector<64x16xf32>
    %cst_65 = arith.constant 1.000000e+00 : f32
    %125 = vector.broadcast %cst_65 : f32 to vector<64x16xf32>
    %126 = arith.addf %125, %122 : vector<64x16xf32>
    %127 = arith.mulf %124, %126 : vector<64x16xf32>
    %c0_66 = arith.constant 0 : index
    %c0_67 = arith.constant 0 : index
    %128 = vector.load %arg17[%c0_66, %c0_67] : memref<16x64xf32, #tpu.memory_space<vmem>>, vector<16x64xf32>
    %cst_68 = arith.constant dense<0.000000e+00> : vector<16x16xf32>
    %129 = tpu.matmul %128, %127, %cst_68 {dimension_numbers = #tpu.dot_dimension_numbers<[1], [0], [0], [1], [0, 0, 1, 1], [], []>} : vector<16x64xf32>, vector<64x16xf32>, vector<16x16xf32> -> vector<16x16xf32>
    %c0_69 = arith.constant 0 : index
    %c0_70 = arith.constant 0 : index
    %130 = vector.load %arg18[%c0_69, %c0_70] : memref<16x1xf32, #tpu.memory_space<vmem>>, vector<16x1xf32>
    %131 = vector.broadcast %130 : vector<16x1xf32> to vector<16x16xf32>
    %132 = arith.addf %129, %131 : vector<16x16xf32>
    %133 = arith.addf %60, %132 : vector<16x16xf32>
    %134 = arith.addf %133, %1 : vector<16x16xf32>
    %c0_71 = arith.constant 0 : index
    %c0_72 = arith.constant 0 : index
    %c0_73 = arith.constant 0 : index
    %135 = vector.load %arg19[%c0_71, %c0_72, %c0_73] : memref<1x16x16xf32, #tpu.memory_space<vmem>>, vector<1x16x16xf32>
    %136 = vector.shape_cast %135 : vector<1x16x16xf32> to vector<16x16xf32>
    %137 = vector.shape_cast %134 : vector<16x16xf32> to vector<1x16x16xf32>
    tpu.vector_store %arg19[%c0_71, %c0_72, %c0_73], %137 {strides = array<i32>} : memref<1x16x16xf32, #tpu.memory_space<vmem>>, vector<1x16x16xf32>,
    return
  }
  func.func @transform_0(%arg0: i32) -> (i32, i32, i32) {
    %c0_i32 = arith.constant 0 : i32
    %c0_i32_0 = arith.constant 0 : i32
    %c0_i32_1 = arith.constant 0 : i32
    return %arg0, %c0_i32, %c0_i32_0 : i32, i32, i32
  }
  func.func @transform_1(%arg0: i32) -> (i32, i32) {
    %c0_i32 = arith.constant 0 : i32
    %c0_i32_0 = arith.constant 0 : i32
    %c0_i32_1 = arith.constant 0 : i32
    return %c0_i32, %c0_i32_0 : i32, i32
  }
  func.func @transform_2(%arg0: i32) -> (i32, i32) {
    %c0_i32 = arith.constant 0 : i32
    %c0_i32_0 = arith.constant 0 : i32
    %c0_i32_1 = arith.constant 0 : i32
    return %c0_i32, %c0_i32_0 : i32, i32
  }
  func.func @transform_3(%arg0: i32) -> (i32, i32) {
    %c0_i32 = arith.constant 0 : i32
    %c0_i32_0 = arith.constant 0 : i32
    %c0_i32_1 = arith.constant 0 : i32
    return %c0_i32, %c0_i32_0 : i32, i32
  }
  func.func @transform_4(%arg0: i32) -> (i32, i32) {
    %c0_i32 = arith.constant 0 : i32
    %c0_i32_0 = arith.constant 0 : i32
    %c0_i32_1 = arith.constant 0 : i32
    return %c0_i32, %c0_i32_0 : i32, i32
  }
  func.func @transform_5(%arg0: i32) -> (i32, i32) {
    %c0_i32 = arith.constant 0 : i32
    %c0_i32_0 = arith.constant 0 : i32
    %c0_i32_1 = arith.constant 0 : i32
    return %c0_i32, %c0_i32_0 : i32, i32
  }
  func.func @transform_6(%arg0: i32) -> (i32, i32) {
    %c0_i32 = arith.constant 0 : i32
    %c0_i32_0 = arith.constant 0 : i32
    %c0_i32_1 = arith.constant 0 : i32
    return %c0_i32, %c0_i32_0 : i32, i32
  }
  func.func @transform_7(%arg0: i32) -> (i32, i32) {
    %c0_i32 = arith.constant 0 : i32
    %c0_i32_0 = arith.constant 0 : i32
    %c0_i32_1 = arith.constant 0 : i32
    return %c0_i32, %c0_i32_0 : i32, i32
  }
  func.func @transform_8(%arg0: i32) -> (i32, i32) {
    %c0_i32 = arith.constant 0 : i32
    %c0_i32_0 = arith.constant 0 : i32
    %c0_i32_1 = arith.constant 0 : i32
    return %c0_i32, %c0_i32_0 : i32, i32
  }
  func.func @transform_9(%arg0: i32) -> (i32, i32) {
    %c0_i32 = arith.constant 0 : i32
    %c0_i32_0 = arith.constant 0 : i32
    %c0_i32_1 = arith.constant 0 : i32
    return %c0_i32, %c0_i32_0 : i32, i32
  }
  func.func @transform_10(%arg0: i32) -> (i32, i32) {
    %c0_i32 = arith.constant 0 : i32
    %c0_i32_0 = arith.constant 0 : i32
    %c0_i32_1 = arith.constant 0 : i32
    return %c0_i32, %c0_i32_0 : i32, i32
  }
  func.func @transform_11(%arg0: i32) -> (i32, i32) {
    %c0_i32 = arith.constant 0 : i32
    %c0_i32_0 = arith.constant 0 : i32
    %c0_i32_1 = arith.constant 0 : i32
    return %c0_i32, %c0_i32_0 : i32, i32
  }
  func.func @transform_12(%arg0: i32) -> (i32, i32) {
    %c0_i32 = arith.constant 0 : i32
    %c0_i32_0 = arith.constant 0 : i32
    %c0_i32_1 = arith.constant 0 : i32
    return %c0_i32, %c0_i32_0 : i32, i32
  }
  func.func @transform_13(%arg0: i32) -> (i32, i32) {
    %c0_i32 = arith.constant 0 : i32
    %c0_i32_0 = arith.constant 0 : i32
    %c0_i32_1 = arith.constant 0 : i32
    return %c0_i32, %c0_i32_0 : i32, i32
  }
  func.func @transform_14(%arg0: i32) -> (i32, i32) {
    %c0_i32 = arith.constant 0 : i32
    %c0_i32_0 = arith.constant 0 : i32
    %c0_i32_1 = arith.constant 0 : i32
    return %c0_i32, %c0_i32_0 : i32, i32
  }
  func.func @transform_15(%arg0: i32) -> (i32, i32) {
    %c0_i32 = arith.constant 0 : i32
    %c0_i32_0 = arith.constant 0 : i32
    %c0_i32_1 = arith.constant 0 : i32
    return %c0_i32, %c0_i32_0 : i32, i32
  }
  func.func @transform_16(%arg0: i32) -> (i32, i32) {
    %c0_i32 = arith.constant 0 : i32
    %c0_i32_0 = arith.constant 0 : i32
    %c0_i32_1 = arith.constant 0 : i32
    return %c0_i32, %c0_i32_0 : i32, i32
  }
  func.func @transform_17(%arg0: i32) -> (i32, i32) {
    %c0_i32 = arith.constant 0 : i32
    %c0_i32_0 = arith.constant 0 : i32
    %c0_i32_1 = arith.constant 0 : i32
    return %c0_i32, %c0_i32_0 : i32, i32
  }
  func.func @transform_18(%arg0: i32) -> (i32, i32, i32) {
    %c0_i32 = arith.constant 0 : i32
    %c0_i32_0 = arith.constant 0 : i32
    %c0_i32_1 = arith.constant 0 : i32
    return %arg0, %c0_i32, %c0_i32_0 : i32, i32, i32
  }
}

module attributes {stable_mosaic.version = 11 : i64} {
  func.func @_mm_kernel(%arg0: i32, %arg1: memref<144x128xf32, #tpu.memory_space<vmem>>, %arg2: memref<16x144xf32, #tpu.memory_space<vmem>>, %arg3: memref<16x1xf32, #tpu.memory_space<vmem>>, %arg4: memref<16x1xf32, #tpu.memory_space<vmem>>, %arg5: memref<16x128xf32, #tpu.memory_space<vmem>>) attributes {dimension_semantics = [#tpu.dimension_semantics<parallel>], iteration_bounds = array<i64: 1>, scalar_prefetch = 0 : i64, scratch_operands = 0 : i64, tpu.core_type = #tpu.core_type<tc>, window_params = [{transform_indices = @transform_0, window_bounds = array<i64: 144, 128>}, {pipeline_mode = #tpu.pipeline_mode<synchronous>, transform_indices = @transform_1, window_bounds = array<i64: 16, 144>}, {pipeline_mode = #tpu.pipeline_mode<synchronous>, transform_indices = @transform_2, window_bounds = array<i64: 16, 1>}, {pipeline_mode = #tpu.pipeline_mode<synchronous>, transform_indices = @transform_3, window_bounds = array<i64: 16, 1>}, {transform_indices = @transform_4, window_bounds = array<i64: 16, 128>}]} {
    %c0 = arith.constant 0 : index
    %c0_0 = arith.constant 0 : index
    %0 = vector.load %arg2[%c0, %c0_0] : memref<16x144xf32, #tpu.memory_space<vmem>>, vector<16x144xf32>
    %c0_1 = arith.constant 0 : index
    %c0_2 = arith.constant 0 : index
    %1 = vector.load %arg1[%c0_1, %c0_2] : memref<144x128xf32, #tpu.memory_space<vmem>>, vector<144x128xf32>
    %cst = arith.constant dense<0.000000e+00> : vector<16x128xf32>
    %2 = tpu.matmul %0, %1, %cst {dimension_numbers = #tpu.dot_dimension_numbers<[1], [0], [0], [1], [0, 0, 1, 1], [], []>} : vector<16x144xf32>, vector<144x128xf32>, vector<16x128xf32> -> vector<16x128xf32>
    %c0_3 = arith.constant 0 : index
    %c0_4 = arith.constant 0 : index
    %3 = vector.load %arg3[%c0_3, %c0_4] : memref<16x1xf32, #tpu.memory_space<vmem>>, vector<16x1xf32>
    %4 = vector.broadcast %3 : vector<16x1xf32> to vector<16x128xf32>
    %5 = arith.mulf %2, %4 : vector<16x128xf32>
    %c0_5 = arith.constant 0 : index
    %c0_6 = arith.constant 0 : index
    %6 = vector.load %arg4[%c0_5, %c0_6] : memref<16x1xf32, #tpu.memory_space<vmem>>, vector<16x1xf32>
    %7 = vector.broadcast %6 : vector<16x1xf32> to vector<16x128xf32>
    %8 = arith.addf %5, %7 : vector<16x128xf32>
    %cst_7 = arith.constant 0.707106769 : f32
    %9 = vector.broadcast %cst_7 : f32 to vector<16x128xf32>
    %10 = arith.mulf %8, %9 : vector<16x128xf32>
    %cst_8 = arith.constant 0.000000e+00 : f32
    %11 = vector.broadcast %cst_8 : f32 to vector<16x128xf32>
    %12 = arith.cmpf oge, %10, %11 : vector<16x128xf32>
    %cst_9 = arith.constant 1.000000e+00 : f32
    %cst_10 = arith.constant -1.000000e+00 : f32
    %13 = vector.broadcast %cst_9 : f32 to vector<16x128xf32>
    %14 = vector.broadcast %cst_10 : f32 to vector<16x128xf32>
    %15 = arith.select %12, %13, %14 : vector<16x128xi1>, vector<16x128xf32>
    %16 = math.absf %10 : vector<16x128xf32>
    %cst_11 = arith.constant 0.327591091 : f32
    %17 = vector.broadcast %cst_11 : f32 to vector<16x128xf32>
    %18 = arith.mulf %17, %16 : vector<16x128xf32>
    %cst_12 = arith.constant 1.000000e+00 : f32
    %19 = vector.broadcast %cst_12 : f32 to vector<16x128xf32>
    %20 = arith.addf %19, %18 : vector<16x128xf32>
    %21 = tpu.reciprocal %20 {approx = true} : vector<16x128xf32> -> vector<16x128xf32>
    %cst_13 = arith.constant 1.06140542 : f32
    %22 = vector.broadcast %cst_13 : f32 to vector<16x128xf32>
    %23 = arith.mulf %22, %21 : vector<16x128xf32>
    %cst_14 = arith.constant -1.45315206 : f32
    %24 = vector.broadcast %cst_14 : f32 to vector<16x128xf32>
    %25 = arith.addf %23, %24 : vector<16x128xf32>
    %26 = arith.mulf %25, %21 : vector<16x128xf32>
    %cst_15 = arith.constant 1.42141378 : f32
    %27 = vector.broadcast %cst_15 : f32 to vector<16x128xf32>
    %28 = arith.addf %26, %27 : vector<16x128xf32>
    %29 = arith.mulf %28, %21 : vector<16x128xf32>
    %cst_16 = arith.constant -0.284496725 : f32
    %30 = vector.broadcast %cst_16 : f32 to vector<16x128xf32>
    %31 = arith.addf %29, %30 : vector<16x128xf32>
    %32 = arith.mulf %31, %21 : vector<16x128xf32>
    %cst_17 = arith.constant 0.254829586 : f32
    %33 = vector.broadcast %cst_17 : f32 to vector<16x128xf32>
    %34 = arith.addf %32, %33 : vector<16x128xf32>
    %35 = arith.mulf %34, %21 : vector<16x128xf32>
    %cst_18 = arith.constant 0.000000e+00 : f32
    %36 = vector.broadcast %cst_18 : f32 to vector<16x128xf32>
    %37 = arith.subf %36, %16 : vector<16x128xf32>
    %38 = arith.mulf %37, %16 : vector<16x128xf32>
    %39 = math.exp %38 : vector<16x128xf32>
    %40 = arith.mulf %35, %39 : vector<16x128xf32>
    %cst_19 = arith.constant 1.000000e+00 : f32
    %41 = vector.broadcast %cst_19 : f32 to vector<16x128xf32>
    %42 = arith.subf %41, %40 : vector<16x128xf32>
    %43 = arith.mulf %15, %42 : vector<16x128xf32>
    %cst_20 = arith.constant 5.000000e-01 : f32
    %44 = vector.broadcast %cst_20 : f32 to vector<16x128xf32>
    %45 = arith.mulf %44, %8 : vector<16x128xf32>
    %cst_21 = arith.constant 1.000000e+00 : f32
    %46 = vector.broadcast %cst_21 : f32 to vector<16x128xf32>
    %47 = arith.addf %46, %43 : vector<16x128xf32>
    %48 = arith.mulf %45, %47 : vector<16x128xf32>
    %c0_22 = arith.constant 0 : index
    %c0_23 = arith.constant 0 : index
    %49 = vector.load %arg5[%c0_22, %c0_23] : memref<16x128xf32, #tpu.memory_space<vmem>>, vector<16x128xf32>
    tpu.vector_store %arg5[%c0_22, %c0_23], %48 {strides = array<i32>} : memref<16x128xf32, #tpu.memory_space<vmem>>, vector<16x128xf32>,
    return
  }
  func.func @transform_0(%arg0: i32) -> (i32, i32) {
    %c0_i32 = arith.constant 0 : i32
    %c0_i32_0 = arith.constant 0 : i32
    return %c0_i32, %arg0 : i32, i32
  }
  func.func @transform_1(%arg0: i32) -> (i32, i32) {
    %c0_i32 = arith.constant 0 : i32
    %c0_i32_0 = arith.constant 0 : i32
    %c0_i32_1 = arith.constant 0 : i32
    return %c0_i32, %c0_i32_0 : i32, i32
  }
  func.func @transform_2(%arg0: i32) -> (i32, i32) {
    %c0_i32 = arith.constant 0 : i32
    %c0_i32_0 = arith.constant 0 : i32
    %c0_i32_1 = arith.constant 0 : i32
    return %c0_i32, %c0_i32_0 : i32, i32
  }
  func.func @transform_3(%arg0: i32) -> (i32, i32) {
    %c0_i32 = arith.constant 0 : i32
    %c0_i32_0 = arith.constant 0 : i32
    %c0_i32_1 = arith.constant 0 : i32
    return %c0_i32, %c0_i32_0 : i32, i32
  }
  func.func @transform_4(%arg0: i32) -> (i32, i32) {
    %c0_i32 = arith.constant 0 : i32
    %c0_i32_0 = arith.constant 0 : i32
    return %c0_i32, %arg0 : i32, i32
  }
}

module attributes {stable_mosaic.version = 11 : i64} {
  func.func @_mm_kernel(%arg0: i32, %arg1: memref<64x128xf32, #tpu.memory_space<vmem>>, %arg2: memref<32x64xf32, #tpu.memory_space<vmem>>, %arg3: memref<32x1xf32, #tpu.memory_space<vmem>>, %arg4: memref<32x1xf32, #tpu.memory_space<vmem>>, %arg5: memref<32x128xf32, #tpu.memory_space<vmem>>) attributes {dimension_semantics = [#tpu.dimension_semantics<parallel>], iteration_bounds = array<i64: 1>, scalar_prefetch = 0 : i64, scratch_operands = 0 : i64, tpu.core_type = #tpu.core_type<tc>, window_params = [{transform_indices = @transform_0, window_bounds = array<i64: 64, 128>}, {pipeline_mode = #tpu.pipeline_mode<synchronous>, transform_indices = @transform_1, window_bounds = array<i64: 32, 64>}, {pipeline_mode = #tpu.pipeline_mode<synchronous>, transform_indices = @transform_2, window_bounds = array<i64: 32, 1>}, {pipeline_mode = #tpu.pipeline_mode<synchronous>, transform_indices = @transform_3, window_bounds = array<i64: 32, 1>}, {transform_indices = @transform_4, window_bounds = array<i64: 32, 128>}]} {
    %c0 = arith.constant 0 : index
    %c0_0 = arith.constant 0 : index
    %0 = vector.load %arg2[%c0, %c0_0] : memref<32x64xf32, #tpu.memory_space<vmem>>, vector<32x64xf32>
    %c0_1 = arith.constant 0 : index
    %c0_2 = arith.constant 0 : index
    %1 = vector.load %arg1[%c0_1, %c0_2] : memref<64x128xf32, #tpu.memory_space<vmem>>, vector<64x128xf32>
    %cst = arith.constant dense<0.000000e+00> : vector<32x128xf32>
    %2 = tpu.matmul %0, %1, %cst {dimension_numbers = #tpu.dot_dimension_numbers<[1], [0], [0], [1], [0, 0, 1, 1], [], []>} : vector<32x64xf32>, vector<64x128xf32>, vector<32x128xf32> -> vector<32x128xf32>
    %c0_3 = arith.constant 0 : index
    %c0_4 = arith.constant 0 : index
    %3 = vector.load %arg3[%c0_3, %c0_4] : memref<32x1xf32, #tpu.memory_space<vmem>>, vector<32x1xf32>
    %4 = vector.broadcast %3 : vector<32x1xf32> to vector<32x128xf32>
    %5 = arith.mulf %2, %4 : vector<32x128xf32>
    %c0_5 = arith.constant 0 : index
    %c0_6 = arith.constant 0 : index
    %6 = vector.load %arg4[%c0_5, %c0_6] : memref<32x1xf32, #tpu.memory_space<vmem>>, vector<32x1xf32>
    %7 = vector.broadcast %6 : vector<32x1xf32> to vector<32x128xf32>
    %8 = arith.addf %5, %7 : vector<32x128xf32>
    %cst_7 = arith.constant 0.707106769 : f32
    %9 = vector.broadcast %cst_7 : f32 to vector<32x128xf32>
    %10 = arith.mulf %8, %9 : vector<32x128xf32>
    %cst_8 = arith.constant 0.000000e+00 : f32
    %11 = vector.broadcast %cst_8 : f32 to vector<32x128xf32>
    %12 = arith.cmpf oge, %10, %11 : vector<32x128xf32>
    %cst_9 = arith.constant 1.000000e+00 : f32
    %cst_10 = arith.constant -1.000000e+00 : f32
    %13 = vector.broadcast %cst_9 : f32 to vector<32x128xf32>
    %14 = vector.broadcast %cst_10 : f32 to vector<32x128xf32>
    %15 = arith.select %12, %13, %14 : vector<32x128xi1>, vector<32x128xf32>
    %16 = math.absf %10 : vector<32x128xf32>
    %cst_11 = arith.constant 0.327591091 : f32
    %17 = vector.broadcast %cst_11 : f32 to vector<32x128xf32>
    %18 = arith.mulf %17, %16 : vector<32x128xf32>
    %cst_12 = arith.constant 1.000000e+00 : f32
    %19 = vector.broadcast %cst_12 : f32 to vector<32x128xf32>
    %20 = arith.addf %19, %18 : vector<32x128xf32>
    %21 = tpu.reciprocal %20 {approx = true} : vector<32x128xf32> -> vector<32x128xf32>
    %cst_13 = arith.constant 1.06140542 : f32
    %22 = vector.broadcast %cst_13 : f32 to vector<32x128xf32>
    %23 = arith.mulf %22, %21 : vector<32x128xf32>
    %cst_14 = arith.constant -1.45315206 : f32
    %24 = vector.broadcast %cst_14 : f32 to vector<32x128xf32>
    %25 = arith.addf %23, %24 : vector<32x128xf32>
    %26 = arith.mulf %25, %21 : vector<32x128xf32>
    %cst_15 = arith.constant 1.42141378 : f32
    %27 = vector.broadcast %cst_15 : f32 to vector<32x128xf32>
    %28 = arith.addf %26, %27 : vector<32x128xf32>
    %29 = arith.mulf %28, %21 : vector<32x128xf32>
    %cst_16 = arith.constant -0.284496725 : f32
    %30 = vector.broadcast %cst_16 : f32 to vector<32x128xf32>
    %31 = arith.addf %29, %30 : vector<32x128xf32>
    %32 = arith.mulf %31, %21 : vector<32x128xf32>
    %cst_17 = arith.constant 0.254829586 : f32
    %33 = vector.broadcast %cst_17 : f32 to vector<32x128xf32>
    %34 = arith.addf %32, %33 : vector<32x128xf32>
    %35 = arith.mulf %34, %21 : vector<32x128xf32>
    %cst_18 = arith.constant 0.000000e+00 : f32
    %36 = vector.broadcast %cst_18 : f32 to vector<32x128xf32>
    %37 = arith.subf %36, %16 : vector<32x128xf32>
    %38 = arith.mulf %37, %16 : vector<32x128xf32>
    %39 = math.exp %38 : vector<32x128xf32>
    %40 = arith.mulf %35, %39 : vector<32x128xf32>
    %cst_19 = arith.constant 1.000000e+00 : f32
    %41 = vector.broadcast %cst_19 : f32 to vector<32x128xf32>
    %42 = arith.subf %41, %40 : vector<32x128xf32>
    %43 = arith.mulf %15, %42 : vector<32x128xf32>
    %cst_20 = arith.constant 5.000000e-01 : f32
    %44 = vector.broadcast %cst_20 : f32 to vector<32x128xf32>
    %45 = arith.mulf %44, %8 : vector<32x128xf32>
    %cst_21 = arith.constant 1.000000e+00 : f32
    %46 = vector.broadcast %cst_21 : f32 to vector<32x128xf32>
    %47 = arith.addf %46, %43 : vector<32x128xf32>
    %48 = arith.mulf %45, %47 : vector<32x128xf32>
    %c0_22 = arith.constant 0 : index
    %c0_23 = arith.constant 0 : index
    %49 = vector.load %arg5[%c0_22, %c0_23] : memref<32x128xf32, #tpu.memory_space<vmem>>, vector<32x128xf32>
    tpu.vector_store %arg5[%c0_22, %c0_23], %48 {strides = array<i32>} : memref<32x128xf32, #tpu.memory_space<vmem>>, vector<32x128xf32>,
    return
  }
  func.func @transform_0(%arg0: i32) -> (i32, i32) {
    %c0_i32 = arith.constant 0 : i32
    %c0_i32_0 = arith.constant 0 : i32
    return %c0_i32, %arg0 : i32, i32
  }
  func.func @transform_1(%arg0: i32) -> (i32, i32) {
    %c0_i32 = arith.constant 0 : i32
    %c0_i32_0 = arith.constant 0 : i32
    %c0_i32_1 = arith.constant 0 : i32
    return %c0_i32, %c0_i32_0 : i32, i32
  }
  func.func @transform_2(%arg0: i32) -> (i32, i32) {
    %c0_i32 = arith.constant 0 : i32
    %c0_i32_0 = arith.constant 0 : i32
    %c0_i32_1 = arith.constant 0 : i32
    return %c0_i32, %c0_i32_0 : i32, i32
  }
  func.func @transform_3(%arg0: i32) -> (i32, i32) {
    %c0_i32 = arith.constant 0 : i32
    %c0_i32_0 = arith.constant 0 : i32
    %c0_i32_1 = arith.constant 0 : i32
    return %c0_i32, %c0_i32_0 : i32, i32
  }
  func.func @transform_4(%arg0: i32) -> (i32, i32) {
    %c0_i32 = arith.constant 0 : i32
    %c0_i32_0 = arith.constant 0 : i32
    return %c0_i32, %arg0 : i32, i32
  }
}

module attributes {stable_mosaic.version = 11 : i64} {
  func.func @_mm_kernel(%arg0: i32, %arg1: memref<32x128xf32, #tpu.memory_space<vmem>>, %arg2: memref<4x32xf32, #tpu.memory_space<vmem>>, %arg3: memref<4x1xf32, #tpu.memory_space<vmem>>, %arg4: memref<4x1xf32, #tpu.memory_space<vmem>>, %arg5: memref<4x128xf32, #tpu.memory_space<vmem>>) attributes {dimension_semantics = [#tpu.dimension_semantics<parallel>], iteration_bounds = array<i64: 1>, scalar_prefetch = 0 : i64, scratch_operands = 0 : i64, tpu.core_type = #tpu.core_type<tc>, window_params = [{transform_indices = @transform_0, window_bounds = array<i64: 32, 128>}, {pipeline_mode = #tpu.pipeline_mode<synchronous>, transform_indices = @transform_1, window_bounds = array<i64: 4, 32>}, {pipeline_mode = #tpu.pipeline_mode<synchronous>, transform_indices = @transform_2, window_bounds = array<i64: 4, 1>}, {pipeline_mode = #tpu.pipeline_mode<synchronous>, transform_indices = @transform_3, window_bounds = array<i64: 4, 1>}, {transform_indices = @transform_4, window_bounds = array<i64: 4, 128>}]} {
    %c0 = arith.constant 0 : index
    %c0_0 = arith.constant 0 : index
    %0 = vector.load %arg2[%c0, %c0_0] : memref<4x32xf32, #tpu.memory_space<vmem>>, vector<4x32xf32>
    %c0_1 = arith.constant 0 : index
    %c0_2 = arith.constant 0 : index
    %1 = vector.load %arg1[%c0_1, %c0_2] : memref<32x128xf32, #tpu.memory_space<vmem>>, vector<32x128xf32>
    %cst = arith.constant dense<0.000000e+00> : vector<4x128xf32>
    %2 = tpu.matmul %0, %1, %cst {dimension_numbers = #tpu.dot_dimension_numbers<[1], [0], [0], [1], [0, 0, 1, 1], [], []>} : vector<4x32xf32>, vector<32x128xf32>, vector<4x128xf32> -> vector<4x128xf32>
    %c0_3 = arith.constant 0 : index
    %c0_4 = arith.constant 0 : index
    %3 = vector.load %arg3[%c0_3, %c0_4] : memref<4x1xf32, #tpu.memory_space<vmem>>, vector<4x1xf32>
    %4 = vector.broadcast %3 : vector<4x1xf32> to vector<4x128xf32>
    %5 = arith.mulf %2, %4 : vector<4x128xf32>
    %c0_5 = arith.constant 0 : index
    %c0_6 = arith.constant 0 : index
    %6 = vector.load %arg4[%c0_5, %c0_6] : memref<4x1xf32, #tpu.memory_space<vmem>>, vector<4x1xf32>
    %7 = vector.broadcast %6 : vector<4x1xf32> to vector<4x128xf32>
    %8 = arith.addf %5, %7 : vector<4x128xf32>
    %c0_7 = arith.constant 0 : index
    %c0_8 = arith.constant 0 : index
    %9 = vector.load %arg5[%c0_7, %c0_8] : memref<4x128xf32, #tpu.memory_space<vmem>>, vector<4x128xf32>
    tpu.vector_store %arg5[%c0_7, %c0_8], %8 {strides = array<i32>} : memref<4x128xf32, #tpu.memory_space<vmem>>, vector<4x128xf32>,
    return
  }
  func.func @transform_0(%arg0: i32) -> (i32, i32) {
    %c0_i32 = arith.constant 0 : i32
    %c0_i32_0 = arith.constant 0 : i32
    return %c0_i32, %arg0 : i32, i32
  }
  func.func @transform_1(%arg0: i32) -> (i32, i32) {
    %c0_i32 = arith.constant 0 : i32
    %c0_i32_0 = arith.constant 0 : i32
    %c0_i32_1 = arith.constant 0 : i32
    return %c0_i32, %c0_i32_0 : i32, i32
  }
  func.func @transform_2(%arg0: i32) -> (i32, i32) {
    %c0_i32 = arith.constant 0 : i32
    %c0_i32_0 = arith.constant 0 : i32
    %c0_i32_1 = arith.constant 0 : i32
    return %c0_i32, %c0_i32_0 : i32, i32
  }
  func.func @transform_3(%arg0: i32) -> (i32, i32) {
    %c0_i32 = arith.constant 0 : i32
    %c0_i32_0 = arith.constant 0 : i32
    %c0_i32_1 = arith.constant 0 : i32
    return %c0_i32, %c0_i32_0 : i32, i32
  }
  func.func @transform_4(%arg0: i32) -> (i32, i32) {
    %c0_i32 = arith.constant 0 : i32
    %c0_i32_0 = arith.constant 0 : i32
    return %c0_i32, %arg0 : i32, i32
  }
}

</mosaic_0001>

<llo_original>
// kernel: hybrid_transformer_forward.6
$region0: #{hybrid_transformer_forward.6}
  #allocation0 [shape = 'u32[]', space=smem, size = 0x4, offset = 0x4, fixed_abs, tag = 'smem constant byte address 0x4 - core index']
  #allocation1 [shape = 'u32[72,128]{1,0:T(1,128)}', space=vmem, size = 0x9000, scoped, tag = 'internal scratch']
  %s0 = inlined_call_operand.vmem [shape: f32[4,9,128], index: 0, kind: input, shape index: {}]
  %s1 = inlined_call_operand.vmem [shape: f32[8,9], index: 1, kind: input, shape index: {}]
  %s2 = inlined_call_operand.vmem [shape: f32[8,1], index: 2, kind: input, shape index: {}]
  %s3 = inlined_call_operand.vmem [shape: f32[8,1], index: 3, kind: input, shape index: {}]
  %s4 = inlined_call_operand.vmem [shape: f32[8,128], index: 4, kind: output, shape index: {}]
  %s5 = sld [smem:[#allocation0]]
  $region26: #{hybrid_transformer_forward.6} parent=0
    _
  %s7 = ssub.s32 1, %s5
  %s8 = scalar_select 0, %s7, %s5
  // Predicated region
  $region2: #{hybrid_transformer_forward.6} parent=0 // pred_check
    _
  $region3: #{hybrid_transformer_forward.6} parent=0 // pred_check_branch
    %10 = sbr.rel (0) target = $region5
  $region4: #{hybrid_transformer_forward.6} parent=0 // pred_region
    _
  $region5: #{hybrid_transformer_forward.6} parent=0 // pred_fallthru
    _
  // Predicated region
  $region6: #{hybrid_transformer_forward.6} parent=0 // pred_check
    _
  $region7: #{hybrid_transformer_forward.6} parent=0 // pred_check_branch
    %12 = sbr.rel (0) target = $region9
  $region8: #{hybrid_transformer_forward.6} parent=0 // pred_region
    _
  $region9: #{hybrid_transformer_forward.6} parent=0 // pred_fallthru
    _
  // Predicated region
  $region10: #{hybrid_transformer_forward.6} parent=0 // pred_check
    _
  $region11: #{hybrid_transformer_forward.6} parent=0 // pred_check_branch
    %14 = sbr.rel (0) target = $region13
  $region12: #{hybrid_transformer_forward.6} parent=0 // pred_region
    _
  $region13: #{hybrid_transformer_forward.6} parent=0 // pred_fallthru
    _
  // Predicated region
  $region14: #{hybrid_transformer_forward.6} parent=0 // pred_check
    _
  $region15: #{hybrid_transformer_forward.6} parent=0 // pred_check_branch
    %16 = sbr.rel (0) target = $region17
  $region16: #{hybrid_transformer_forward.6} parent=0 // pred_region
    _
  $region17: #{hybrid_transformer_forward.6} parent=0 // pred_fallthru
    _
  %v17 = vld [vmem:[%s1] sm:$0xff]
  %v18 = vld [vmem:[%s2] sm:$0xff]
  %v19 = vld [vmem:[%s3] sm:$0xff]
  %v20 = vld [vmem:[%s0] sm:$0xff]
  %v21 = vld [vmem:[%s0 + $0x8] sm:$0x1]
  %vm22 = vcmask 72704
  %v24 = vsel %vm22, %v17, 0
  %vm26 = vcmask 1040384
  %v28 = vsel %vm26, %v21, 0
  %30 = vmatpush.msra.mxu0 0.0
  %31 = vmatpush.msra.mxu0 0.0
  %32 = vmatpush.msra.mxu0 0.0
  %33 = vmatpush.msra.mxu0 0.0
  %34 = vmatpush.msra.mxu0 0.0
  %35 = vmatpush.msra.mxu0 0.0
  %36 = vmatpush.msra.mxu0 0.0
  %37 = vmatpush.msra.mxu0 0.0
  %38 = vmatpush.msra.mxu0 0.0
  %39 = vmatpush.msra.mxu0 0.0
  %40 = vmatpush.msra.mxu0 0.0
  %41 = vmatpush.msra.mxu0 0.0
  %42 = vmatpush.msra.mxu0 0.0
  %43 = vmatpush.msra.mxu0 0.0
  %44 = vmatpush.msra.mxu0 %v28
  %45 = vmatpush.msra.mxu0 %v20
  %46 = vmatmul.f32.gmra.mxu0 %v24
  %v47 = vpop.f32.mrf.mxu0
  %v48 = vadd.f32 0.0, %v47
  %49 = vdwg.mxu0
  %51 = vset.pattern.permute.xlu0 0
  %52 = vperm.xlu0 %51, %v18
  %v53 = vpop.permute.xlu0 %52
  %v55 = vmul.f32 %v48, %v53
  %57 = vset.pattern.permute.xlu0 0
  %58 = vperm.xlu0 %57, %v19
  %v59 = vpop.permute.xlu0 %58
  %v61 = vadd.f32 %v55, %v59
  %v62 = vmul.f32 %v61, 0.70710677
  %vm63 = vcmp.ge.f32.partialorder %v62, 0.0
  %v64 = vsel %vm63, 1.0, -1.0
  %v65 = vand.u32 2147483647, %v62
  %v66 = vmul.f32 %v65, 0.3275911
  %v67 = vadd.f32 %v66, 1.0
  %v68 = vrcp.pop %v67
  %v69 = vmul.f32 %v68, 1.0614054
  %v70 = vadd.f32 %v69, -1.4531521
  %v71 = vmul.f32 %v70, %v68
  %v72 = vadd.f32 %v71, 1.4214138
  %v73 = vmul.f32 %v72, %v68
  %v74 = vadd.f32 %v73, -0.28449672
  %v75 = vmul.f32 %v74, %v68
  %v76 = vadd.f32 %v75, 0.2548296
  %v77 = vmul.f32 %v76, %v68
  %v78 = vsub.f32 0.0, %v65
  %v79 = vmul.f32 %v78, %v65
  %v80 = vmul.f32 %v79, 1.442695
  %v81 = vpow.pop %v80
  %v82 = vmul.f32 %v77, %v81
  %v83 = vsub.f32 1.0, %v82
  %v84 = vmul.f32 %v64, %v83
  %v85 = vmul.f32 %v61, 0.5
  %v86 = vadd.f32 %v84, 1.0
  %v87 = vmul.f32 %v85, %v86
  %s88 = scalar_lea.vmem %s0, 16
  %v89 = vld [vmem:[%s88] sm:$0xff]
  %v90 = vld [vmem:[%s88 + $0x8] sm:$0x1]
  %v92 = vsel %vm26, %v90, 0
  %94 = vmatpush.msra.mxu0 0.0
  %95 = vmatpush.msra.mxu0 0.0
  %96 = vmatpush.msra.mxu0 0.0
  %97 = vmatpush.msra.mxu0 0.0
  %98 = vmatpush.msra.mxu0 0.0
  %99 = vmatpush.msra.mxu0 0.0
  %100 = vmatpush.msra.mxu0 0.0
  %101 = vmatpush.msra.mxu0 0.0
  %102 = vmatpush.msra.mxu0 0.0
  %103 = vmatpush.msra.mxu0 0.0
  %104 = vmatpush.msra.mxu0 0.0
  %105 = vmatpush.msra.mxu0 0.0
  %106 = vmatpush.msra.mxu0 0.0
  %107 = vmatpush.msra.mxu0 0.0
  %108 = vmatpush.msra.mxu0 %v92
  %109 = vmatpush.msra.mxu0 %v89
  %110 = vmatmul.f32.gmra.mxu0 %v24
  %v111 = vpop.f32.mrf.mxu0
  %v112 = vadd.f32 0.0, %v111
  %113 = vdwg.mxu0
  %v114 = vmul.f32 %v112, %v53
  %v115 = vadd.f32 %v114, %v59
  %v116 = vmul.f32 %v115, 0.70710677
  %vm117 = vcmp.ge.f32.partialorder %v116, 0.0
  %v118 = vsel %vm117, 1.0, -1.0
  %v119 = vand.u32 2147483647, %v116
  %v120 = vmul.f32 %v119, 0.3275911
  %v121 = vadd.f32 %v120, 1.0
  %v122 = vrcp.pop %v121
  %v123 = vmul.f32 %v122, 1.0614054
  %v124 = vadd.f32 %v123, -1.4531521
  %v125 = vmul.f32 %v124, %v122
  %v126 = vadd.f32 %v125, 1.4214138
  %v127 = vmul.f32 %v126, %v122
  %v128 = vadd.f32 %v127, -0.28449672
  %v129 = vmul.f32 %v128, %v122
  %v130 = vadd.f32 %v129, 0.2548296
  %v131 = vmul.f32 %v130, %v122
  %v132 = vsub.f32 0.0, %v119
  %v133 = vmul.f32 %v132, %v119
  %v134 = vmul.f32 %v133, 1.442695
  %v135 = vpow.pop %v134
  %v136 = vmul.f32 %v131, %v135
  %v137 = vsub.f32 1.0, %v136
  %v138 = vmul.f32 %v118, %v137
  %v139 = vmul.f32 %v115, 0.5
  %v140 = vadd.f32 %v138, 1.0
  %v141 = vmul.f32 %v139, %v140
  %v142 = vmax.f32 %v87, %v141
  %s143 = scalar_lea.vmem %s0, 32
  %v144 = vld [vmem:[%s143] sm:$0xff]
  %v145 = vld [vmem:[%s143 + $0x8] sm:$0x1]
  %v147 = vsel %vm26, %v145, 0
  %149 = vmatpush.msra.mxu0 0.0
  %150 = vmatpush.msra.mxu0 0.0
  %151 = vmatpush.msra.mxu0 0.0
  %152 = vmatpush.msra.mxu0 0.0
  %153 = vmatpush.msra.mxu0 0.0
  %154 = vmatpush.msra.mxu0 0.0
  %155 = vmatpush.msra.mxu0 0.0
  %156 = vmatpush.msra.mxu0 0.0
  %157 = vmatpush.msra.mxu0 0.0
  %158 = vmatpush.msra.mxu0 0.0
  %159 = vmatpush.msra.mxu0 0.0
  %160 = vmatpush.msra.mxu0 0.0
  %161 = vmatpush.msra.mxu0 0.0
  %162 = vmatpush.msra.mxu0 0.0
  %163 = vmatpush.msra.mxu0 %v147
  %164 = vmatpush.msra.mxu0 %v144
  %165 = vmatmul.f32.gmra.mxu0 %v24
  %v166 = vpop.f32.mrf.mxu0
  %v167 = vadd.f32 0.0, %v166
  %168 = vdwg.mxu0
  %v169 = vmul.f32 %v167, %v53
  %v170 = vadd.f32 %v169, %v59
  %v171 = vmul.f32 %v170, 0.70710677
  %vm172 = vcmp.ge.f32.partialorder %v171, 0.0
  %v173 = vsel %vm172, 1.0, -1.0
  %v174 = vand.u32 2147483647, %v171
  %v175 = vmul.f32 %v174, 0.3275911
  %v176 = vadd.f32 %v175, 1.0
  %v177 = vrcp.pop %v176
  %v178 = vmul.f32 %v177, 1.0614054
  %v179 = vadd.f32 %v178, -1.4531521
  %v180 = vmul.f32 %v179, %v177
  %v181 = vadd.f32 %v180, 1.4214138
  %v182 = vmul.f32 %v181, %v177
  %v183 = vadd.f32 %v182, -0.28449672
  %v184 = vmul.f32 %v183, %v177
  %v185 = vadd.f32 %v184, 0.2548296
  %v186 = vmul.f32 %v185, %v177
  %v187 = vsub.f32 0.0, %v174
  %v188 = vmul.f32 %v187, %v174
  %v189 = vmul.f32 %v188, 1.442695
  %v190 = vpow.pop %v189
  %v191 = vmul.f32 %v186, %v190
  %v192 = vsub.f32 1.0, %v191
  %v193 = vmul.f32 %v173, %v192
  %v194 = vmul.f32 %v170, 0.5
  %v195 = vadd.f32 %v193, 1.0
  %v196 = vmul.f32 %v194, %v195
  %v197 = vmax.f32 %v142, %v196
  %s198 = scalar_lea.vmem %s0, 48
  %v199 = vld [vmem:[%s198] sm:$0xff]
  %v200 = vld [vmem:[%s198 + $0x8] sm:$0x1]
  %v202 = vsel %vm26, %v200, 0
  %204 = vmatpush.msra.mxu0 0.0
  %205 = vmatpush.msra.mxu0 0.0
  %206 = vmatpush.msra.mxu0 0.0
  %207 = vmatpush.msra.mxu0 0.0
  %208 = vmatpush.msra.mxu0 0.0
  %209 = vmatpush.msra.mxu0 0.0
  %210 = vmatpush.msra.mxu0 0.0
  %211 = vmatpush.msra.mxu0 0.0
  %212 = vmatpush.msra.mxu0 0.0
  %213 = vmatpush.msra.mxu0 0.0
  %214 = vmatpush.msra.mxu0 0.0
  %215 = vmatpush.msra.mxu0 0.0
  %216 = vmatpush.msra.mxu0 0.0
  %217 = vmatpush.msra.mxu0 0.0
  %218 = vmatpush.msra.mxu0 %v202
  %219 = vmatpush.msra.mxu0 %v199
  %220 = vmatmul.f32.gmra.mxu0 %v24
  %v221 = vpop.f32.mrf.mxu0
  %v222 = vadd.f32 0.0, %v221
  %223 = vdwg.mxu0
  %v224 = vmul.f32 %v222, %v53
  %v225 = vadd.f32 %v224, %v59
  %v226 = vmul.f32 %v225, 0.70710677
  %vm227 = vcmp.ge.f32.partialorder %v226, 0.0
  %v228 = vsel %vm227, 1.0, -1.0
  %v229 = vand.u32 2147483647, %v226
  %v230 = vmul.f32 %v229, 0.3275911
  %v231 = vadd.f32 %v230, 1.0
  %v232 = vrcp.pop %v231
  %v233 = vmul.f32 %v232, 1.0614054
  %v234 = vadd.f32 %v233, -1.4531521
  %v235 = vmul.f32 %v234, %v232
  %v236 = vadd.f32 %v235, 1.4214138
  %v237 = vmul.f32 %v236, %v232
  %v238 = vadd.f32 %v237, -0.28449672
  %v239 = vmul.f32 %v238, %v232
  %v240 = vadd.f32 %v239, 0.2548296
  %v241 = vmul.f32 %v240, %v232
  %v242 = vsub.f32 0.0, %v229
  %v243 = vmul.f32 %v242, %v229
  %v244 = vmul.f32 %v243, 1.442695
  %v245 = vpow.pop %v244
  %v246 = vmul.f32 %v241, %v245
  %v247 = vsub.f32 1.0, %v246
  %v248 = vmul.f32 %v228, %v247
  %v249 = vmul.f32 %v225, 0.5
  %v250 = vadd.f32 %v248, 1.0
  %v251 = vmul.f32 %v249, %v250
  %v252 = vmax.f32 %v197, %v251
  %253 = vst [vmem:[%s4] sm:$0xff] %v252
  // Predicated region
  $region18: #{hybrid_transformer_forward.6} parent=0 // pred_check
    _
  $region19: #{hybrid_transformer_forward.6} parent=0 // pred_check_branch
    %255 = sbr.rel (0) target = $region21
  $region20: #{hybrid_transformer_forward.6} parent=0 // pred_region
    _
  $region21: #{hybrid_transformer_forward.6} parent=0 // pred_fallthru
    _
  // Predicated region
  $region22: #{hybrid_transformer_forward.6} parent=0 // pred_check
    _
  $region23: #{hybrid_transformer_forward.6} parent=0 // pred_check_branch
    %257 = sbr.rel (0) target = $region25
  $region24: #{hybrid_transformer_forward.6} parent=0 // pred_region
    _
  $region25: #{hybrid_transformer_forward.6} parent=0 // pred_fallthru
    _

// kernel: hybrid_transformer_forward.7
$region0: #{hybrid_transformer_forward.7}
  #allocation0 [shape = 'u32[]', space=smem, size = 0x4, offset = 0x4, fixed_abs, tag = 'smem constant byte address 0x4 - core index']
  #allocation1 [shape = 'u32[72,128]{1,0:T(1,128)}', space=vmem, size = 0x9000, scoped, tag = 'internal scratch']
  %s0 = inlined_call_operand.vmem [shape: f32[4,72,128], index: 0, kind: input, shape index: {}]
  %s1 = inlined_call_operand.vmem [shape: f32[16,72], index: 1, kind: input, shape index: {}]
  %s2 = inlined_call_operand.vmem [shape: f32[16,1], index: 2, kind: input, shape index: {}]
  %s3 = inlined_call_operand.vmem [shape: f32[16,1], index: 3, kind: input, shape index: {}]
  %s4 = inlined_call_operand.vmem [shape: f32[16,128], index: 4, kind: output, shape index: {}]
  %s5 = sld [smem:[#allocation0]]
  $region26: #{hybrid_transformer_forward.7} parent=0
    _
  %s7 = ssub.s32 1, %s5
  %s8 = scalar_select 0, %s7, %s5
  // Predicated region
  $region2: #{hybrid_transformer_forward.7} parent=0 // pred_check
    _
  $region3: #{hybrid_transformer_forward.7} parent=0 // pred_check_branch
    %10 = sbr.rel (0) target = $region5
  $region4: #{hybrid_transformer_forward.7} parent=0 // pred_region
    _
  $region5: #{hybrid_transformer_forward.7} parent=0 // pred_fallthru
    _
  // Predicated region
  $region6: #{hybrid_transformer_forward.7} parent=0 // pred_check
    _
  $region7: #{hybrid_transformer_forward.7} parent=0 // pred_check_branch
    %12 = sbr.rel (0) target = $region9
  $region8: #{hybrid_transformer_forward.7} parent=0 // pred_region
    _
  $region9: #{hybrid_transformer_forward.7} parent=0 // pred_fallthru
    _
  // Predicated region
  $region10: #{hybrid_transformer_forward.7} parent=0 // pred_check
    _
  $region11: #{hybrid_transformer_forward.7} parent=0 // pred_check_branch
    %14 = sbr.rel (0) target = $region13
  $region12: #{hybrid_transformer_forward.7} parent=0 // pred_region
    _
  $region13: #{hybrid_transformer_forward.7} parent=0 // pred_fallthru
    _
  // Predicated region
  $region14: #{hybrid_transformer_forward.7} parent=0 // pred_check
    _
  $region15: #{hybrid_transformer_forward.7} parent=0 // pred_check_branch
    %16 = sbr.rel (0) target = $region17
  $region16: #{hybrid_transformer_forward.7} parent=0 // pred_region
    _
  $region17: #{hybrid_transformer_forward.7} parent=0 // pred_fallthru
    _
  %v17 = vld [vmem:[%s1] sm:$0xff]
  %v18 = vld [vmem:[%s1 + $0x8] sm:$0xff]
  %v19 = vld [vmem:[%s2] sm:$0xff]
  %v20 = vld [vmem:[%s2 + $0x8] sm:$0xff]
  %v21 = vld [vmem:[%s3] sm:$0xff]
  %v22 = vld [vmem:[%s3 + $0x8] sm:$0xff]
  %v23 = vld [vmem:[%s0] sm:$0xff]
  %v24 = vld [vmem:[%s0 + $0x8] sm:$0xff]
  %v25 = vld [vmem:[%s0 + $0x10] sm:$0xff]
  %v26 = vld [vmem:[%s0 + $0x18] sm:$0xff]
  %v27 = vld [vmem:[%s0 + $0x20] sm:$0xff]
  %v28 = vld [vmem:[%s0 + $0x28] sm:$0xff]
  %v29 = vld [vmem:[%s0 + $0x30] sm:$0xff]
  %v30 = vld [vmem:[%s0 + $0x38] sm:$0xff]
  %v31 = vld [vmem:[%s0 + $0x40] sm:$0xff]
  %vm32 = vcmask 588800
  %v34 = vsel %vm32, %v17, 0
  %v37 = vsel %vm32, %v18, 0
  %39 = vmatpush.msra.mxu0 0.0
  %40 = vmatpush.msra.mxu0 0.0
  %41 = vmatpush.msra.mxu0 0.0
  %42 = vmatpush.msra.mxu0 0.0
  %43 = vmatpush.msra.mxu0 0.0
  %44 = vmatpush.msra.mxu0 0.0
  %45 = vmatpush.msra.mxu0 0.0
  %46 = vmatpush.msra.mxu0 %v31
  %47 = vmatpush.msra.mxu0 %v30
  %48 = vmatpush.msra.mxu0 %v29
  %49 = vmatpush.msra.mxu0 %v28
  %50 = vmatpush.msra.mxu0 %v27
  %51 = vmatpush.msra.mxu0 %v26
  %52 = vmatpush.msra.mxu0 %v25
  %53 = vmatpush.msra.mxu0 %v24
  %54 = vmatpush.msra.mxu0 %v23
  %55 = vmatmul.f32.gmra.mxu0 %v34
  %v56 = vpop.f32.mrf.mxu0
  %v57 = vadd.f32 0.0, %v56
  %58 = vmatmul.f32.gmra.mxu0 %v37
  %v59 = vpop.f32.mrf.mxu0
  %v60 = vadd.f32 0.0, %v59
  %61 = vdwg.mxu0
  %63 = vset.pattern.permute.xlu0 0
  %64 = vperm.xlu0 %63, %v19
  %v65 = vpop.permute.xlu0 %64
  %68 = vset.pattern.permute.xlu0 0
  %69 = vperm.xlu0 %68, %v20
  %v70 = vpop.permute.xlu0 %69
  %v72 = vmul.f32 %v57, %v65
  %v73 = vmul.f32 %v60, %v70
  %75 = vset.pattern.permute.xlu0 0
  %76 = vperm.xlu0 %75, %v21
  %v77 = vpop.permute.xlu0 %76
  %80 = vset.pattern.permute.xlu0 0
  %81 = vperm.xlu0 %80, %v22
  %v82 = vpop.permute.xlu0 %81
  %v84 = vadd.f32 %v72, %v77
  %v85 = vadd.f32 %v73, %v82
  %v86 = vmul.f32 %v84, 0.70710677
  %v87 = vmul.f32 %v85, 0.70710677
  %vm88 = vcmp.ge.f32.partialorder %v86, 0.0
  %vm89 = vcmp.ge.f32.partialorder %v87, 0.0
  %v90 = vsel %vm88, 1.0, -1.0
  %v91 = vsel %vm89, 1.0, -1.0
  %v92 = vand.u32 2147483647, %v86
  %v93 = vand.u32 2147483647, %v87
  %v94 = vmul.f32 %v92, 0.3275911
  %v95 = vmul.f32 %v93, 0.3275911
  %v96 = vadd.f32 %v94, 1.0
  %v97 = vadd.f32 %v95, 1.0
  %v98 = vrcp.pop %v96
  %v99 = vrcp.pop %v97
  %v100 = vmul.f32 %v98, 1.0614054
  %v101 = vmul.f32 %v99, 1.0614054
  %v102 = vadd.f32 %v100, -1.4531521
  %v103 = vadd.f32 %v101, -1.4531521
  %v104 = vmul.f32 %v102, %v98
  %v105 = vmul.f32 %v103, %v99
  %v106 = vadd.f32 %v104, 1.4214138
  %v107 = vadd.f32 %v105, 1.4214138
  %v108 = vmul.f32 %v106, %v98
  %v109 = vmul.f32 %v107, %v99
  %v110 = vadd.f32 %v108, -0.28449672
  %v111 = vadd.f32 %v109, -0.28449672
  %v112 = vmul.f32 %v110, %v98
  %v113 = vmul.f32 %v111, %v99
  %v114 = vadd.f32 %v112, 0.2548296
  %v115 = vadd.f32 %v113, 0.2548296
  %v116 = vmul.f32 %v114, %v98
  %v117 = vmul.f32 %v115, %v99
  %v118 = vsub.f32 0.0, %v92
  %v119 = vsub.f32 0.0, %v93
  %v120 = vmul.f32 %v118, %v92
  %v121 = vmul.f32 %v119, %v93
  %v122 = vmul.f32 %v120, 1.442695
  %v123 = vpow.pop %v122
  %v124 = vmul.f32 %v121, 1.442695
  %v125 = vpow.pop %v124
  %v126 = vmul.f32 %v116, %v123
  %v127 = vmul.f32 %v117, %v125
  %v128 = vsub.f32 1.0, %v126
  %v129 = vsub.f32 1.0, %v127
  %v130 = vmul.f32 %v90, %v128
  %v131 = vmul.f32 %v91, %v129
  %v132 = vmul.f32 %v84, 0.5
  %v133 = vmul.f32 %v85, 0.5
  %v134 = vadd.f32 %v130, 1.0
  %v135 = vadd.f32 %v131, 1.0
  %v136 = vmul.f32 %v132, %v134
  %v137 = vmul.f32 %v133, %v135
  %s138 = scalar_lea.vmem %s0, 72
  %v139 = vld [vmem:[%s138] sm:$0xff]
  %v140 = vld [vmem:[%s138 + $0x8] sm:$0xff]
  %v141 = vld [vmem:[%s138 + $0x10] sm:$0xff]
  %v142 = vld [vmem:[%s138 + $0x18] sm:$0xff]
  %v143 = vld [vmem:[%s138 + $0x20] sm:$0xff]
  %v144 = vld [vmem:[%s138 + $0x28] sm:$0xff]
  %v145 = vld [vmem:[%s138 + $0x30] sm:$0xff]
  %v146 = vld [vmem:[%s138 + $0x38] sm:$0xff]
  %v147 = vld [vmem:[%s138 + $0x40] sm:$0xff]
  %148 = vmatpush.msra.mxu0 0.0
  %149 = vmatpush.msra.mxu0 0.0
  %150 = vmatpush.msra.mxu0 0.0
  %151 = vmatpush.msra.mxu0 0.0
  %152 = vmatpush.msra.mxu0 0.0
  %153 = vmatpush.msra.mxu0 0.0
  %154 = vmatpush.msra.mxu0 0.0
  %155 = vmatpush.msra.mxu0 %v147
  %156 = vmatpush.msra.mxu0 %v146
  %157 = vmatpush.msra.mxu0 %v145
  %158 = vmatpush.msra.mxu0 %v144
  %159 = vmatpush.msra.mxu0 %v143
  %160 = vmatpush.msra.mxu0 %v142
  %161 = vmatpush.msra.mxu0 %v141
  %162 = vmatpush.msra.mxu0 %v140
  %163 = vmatpush.msra.mxu0 %v139
  %164 = vmatmul.f32.gmra.mxu0 %v34
  %v165 = vpop.f32.mrf.mxu0
  %v166 = vadd.f32 0.0, %v165
  %167 = vmatmul.f32.gmra.mxu0 %v37
  %v168 = vpop.f32.mrf.mxu0
  %v169 = vadd.f32 0.0, %v168
  %170 = vdwg.mxu0
  %v171 = vmul.f32 %v166, %v65
  %v172 = vmul.f32 %v169, %v70
  %v173 = vadd.f32 %v171, %v77
  %v174 = vadd.f32 %v172, %v82
  %v175 = vmul.f32 %v173, 0.70710677
  %v176 = vmul.f32 %v174, 0.70710677
  %vm177 = vcmp.ge.f32.partialorder %v175, 0.0
  %vm178 = vcmp.ge.f32.partialorder %v176, 0.0
  %v179 = vsel %vm177, 1.0, -1.0
  %v180 = vsel %vm178, 1.0, -1.0
  %v181 = vand.u32 2147483647, %v175
  %v182 = vand.u32 2147483647, %v176
  %v183 = vmul.f32 %v181, 0.3275911
  %v184 = vmul.f32 %v182, 0.3275911
  %v185 = vadd.f32 %v183, 1.0
  %v186 = vadd.f32 %v184, 1.0
  %v187 = vrcp.pop %v185
  %v188 = vrcp.pop %v186
  %v189 = vmul.f32 %v187, 1.0614054
  %v190 = vmul.f32 %v188, 1.0614054
  %v191 = vadd.f32 %v189, -1.4531521
  %v192 = vadd.f32 %v190, -1.4531521
  %v193 = vmul.f32 %v191, %v187
  %v194 = vmul.f32 %v192, %v188
  %v195 = vadd.f32 %v193, 1.4214138
  %v196 = vadd.f32 %v194, 1.4214138
  %v197 = vmul.f32 %v195, %v187
  %v198 = vmul.f32 %v196, %v188
  %v199 = vadd.f32 %v197, -0.28449672
  %v200 = vadd.f32 %v198, -0.28449672
  %v201 = vmul.f32 %v199, %v187
  %v202 = vmul.f32 %v200, %v188
  %v203 = vadd.f32 %v201, 0.2548296
  %v204 = vadd.f32 %v202, 0.2548296
  %v205 = vmul.f32 %v203, %v187
  %v206 = vmul.f32 %v204, %v188
  %v207 = vsub.f32 0.0, %v181
  %v208 = vsub.f32 0.0, %v182
  %v209 = vmul.f32 %v207, %v181
  %v210 = vmul.f32 %v208, %v182
  %v211 = vmul.f32 %v209, 1.442695
  %v212 = vpow.pop %v211
  %v213 = vmul.f32 %v210, 1.442695
  %v214 = vpow.pop %v213
  %v215 = vmul.f32 %v205, %v212
  %v216 = vmul.f32 %v206, %v214
  %v217 = vsub.f32 1.0, %v215
  %v218 = vsub.f32 1.0, %v216
  %v219 = vmul.f32 %v179, %v217
  %v220 = vmul.f32 %v180, %v218
  %v221 = vmul.f32 %v173, 0.5
  %v222 = vmul.f32 %v174, 0.5
  %v223 = vadd.f32 %v219, 1.0
  %v224 = vadd.f32 %v220, 1.0
  %v225 = vmul.f32 %v221, %v223
  %v226 = vmul.f32 %v222, %v224
  %v227 = vmax.f32 %v136, %v225
  %v228 = vmax.f32 %v137, %v226
  %s229 = scalar_lea.vmem %s0, 144
  %v230 = vld [vmem:[%s229] sm:$0xff]
  %v231 = vld [vmem:[%s229 + $0x8] sm:$0xff]
  %v232 = vld [vmem:[%s229 + $0x10] sm:$0xff]
  %v233 = vld [vmem:[%s229 + $0x18] sm:$0xff]
  %v234 = vld [vmem:[%s229 + $0x20] sm:$0xff]
  %v235 = vld [vmem:[%s229 + $0x28] sm:$0xff]
  %v236 = vld [vmem:[%s229 + $0x30] sm:$0xff]
  %v237 = vld [vmem:[%s229 + $0x38] sm:$0xff]
  %v238 = vld [vmem:[%s229 + $0x40] sm:$0xff]
  %239 = vmatpush.msra.mxu0 0.0
  %240 = vmatpush.msra.mxu0 0.0
  %241 = vmatpush.msra.mxu0 0.0
  %242 = vmatpush.msra.mxu0 0.0
  %243 = vmatpush.msra.mxu0 0.0
  %244 = vmatpush.msra.mxu0 0.0
  %245 = vmatpush.msra.mxu0 0.0
  %246 = vmatpush.msra.mxu0 %v238
  %247 = vmatpush.msra.mxu0 %v237
  %248 = vmatpush.msra.mxu0 %v236
  %249 = vmatpush.msra.mxu0 %v235
  %250 = vmatpush.msra.mxu0 %v234
  %251 = vmatpush.msra.mxu0 %v233
  %252 = vmatpush.msra.mxu0 %v232
  %253 = vmatpush.msra.mxu0 %v231
  %254 = vmatpush.msra.mxu0 %v230
  %255 = vmatmul.f32.gmra.mxu0 %v34
  %v256 = vpop.f32.mrf.mxu0
  %v257 = vadd.f32 0.0, %v256
  %258 = vmatmul.f32.gmra.mxu0 %v37
  %v259 = vpop.f32.mrf.mxu0
  %v260 = vadd.f32 0.0, %v259
  %261 = vdwg.mxu0
  %v262 = vmul.f32 %v257, %v65
  %v263 = vmul.f32 %v260, %v70
  %v264 = vadd.f32 %v262, %v77
  %v265 = vadd.f32 %v263, %v82
  %v266 = vmul.f32 %v264, 0.70710677
  %v267 = vmul.f32 %v265, 0.70710677
  %vm268 = vcmp.ge.f32.partialorder %v266, 0.0
  %vm269 = vcmp.ge.f32.partialorder %v267, 0.0
  %v270 = vsel %vm268, 1.0, -1.0
  %v271 = vsel %vm269, 1.0, -1.0
  %v272 = vand.u32 2147483647, %v266
  %v273 = vand.u32 2147483647, %v267
  %v274 = vmul.f32 %v272, 0.3275911
  %v275 = vmul.f32 %v273, 0.3275911
  %v276 = vadd.f32 %v274, 1.0
  %v277 = vadd.f32 %v275, 1.0
  %v278 = vrcp.pop %v276
  %v279 = vrcp.pop %v277
  %v280 = vmul.f32 %v278, 1.0614054
  %v281 = vmul.f32 %v279, 1.0614054
  %v282 = vadd.f32 %v280, -1.4531521
  %v283 = vadd.f32 %v281, -1.4531521
  %v284 = vmul.f32 %v282, %v278
  %v285 = vmul.f32 %v283, %v279
  %v286 = vadd.f32 %v284, 1.4214138
  %v287 = vadd.f32 %v285, 1.4214138
  %v288 = vmul.f32 %v286, %v278
  %v289 = vmul.f32 %v287, %v279
  %v290 = vadd.f32 %v288, -0.28449672
  %v291 = vadd.f32 %v289, -0.28449672
  %v292 = vmul.f32 %v290, %v278
  %v293 = vmul.f32 %v291, %v279
  %v294 = vadd.f32 %v292, 0.2548296
  %v295 = vadd.f32 %v293, 0.2548296
  %v296 = vmul.f32 %v294, %v278
  %v297 = vmul.f32 %v295, %v279
  %v298 = vsub.f32 0.0, %v272
  %v299 = vsub.f32 0.0, %v273
  %v300 = vmul.f32 %v298, %v272
  %v301 = vmul.f32 %v299, %v273
  %v302 = vmul.f32 %v300, 1.442695
  %v303 = vpow.pop %v302
  %v304 = vmul.f32 %v301, 1.442695
  %v305 = vpow.pop %v304
  %v306 = vmul.f32 %v296, %v303
  %v307 = vmul.f32 %v297, %v305
  %v308 = vsub.f32 1.0, %v306
  %v309 = vsub.f32 1.0, %v307
  %v310 = vmul.f32 %v270, %v308
  %v311 = vmul.f32 %v271, %v309
  %v312 = vmul.f32 %v264, 0.5
  %v313 = vmul.f32 %v265, 0.5
  %v314 = vadd.f32 %v310, 1.0
  %v315 = vadd.f32 %v311, 1.0
  %v316 = vmul.f32 %v312, %v314
  %v317 = vmul.f32 %v313, %v315
  %v318 = vmax.f32 %v227, %v316
  %v319 = vmax.f32 %v228, %v317
  %s320 = scalar_lea.vmem %s0, 216
  %v321 = vld [vmem:[%s320] sm:$0xff]
  %v322 = vld [vmem:[%s320 + $0x8] sm:$0xff]
  %v323 = vld [vmem:[%s320 + $0x10] sm:$0xff]
  %v324 = vld [vmem:[%s320 + $0x18] sm:$0xff]
  %v325 = vld [vmem:[%s320 + $0x20] sm:$0xff]
  %v326 = vld [vmem:[%s320 + $0x28] sm:$0xff]
  %v327 = vld [vmem:[%s320 + $0x30] sm:$0xff]
  %v328 = vld [vmem:[%s320 + $0x38] sm:$0xff]
  %v329 = vld [vmem:[%s320 + $0x40] sm:$0xff]
  %330 = vmatpush.msra.mxu0 0.0
  %331 = vmatpush.msra.mxu0 0.0
  %332 = vmatpush.msra.mxu0 0.0
  %333 = vmatpush.msra.mxu0 0.0
  %334 = vmatpush.msra.mxu0 0.0
  %335 = vmatpush.msra.mxu0 0.0
  %336 = vmatpush.msra.mxu0 0.0
  %337 = vmatpush.msra.mxu0 %v329
  %338 = vmatpush.msra.mxu0 %v328
  %339 = vmatpush.msra.mxu0 %v327
  %340 = vmatpush.msra.mxu0 %v326
  %341 = vmatpush.msra.mxu0 %v325
  %342 = vmatpush.msra.mxu0 %v324
  %343 = vmatpush.msra.mxu0 %v323
  %344 = vmatpush.msra.mxu0 %v322
  %345 = vmatpush.msra.mxu0 %v321
  %346 = vmatmul.f32.gmra.mxu0 %v34
  %v347 = vpop.f32.mrf.mxu0
  %v348 = vadd.f32 0.0, %v347
  %349 = vmatmul.f32.gmra.mxu0 %v37
  %v350 = vpop.f32.mrf.mxu0
  %v351 = vadd.f32 0.0, %v350
  %352 = vdwg.mxu0
  %v353 = vmul.f32 %v348, %v65
  %v354 = vmul.f32 %v351, %v70
  %v355 = vadd.f32 %v353, %v77
  %v356 = vadd.f32 %v354, %v82
  %v357 = vmul.f32 %v355, 0.70710677
  %v358 = vmul.f32 %v356, 0.70710677
  %vm359 = vcmp.ge.f32.partialorder %v357, 0.0
  %vm360 = vcmp.ge.f32.partialorder %v358, 0.0
  %v361 = vsel %vm359, 1.0, -1.0
  %v362 = vsel %vm360, 1.0, -1.0
  %v363 = vand.u32 2147483647, %v357
  %v364 = vand.u32 2147483647, %v358
  %v365 = vmul.f32 %v363, 0.3275911
  %v366 = vmul.f32 %v364, 0.3275911
  %v367 = vadd.f32 %v365, 1.0
  %v368 = vadd.f32 %v366, 1.0
  %v369 = vrcp.pop %v367
  %v370 = vrcp.pop %v368
  %v371 = vmul.f32 %v369, 1.0614054
  %v372 = vmul.f32 %v370, 1.0614054
  %v373 = vadd.f32 %v371, -1.4531521
  %v374 = vadd.f32 %v372, -1.4531521
  %v375 = vmul.f32 %v373, %v369
  %v376 = vmul.f32 %v374, %v370
  %v377 = vadd.f32 %v375, 1.4214138
  %v378 = vadd.f32 %v376, 1.4214138
  %v379 = vmul.f32 %v377, %v369
  %v380 = vmul.f32 %v378, %v370
  %v381 = vadd.f32 %v379, -0.28449672
  %v382 = vadd.f32 %v380, -0.28449672
  %v383 = vmul.f32 %v381, %v369
  %v384 = vmul.f32 %v382, %v370
  %v385 = vadd.f32 %v383, 0.2548296
  %v386 = vadd.f32 %v384, 0.2548296
  %v387 = vmul.f32 %v385, %v369
  %v388 = vmul.f32 %v386, %v370
  %v389 = vsub.f32 0.0, %v363
  %v390 = vsub.f32 0.0, %v364
  %v391 = vmul.f32 %v389, %v363
  %v392 = vmul.f32 %v390, %v364
  %v393 = vmul.f32 %v391, 1.442695
  %v394 = vpow.pop %v393
  %v395 = vmul.f32 %v392, 1.442695
  %v396 = vpow.pop %v395
  %v397 = vmul.f32 %v387, %v394
  %v398 = vmul.f32 %v388, %v396
  %v399 = vsub.f32 1.0, %v397
  %v400 = vsub.f32 1.0, %v398
  %v401 = vmul.f32 %v361, %v399
  %v402 = vmul.f32 %v362, %v400
  %v403 = vmul.f32 %v355, 0.5
  %v404 = vmul.f32 %v356, 0.5
  %v405 = vadd.f32 %v401, 1.0
  %v406 = vadd.f32 %v402, 1.0
  %v407 = vmul.f32 %v403, %v405
  %v408 = vmul.f32 %v404, %v406
  %v409 = vmax.f32 %v318, %v407
  %v410 = vmax.f32 %v319, %v408
  %411 = vst [vmem:[%s4] sm:$0xff] %v409
  %412 = vst [vmem:[%s4 + $0x8] sm:$0xff] %v410
  // Predicated region
  $region18: #{hybrid_transformer_forward.7} parent=0 // pred_check
    _
  $region19: #{hybrid_transformer_forward.7} parent=0 // pred_check_branch
    %414 = sbr.rel (0) target = $region21
  $region20: #{hybrid_transformer_forward.7} parent=0 // pred_region
    _
  $region21: #{hybrid_transformer_forward.7} parent=0 // pred_fallthru
    _
  // Predicated region
  $region22: #{hybrid_transformer_forward.7} parent=0 // pred_check
    _
  $region23: #{hybrid_transformer_forward.7} parent=0 // pred_check_branch
    %416 = sbr.rel (0) target = $region25
  $region24: #{hybrid_transformer_forward.7} parent=0 // pred_region
    _
  $region25: #{hybrid_transformer_forward.7} parent=0 // pred_fallthru
    _

// kernel: hybrid_transformer_forward.8
$region0: #{hybrid_transformer_forward.8}
  #allocation0 [shape = 'u32[]', space=smem, size = 0x4, offset = 0x4, fixed_abs, tag = 'smem constant byte address 0x4 - core index']
  #allocation1 [shape = 'u32[72,128]{1,0:T(1,128)}', space=vmem, size = 0x9000, scoped, tag = 'internal scratch']
  %s0 = inlined_call_operand.vmem [shape: f32[2,16,16], index: 0, kind: input, shape index: {}]
  %s1 = inlined_call_operand.vmem [shape: f32[16,16], index: 1, kind: input, shape index: {}]
  %s2 = inlined_call_operand.vmem [shape: f32[16,1], index: 2, kind: input, shape index: {}]
  %s3 = inlined_call_operand.vmem [shape: f32[16,1], index: 3, kind: input, shape index: {}]
  %s4 = inlined_call_operand.vmem [shape: f32[16,16], index: 4, kind: input, shape index: {}]
  %s5 = inlined_call_operand.vmem [shape: f32[16,1], index: 5, kind: input, shape index: {}]
  %s6 = inlined_call_operand.vmem [shape: f32[16,16], index: 6, kind: input, shape index: {}]
  %s7 = inlined_call_operand.vmem [shape: f32[16,1], index: 7, kind: input, shape index: {}]
  %s8 = inlined_call_operand.vmem [shape: f32[16,16], index: 8, kind: input, shape index: {}]
  %s9 = inlined_call_operand.vmem [shape: f32[16,1], index: 9, kind: input, shape index: {}]
  %s10 = inlined_call_operand.vmem [shape: f32[16,16], index: 10, kind: input, shape index: {}]
  %s11 = inlined_call_operand.vmem [shape: f32[16,1], index: 11, kind: input, shape index: {}]
  %s12 = inlined_call_operand.vmem [shape: f32[16,1], index: 12, kind: input, shape index: {}]
  %s13 = inlined_call_operand.vmem [shape: f32[16,1], index: 13, kind: input, shape index: {}]
  %s14 = inlined_call_operand.vmem [shape: f32[64,16], index: 14, kind: input, shape index: {}]
  %s15 = inlined_call_operand.vmem [shape: f32[64,1], index: 15, kind: input, shape index: {}]
  %s16 = inlined_call_operand.vmem [shape: f32[16,64], index: 16, kind: input, shape index: {}]
  %s17 = inlined_call_operand.vmem [shape: f32[16,1], index: 17, kind: input, shape index: {}]
  %s18 = inlined_call_operand.vmem [shape: f32[2,16,16], index: 18, kind: output, shape index: {}]
  %s19 = sld [smem:[#allocation0]]
  $region105: #{hybrid_transformer_forward.8} parent=0
    _
  %s21 = ssub.s32 1, %s19
  %s22 = scalar_select 0, %s21, %s19
  loop: start=0, step=1, limit=4
  $region2: #{hybrid_transformer_forward.8} parent=0 // loop_pre_header
    _
  $region3: #{hybrid_transformer_forward.8} parent=0 // loop_header
    %s24 = sphi 0, %s28
    %p25 = scmp.ge.s32.totalorder %s24, 4
    %s34 = sphi 0, %s36
    %s37 = sphi 0, %s34
    %s38 = sphi 0, %s37
    %s54 = sphi 0, %s38
    %s58 = sphi 0, %s58
    %s60 = sphi 0, %s58
    %s61 = sphi 0, %s60
    %s75 = sphi 0, %s61
    %s79 = sphi 0, %s79
    %s81 = sphi 0, %s79
    %s82 = sphi 0, %s81
    %s96 = sphi 0, %s82
    %s100 = sphi 0, %s100
    %s102 = sphi 0, %s100
    %s103 = sphi 0, %s102
    %s117 = sphi 0, %s103
    %s121 = sphi 0, %s121
    %s123 = sphi 0, %s121
    %s124 = sphi 0, %s123
    %s138 = sphi 0, %s124
    %s142 = sphi 0, %s142
    %s144 = sphi 0, %s142
    %s145 = sphi 0, %s144
    %s159 = sphi 0, %s145
    %s163 = sphi 0, %s163
    %s165 = sphi 0, %s163
    %s166 = sphi 0, %s165
    %s180 = sphi 0, %s166
    %s184 = sphi 0, %s184
    %s186 = sphi 0, %s184
    %s187 = sphi 0, %s186
    %s201 = sphi 0, %s187
    %s205 = sphi 0, %s205
    %s207 = sphi 0, %s205
    %s208 = sphi 0, %s207
    %s222 = sphi 0, %s208
    %s226 = sphi 0, %s226
    %s228 = sphi 0, %s226
    %s229 = sphi 0, %s228
    %s243 = sphi 0, %s229
    %s247 = sphi 0, %s247
    %s249 = sphi 0, %s247
    %s250 = sphi 0, %s249
    %s264 = sphi 0, %s250
    %s268 = sphi 0, %s268
    %s270 = sphi 0, %s268
    %s271 = sphi 0, %s270
    %s285 = sphi 0, %s271
    %s289 = sphi 0, %s289
    %s291 = sphi 0, %s289
    %s292 = sphi 0, %s291
    %s306 = sphi 0, %s292
    %s310 = sphi 0, %s310
    %s312 = sphi 0, %s310
    %s313 = sphi 0, %s312
    %s327 = sphi 0, %s313
    %s331 = sphi 0, %s331
    %s333 = sphi 0, %s331
    %s334 = sphi 0, %s333
    %s348 = sphi 0, %s334
    %s352 = sphi 0, %s352
    %s354 = sphi 0, %s352
    %s355 = sphi 0, %s354
    %s369 = sphi 0, %s355
    %s373 = sphi 0, %s373
    %s375 = sphi 0, %s373
    %s376 = sphi 0, %s375
    %s390 = sphi 0, %s376
    %s394 = sphi 0, %s394
    %s396 = sphi 0, %s394
    %s397 = sphi 0, %s396
    %s411 = sphi 0, %s397
    %s417 = sphi 0, %s419
    %s420 = sphi 0, %s417
    %s421 = sphi 0, %s420
    %s437 = sphi 0, %s421
  $region4: #{hybrid_transformer_forward.8} parent=0 // loop_header_branch
    %27 = sbr.rel (%p25) target = $region8
  $region5: #{hybrid_transformer_forward.8} parent=0 // loop_body
    %s29 = ssub.s32 %s24, 1
    %s30 = ssub.s32 %s24, 2
    %s31 = sadd.s32 %s24, 1
    %s32 = ssub.s32 %s24, %s31
    %p33 = scmp.eq.s32.totalorder %s32, 0
    %s35 = sadd.s32 %s34, 1
    %s36 = scalar_select %p33, %s34, %s35
    %p39 = pneg %p33
    %p40 = scmp.eq.s32.totalorder %s24, 1
    %p41 = por %p39, %p40
    %p42 = scmp.ne.s32.totalorder %s34, %s37
    %p43 = scmp.eq.s32.totalorder %s24, 0
    %p44 = por %p42, %p43
    %p45 = scmp.ne.s32.totalorder %s34, %s37
    %p46 = scmp.eq.s32.totalorder %s29, 1
    %p47 = por %p45, %p46
    %p48 = scmp.ne.s32.totalorder %s37, %s38
    %p49 = scmp.eq.s32.totalorder %s29, 0
    %p50 = por %p48, %p49
    %p51 = scmp.ne.s32.totalorder %s37, %s38
    %p52 = scmp.eq.s32.totalorder %s30, 1
    %p53 = por %p51, %p52
    %p55 = scmp.ne.s32.totalorder %s38, %s54
    %p56 = scmp.eq.s32.totalorder %s30, 0
    %p57 = por %p55, %p56
    %s59 = sadd.s32 %s58, 1
    %p62 = scmp.eq.s32.totalorder %s24, 1
    %p63 = scmp.ne.s32.totalorder %s58, %s60
    %p64 = scmp.eq.s32.totalorder %s24, 0
    %p65 = por %p63, %p64
    %p66 = scmp.ne.s32.totalorder %s58, %s60
    %p67 = scmp.eq.s32.totalorder %s29, 1
    %p68 = por %p66, %p67
    %p69 = scmp.ne.s32.totalorder %s60, %s61
    %p70 = scmp.eq.s32.totalorder %s29, 0
    %p71 = por %p69, %p70
    %p72 = scmp.ne.s32.totalorder %s60, %s61
    %p73 = scmp.eq.s32.totalorder %s30, 1
    %p74 = por %p72, %p73
    %p76 = scmp.ne.s32.totalorder %s61, %s75
    %p77 = scmp.eq.s32.totalorder %s30, 0
    %p78 = por %p76, %p77
    %s80 = sadd.s32 %s79, 1
    %p83 = scmp.eq.s32.totalorder %s24, 1
    %p84 = scmp.ne.s32.totalorder %s79, %s81
    %p85 = scmp.eq.s32.totalorder %s24, 0
    %p86 = por %p84, %p85
    %p87 = scmp.ne.s32.totalorder %s79, %s81
    %p88 = scmp.eq.s32.totalorder %s29, 1
    %p89 = por %p87, %p88
    %p90 = scmp.ne.s32.totalorder %s81, %s82
    %p91 = scmp.eq.s32.totalorder %s29, 0
    %p92 = por %p90, %p91
    %p93 = scmp.ne.s32.totalorder %s81, %s82
    %p94 = scmp.eq.s32.totalorder %s30, 1
    %p95 = por %p93, %p94
    %p97 = scmp.ne.s32.totalorder %s82, %s96
    %p98 = scmp.eq.s32.totalorder %s30, 0
    %p99 = por %p97, %p98
    %s101 = sadd.s32 %s100, 1
    %p104 = scmp.eq.s32.totalorder %s24, 1
    %p105 = scmp.ne.s32.totalorder %s100, %s102
    %p106 = scmp.eq.s32.totalorder %s24, 0
    %p107 = por %p105, %p106
    %p108 = scmp.ne.s32.totalorder %s100, %s102
    %p109 = scmp.eq.s32.totalorder %s29, 1
    %p110 = por %p108, %p109
    %p111 = scmp.ne.s32.totalorder %s102, %s103
    %p112 = scmp.eq.s32.totalorder %s29, 0
    %p113 = por %p111, %p112
    %p114 = scmp.ne.s32.totalorder %s102, %s103
    %p115 = scmp.eq.s32.totalorder %s30, 1
    %p116 = por %p114, %p115
    %p118 = scmp.ne.s32.totalorder %s103, %s117
    %p119 = scmp.eq.s32.totalorder %s30, 0
    %p120 = por %p118, %p119
    %s122 = sadd.s32 %s121, 1
    %p125 = scmp.eq.s32.totalorder %s24, 1
    %p126 = scmp.ne.s32.totalorder %s121, %s123
    %p127 = scmp.eq.s32.totalorder %s24, 0
    %p128 = por %p126, %p127
    %p129 = scmp.ne.s32.totalorder %s121, %s123
    %p130 = scmp.eq.s32.totalorder %s29, 1
    %p131 = por %p129, %p130
    %p132 = scmp.ne.s32.totalorder %s123, %s124
    %p133 = scmp.eq.s32.totalorder %s29, 0
    %p134 = por %p132, %p133
    %p135 = scmp.ne.s32.totalorder %s123, %s124
    %p136 = scmp.eq.s32.totalorder %s30, 1
    %p137 = por %p135, %p136
    %p139 = scmp.ne.s32.totalorder %s124, %s138
    %p140 = scmp.eq.s32.totalorder %s30, 0
    %p141 = por %p139, %p140
    %s143 = sadd.s32 %s142, 1
    %p146 = scmp.eq.s32.totalorder %s24, 1
    %p147 = scmp.ne.s32.totalorder %s142, %s144
    %p148 = scmp.eq.s32.totalorder %s24, 0
    %p149 = por %p147, %p148
    %p150 = scmp.ne.s32.totalorder %s142, %s144
    %p151 = scmp.eq.s32.totalorder %s29, 1
    %p152 = por %p150, %p151
    %p153 = scmp.ne.s32.totalorder %s144, %s145
    %p154 = scmp.eq.s32.totalorder %s29, 0
    %p155 = por %p153, %p154
    %p156 = scmp.ne.s32.totalorder %s144, %s145
    %p157 = scmp.eq.s32.totalorder %s30, 1
    %p158 = por %p156, %p157
    %p160 = scmp.ne.s32.totalorder %s145, %s159
    %p161 = scmp.eq.s32.totalorder %s30, 0
    %p162 = por %p160, %p161
    %s164 = sadd.s32 %s163, 1
    %p167 = scmp.eq.s32.totalorder %s24, 1
    %p168 = scmp.ne.s32.totalorder %s163, %s165
    %p169 = scmp.eq.s32.totalorder %s24, 0
    %p170 = por %p168, %p169
    %p171 = scmp.ne.s32.totalorder %s163, %s165
    %p172 = scmp.eq.s32.totalorder %s29, 1
    %p173 = por %p171, %p172
    %p174 = scmp.ne.s32.totalorder %s165, %s166
    %p175 = scmp.eq.s32.totalorder %s29, 0
    %p176 = por %p174, %p175
    %p177 = scmp.ne.s32.totalorder %s165, %s166
    %p178 = scmp.eq.s32.totalorder %s30, 1
    %p179 = por %p177, %p178
    %p181 = scmp.ne.s32.totalorder %s166, %s180
    %p182 = scmp.eq.s32.totalorder %s30, 0
    %p183 = por %p181, %p182
    %s185 = sadd.s32 %s184, 1
    %p188 = scmp.eq.s32.totalorder %s24, 1
    %p189 = scmp.ne.s32.totalorder %s184, %s186
    %p190 = scmp.eq.s32.totalorder %s24, 0
    %p191 = por %p189, %p190
    %p192 = scmp.ne.s32.totalorder %s184, %s186
    %p193 = scmp.eq.s32.totalorder %s29, 1
    %p194 = por %p192, %p193
    %p195 = scmp.ne.s32.totalorder %s186, %s187
    %p196 = scmp.eq.s32.totalorder %s29, 0
    %p197 = por %p195, %p196
    %p198 = scmp.ne.s32.totalorder %s186, %s187
    %p199 = scmp.eq.s32.totalorder %s30, 1
    %p200 = por %p198, %p199
    %p202 = scmp.ne.s32.totalorder %s187, %s201
    %p203 = scmp.eq.s32.totalorder %s30, 0
    %p204 = por %p202, %p203
    %s206 = sadd.s32 %s205, 1
    %p209 = scmp.eq.s32.totalorder %s24, 1
    %p210 = scmp.ne.s32.totalorder %s205, %s207
    %p211 = scmp.eq.s32.totalorder %s24, 0
    %p212 = por %p210, %p211
    %p213 = scmp.ne.s32.totalorder %s205, %s207
    %p214 = scmp.eq.s32.totalorder %s29, 1
    %p215 = por %p213, %p214
    %p216 = scmp.ne.s32.totalorder %s207, %s208
    %p217 = scmp.eq.s32.totalorder %s29, 0
    %p218 = por %p216, %p217
    %p219 = scmp.ne.s32.totalorder %s207, %s208
    %p220 = scmp.eq.s32.totalorder %s30, 1
    %p221 = por %p219, %p220
    %p223 = scmp.ne.s32.totalorder %s208, %s222
    %p224 = scmp.eq.s32.totalorder %s30, 0
    %p225 = por %p223, %p224
    %s227 = sadd.s32 %s226, 1
    %p230 = scmp.eq.s32.totalorder %s24, 1
    %p231 = scmp.ne.s32.totalorder %s226, %s228
    %p232 = scmp.eq.s32.totalorder %s24, 0
    %p233 = por %p231, %p232
    %p234 = scmp.ne.s32.totalorder %s226, %s228
    %p235 = scmp.eq.s32.totalorder %s29, 1
    %p236 = por %p234, %p235
    %p237 = scmp.ne.s32.totalorder %s228, %s229
    %p238 = scmp.eq.s32.totalorder %s29, 0
    %p239 = por %p237, %p238
    %p240 = scmp.ne.s32.totalorder %s228, %s229
    %p241 = scmp.eq.s32.totalorder %s30, 1
    %p242 = por %p240, %p241
    %p244 = scmp.ne.s32.totalorder %s229, %s243
    %p245 = scmp.eq.s32.totalorder %s30, 0
    %p246 = por %p244, %p245
    %s248 = sadd.s32 %s247, 1
    %p251 = scmp.eq.s32.totalorder %s24, 1
    %p252 = scmp.ne.s32.totalorder %s247, %s249
    %p253 = scmp.eq.s32.totalorder %s24, 0
    %p254 = por %p252, %p253
    %p255 = scmp.ne.s32.totalorder %s247, %s249
    %p256 = scmp.eq.s32.totalorder %s29, 1
    %p257 = por %p255, %p256
    %p258 = scmp.ne.s32.totalorder %s249, %s250
    %p259 = scmp.eq.s32.totalorder %s29, 0
    %p260 = por %p258, %p259
    %p261 = scmp.ne.s32.totalorder %s249, %s250
    %p262 = scmp.eq.s32.totalorder %s30, 1
    %p263 = por %p261, %p262
    %p265 = scmp.ne.s32.totalorder %s250, %s264
    %p266 = scmp.eq.s32.totalorder %s30, 0
    %p267 = por %p265, %p266
    %s269 = sadd.s32 %s268, 1
    %p272 = scmp.eq.s32.totalorder %s24, 1
    %p273 = scmp.ne.s32.totalorder %s268, %s270
    %p274 = scmp.eq.s32.totalorder %s24, 0
    %p275 = por %p273, %p274
    %p276 = scmp.ne.s32.totalorder %s268, %s270
    %p277 = scmp.eq.s32.totalorder %s29, 1
    %p278 = por %p276, %p277
    %p279 = scmp.ne.s32.totalorder %s270, %s271
    %p280 = scmp.eq.s32.totalorder %s29, 0
    %p281 = por %p279, %p280
    %p282 = scmp.ne.s32.totalorder %s270, %s271
    %p283 = scmp.eq.s32.totalorder %s30, 1
    %p284 = por %p282, %p283
    %p286 = scmp.ne.s32.totalorder %s271, %s285
    %p287 = scmp.eq.s32.totalorder %s30, 0
    %p288 = por %p286, %p287
    %s290 = sadd.s32 %s289, 1
    %p293 = scmp.eq.s32.totalorder %s24, 1
    %p294 = scmp.ne.s32.totalorder %s289, %s291
    %p295 = scmp.eq.s32.totalorder %s24, 0
    %p296 = por %p294, %p295
    %p297 = scmp.ne.s32.totalorder %s289, %s291
    %p298 = scmp.eq.s32.totalorder %s29, 1
    %p299 = por %p297, %p298
    %p300 = scmp.ne.s32.totalorder %s291, %s292
    %p301 = scmp.eq.s32.totalorder %s29, 0
    %p302 = por %p300, %p301
    %p303 = scmp.ne.s32.totalorder %s291, %s292
    %p304 = scmp.eq.s32.totalorder %s30, 1
    %p305 = por %p303, %p304
    %p307 = scmp.ne.s32.totalorder %s292, %s306
    %p308 = scmp.eq.s32.totalorder %s30, 0
    %p309 = por %p307, %p308
    %s311 = sadd.s32 %s310, 1
    %p314 = scmp.eq.s32.totalorder %s24, 1
    %p315 = scmp.ne.s32.totalorder %s310, %s312
    %p316 = scmp.eq.s32.totalorder %s24, 0
    %p317 = por %p315, %p316
    %p318 = scmp.ne.s32.totalorder %s310, %s312
    %p319 = scmp.eq.s32.totalorder %s29, 1
    %p320 = por %p318, %p319
    %p321 = scmp.ne.s32.totalorder %s312, %s313
    %p322 = scmp.eq.s32.totalorder %s29, 0
    %p323 = por %p321, %p322
    %p324 = scmp.ne.s32.totalorder %s312, %s313
    %p325 = scmp.eq.s32.totalorder %s30, 1
    %p326 = por %p324, %p325
    %p328 = scmp.ne.s32.totalorder %s313, %s327
    %p329 = scmp.eq.s32.totalorder %s30, 0
    %p330 = por %p328, %p329
    %s332 = sadd.s32 %s331, 1
    %p335 = scmp.eq.s32.totalorder %s24, 1
    %p336 = scmp.ne.s32.totalorder %s331, %s333
    %p337 = scmp.eq.s32.totalorder %s24, 0
    %p338 = por %p336, %p337
    %p339 = scmp.ne.s32.totalorder %s331, %s333
    %p340 = scmp.eq.s32.totalorder %s29, 1
    %p341 = por %p339, %p340
    %p342 = scmp.ne.s32.totalorder %s333, %s334
    %p343 = scmp.eq.s32.totalorder %s29, 0
    %p344 = por %p342, %p343
    %p345 = scmp.ne.s32.totalorder %s333, %s334
    %p346 = scmp.eq.s32.totalorder %s30, 1
    %p347 = por %p345, %p346
    %p349 = scmp.ne.s32.totalorder %s334, %s348
    %p350 = scmp.eq.s32.totalorder %s30, 0
    %p351 = por %p349, %p350
    %s353 = sadd.s32 %s352, 1
    %p356 = scmp.eq.s32.totalorder %s24, 1
    %p357 = scmp.ne.s32.totalorder %s352, %s354
    %p358 = scmp.eq.s32.totalorder %s24, 0
    %p359 = por %p357, %p358
    %p360 = scmp.ne.s32.totalorder %s352, %s354
    %p361 = scmp.eq.s32.totalorder %s29, 1
    %p362 = por %p360, %p361
    %p363 = scmp.ne.s32.totalorder %s354, %s355
    %p364 = scmp.eq.s32.totalorder %s29, 0
    %p365 = por %p363, %p364
    %p366 = scmp.ne.s32.totalorder %s354, %s355
    %p367 = scmp.eq.s32.totalorder %s30, 1
    %p368 = por %p366, %p367
    %p370 = scmp.ne.s32.totalorder %s355, %s369
    %p371 = scmp.eq.s32.totalorder %s30, 0
    %p372 = por %p370, %p371
    %s374 = sadd.s32 %s373, 1
    %p377 = scmp.eq.s32.totalorder %s24, 1
    %p378 = scmp.ne.s32.totalorder %s373, %s375
    %p379 = scmp.eq.s32.totalorder %s24, 0
    %p380 = por %p378, %p379
    %p381 = scmp.ne.s32.totalorder %s373, %s375
    %p382 = scmp.eq.s32.totalorder %s29, 1
    %p383 = por %p381, %p382
    %p384 = scmp.ne.s32.totalorder %s375, %s376
    %p385 = scmp.eq.s32.totalorder %s29, 0
    %p386 = por %p384, %p385
    %p387 = scmp.ne.s32.totalorder %s375, %s376
    %p388 = scmp.eq.s32.totalorder %s30, 1
    %p389 = por %p387, %p388
    %p391 = scmp.ne.s32.totalorder %s376, %s390
    %p392 = scmp.eq.s32.totalorder %s30, 0
    %p393 = por %p391, %p392
    %s395 = sadd.s32 %s394, 1
    %p398 = scmp.eq.s32.totalorder %s24, 1
    %p399 = scmp.ne.s32.totalorder %s394, %s396
    %p400 = scmp.eq.s32.totalorder %s24, 0
    %p401 = por %p399, %p400
    %p402 = scmp.ne.s32.totalorder %s394, %s396
    %p403 = scmp.eq.s32.totalorder %s29, 1
    %p404 = por %p402, %p403
    %p405 = scmp.ne.s32.totalorder %s396, %s397
    %p406 = scmp.eq.s32.totalorder %s29, 0
    %p407 = por %p405, %p406
    %p408 = scmp.ne.s32.totalorder %s396, %s397
    %p409 = scmp.eq.s32.totalorder %s30, 1
    %p410 = por %p408, %p409
    %p412 = scmp.ne.s32.totalorder %s397, %s411
    %p413 = scmp.eq.s32.totalorder %s30, 0
    %p414 = por %p412, %p413
    %s415 = ssub.s32 %s24, %s31
    %p416 = scmp.eq.s32.totalorder %s415, 0
    %s418 = sadd.s32 %s417, 1
    %s419 = scalar_select %p416, %s417, %s418
    %p422 = pneg %p416
    %p423 = scmp.eq.s32.totalorder %s24, 1
    %p424 = por %p422, %p423
    %p425 = scmp.ne.s32.totalorder %s417, %s420
    %p426 = scmp.eq.s32.totalorder %s24, 0
    %p427 = por %p425, %p426
    %p428 = scmp.ne.s32.totalorder %s417, %s420
    %p429 = scmp.eq.s32.totalorder %s29, 1
    %p430 = por %p428, %p429
    %p431 = scmp.ne.s32.totalorder %s420, %s421
    %p432 = scmp.eq.s32.totalorder %s29, 0
    %p433 = por %p431, %p432
    %p434 = scmp.ne.s32.totalorder %s420, %s421
    %p435 = scmp.eq.s32.totalorder %s30, 1
    %p436 = por %p434, %p435
    %p438 = scmp.ne.s32.totalorder %s421, %s437
    %p439 = scmp.eq.s32.totalorder %s30, 0
    %p440 = por %p438, %p439
    %p441 = scmp.le.s32.totalorder 1, %s24
    %p442 = scmp.lt.s32.totalorder %s24, 3
    %p443 = pnand %p441, %p442
    %p444 = pneg %p443
    // Predicated region
    $region9: #{hybrid_transformer_forward.8} parent=5 // pred_check
      _
    $region10: #{hybrid_transformer_forward.8} parent=5 // pred_check_branch
      %446 = sbr.rel (%p443) target = $region12
    $region11: #{hybrid_transformer_forward.8} parent=5 // pred_region
      %s447 = ssub.s32 %s24, 1
      // Predicated region
      $region13: #{hybrid_transformer_forward.8} parent=11 // pred_check
        %p448 = pneg %p71
      $region14: #{hybrid_transformer_forward.8} parent=11 // pred_check_branch
        %450 = sbr.rel (%p448) target = $region16
      $region15: #{hybrid_transformer_forward.8} parent=11 // pred_region
        _
      $region16: #{hybrid_transformer_forward.8} parent=11 // pred_fallthru
        _
      // Predicated region
      $region17: #{hybrid_transformer_forward.8} parent=11 // pred_check
        %p451 = pneg %p92
      $region18: #{hybrid_transformer_forward.8} parent=11 // pred_check_branch
        %453 = sbr.rel (%p451) target = $region20
      $region19: #{hybrid_transformer_forward.8} parent=11 // pred_region
        _
      $region20: #{hybrid_transformer_forward.8} parent=11 // pred_fallthru
        _
      // Predicated region
      $region21: #{hybrid_transformer_forward.8} parent=11 // pred_check
        %p454 = pneg %p113
      $region22: #{hybrid_transformer_forward.8} parent=11 // pred_check_branch
        %456 = sbr.rel (%p454) target = $region24
      $region23: #{hybrid_transformer_forward.8} parent=11 // pred_region
        _
      $region24: #{hybrid_transformer_forward.8} parent=11 // pred_fallthru
        _
      // Predicated region
      $region25: #{hybrid_transformer_forward.8} parent=11 // pred_check
        %p457 = pneg %p134
      $region26: #{hybrid_transformer_forward.8} parent=11 // pred_check_branch
        %459 = sbr.rel (%p457) target = $region28
      $region27: #{hybrid_transformer_forward.8} parent=11 // pred_region
        _
      $region28: #{hybrid_transformer_forward.8} parent=11 // pred_fallthru
        _
      // Predicated region
      $region29: #{hybrid_transformer_forward.8} parent=11 // pred_check
        %p460 = pneg %p155
      $region30: #{hybrid_transformer_forward.8} parent=11 // pred_check_branch
        %462 = sbr.rel (%p460) target = $region32
      $region31: #{hybrid_transformer_forward.8} parent=11 // pred_region
        _
      $region32: #{hybrid_transformer_forward.8} parent=11 // pred_fallthru
        _
      // Predicated region
      $region33: #{hybrid_transformer_forward.8} parent=11 // pred_check
        %p463 = pneg %p176
      $region34: #{hybrid_transformer_forward.8} parent=11 // pred_check_branch
        %465 = sbr.rel (%p463) target = $region36
      $region35: #{hybrid_transformer_forward.8} parent=11 // pred_region
        _
      $region36: #{hybrid_transformer_forward.8} parent=11 // pred_fallthru
        _
      // Predicated region
      $region37: #{hybrid_transformer_forward.8} parent=11 // pred_check
        %p466 = pneg %p197
      $region38: #{hybrid_transformer_forward.8} parent=11 // pred_check_branch
        %468 = sbr.rel (%p466) target = $region40
      $region39: #{hybrid_transformer_forward.8} parent=11 // pred_region
        _
      $region40: #{hybrid_transformer_forward.8} parent=11 // pred_fallthru
        _
      // Predicated region
      $region41: #{hybrid_transformer_forward.8} parent=11 // pred_check
        %p469 = pneg %p218
      $region42: #{hybrid_transformer_forward.8} parent=11 // pred_check_branch
        %471 = sbr.rel (%p469) target = $region44
      $region43: #{hybrid_transformer_forward.8} parent=11 // pred_region
        _
      $region44: #{hybrid_transformer_forward.8} parent=11 // pred_fallthru
        _
      // Predicated region
      $region45: #{hybrid_transformer_forward.8} parent=11 // pred_check
        %p472 = pneg %p239
      $region46: #{hybrid_transformer_forward.8} parent=11 // pred_check_branch
        %474 = sbr.rel (%p472) target = $region48
      $region47: #{hybrid_transformer_forward.8} parent=11 // pred_region
        _
      $region48: #{hybrid_transformer_forward.8} parent=11 // pred_fallthru
        _
      // Predicated region
      $region49: #{hybrid_transformer_forward.8} parent=11 // pred_check
        %p475 = pneg %p260
      $region50: #{hybrid_transformer_forward.8} parent=11 // pred_check_branch
        %477 = sbr.rel (%p475) target = $region52
      $region51: #{hybrid_transformer_forward.8} parent=11 // pred_region
        _
      $region52: #{hybrid_transformer_forward.8} parent=11 // pred_fallthru
        _
      // Predicated region
      $region53: #{hybrid_transformer_forward.8} parent=11 // pred_check
        %p478 = pneg %p281
      $region54: #{hybrid_transformer_forward.8} parent=11 // pred_check_branch
        %480 = sbr.rel (%p478) target = $region56
      $region55: #{hybrid_transformer_forward.8} parent=11 // pred_region
        _
      $region56: #{hybrid_transformer_forward.8} parent=11 // pred_fallthru
        _
      // Predicated region
      $region57: #{hybrid_transformer_forward.8} parent=11 // pred_check
        %p481 = pneg %p302
      $region58: #{hybrid_transformer_forward.8} parent=11 // pred_check_branch
        %483 = sbr.rel (%p481) target = $region60
      $region59: #{hybrid_transformer_forward.8} parent=11 // pred_region
        _
      $region60: #{hybrid_transformer_forward.8} parent=11 // pred_fallthru
        _
      // Predicated region
      $region61: #{hybrid_transformer_forward.8} parent=11 // pred_check
        %p484 = pneg %p323
      $region62: #{hybrid_transformer_forward.8} parent=11 // pred_check_branch
        %486 = sbr.rel (%p484) target = $region64
      $region63: #{hybrid_transformer_forward.8} parent=11 // pred_region
        _
      $region64: #{hybrid_transformer_forward.8} parent=11 // pred_fallthru
        _
      // Predicated region
      $region65: #{hybrid_transformer_forward.8} parent=11 // pred_check
        %p487 = pneg %p344
      $region66: #{hybrid_transformer_forward.8} parent=11 // pred_check_branch
        %489 = sbr.rel (%p487) target = $region68
      $region67: #{hybrid_transformer_forward.8} parent=11 // pred_region
        _
      $region68: #{hybrid_transformer_forward.8} parent=11 // pred_fallthru
        _
      // Predicated region
      $region69: #{hybrid_transformer_forward.8} parent=11 // pred_check
        %p490 = pneg %p365
      $region70: #{hybrid_transformer_forward.8} parent=11 // pred_check_branch
        %492 = sbr.rel (%p490) target = $region72
      $region71: #{hybrid_transformer_forward.8} parent=11 // pred_region
        _
      $region72: #{hybrid_transformer_forward.8} parent=11 // pred_fallthru
        _
      // Predicated region
      $region73: #{hybrid_transformer_forward.8} parent=11 // pred_check
        %p493 = pneg %p386
      $region74: #{hybrid_transformer_forward.8} parent=11 // pred_check_branch
        %495 = sbr.rel (%p493) target = $region76
      $region75: #{hybrid_transformer_forward.8} parent=11 // pred_region
        _
      $region76: #{hybrid_transformer_forward.8} parent=11 // pred_fallthru
        _
      // Predicated region
      $region77: #{hybrid_transformer_forward.8} parent=11 // pred_check
        %p496 = pneg %p407
      $region78: #{hybrid_transformer_forward.8} parent=11 // pred_check_branch
        %498 = sbr.rel (%p496) target = $region80
      $region79: #{hybrid_transformer_forward.8} parent=11 // pred_region
        _
      $region80: #{hybrid_transformer_forward.8} parent=11 // pred_fallthru
        _
    $region12: #{hybrid_transformer_forward.8} parent=5 // pred_fallthru
      _
    %p499 = scmp.lt.s32.totalorder %s24, 2
    // Predicated region
    $region81: #{hybrid_transformer_forward.8} parent=5 // pred_check
      %p500 = pneg %p499
    $region82: #{hybrid_transformer_forward.8} parent=5 // pred_check_branch
      %502 = sbr.rel (%p500) target = $region84
    $region83: #{hybrid_transformer_forward.8} parent=5 // pred_region
      // Predicated region
      $region85: #{hybrid_transformer_forward.8} parent=83 // pred_check
        %p503 = pneg %p44
      $region86: #{hybrid_transformer_forward.8} parent=83 // pred_check_branch
        %505 = sbr.rel (%p503) target = $region88
      $region87: #{hybrid_transformer_forward.8} parent=83 // pred_region
        %p506 = scmp.lt.s32.totalorder %s24, 1
        %s507 = scalar_select %p506, %s24, 1
        %s508 = smul.addr %s507, 2
        %s509 = smul.addr %s508, 8
        %s510 = scalar_lea.vmem %s0, %s509
      $region88: #{hybrid_transformer_forward.8} parent=83 // pred_fallthru
        _
    $region84: #{hybrid_transformer_forward.8} parent=5 // pred_fallthru
      _
    %p511 = scmp.le.s32.totalorder 1, %s24
    %p512 = scmp.lt.s32.totalorder %s24, 3
    %p513 = pnand %p511, %p512
    %p514 = pneg %p513
    // Predicated region
    $region89: #{hybrid_transformer_forward.8} parent=5 // pred_check
      _
    $region90: #{hybrid_transformer_forward.8} parent=5 // pred_check_branch
      %516 = sbr.rel (%p513) target = $region92
    $region91: #{hybrid_transformer_forward.8} parent=5 // pred_region
      %s517 = ssub.s32 %s24, 1
      %p518 = scmp.lt.s32.totalorder %s29, 1
      %s519 = scalar_select %p518, %s29, 1
      %s520 = smul.addr %s519, 2
      %s521 = smul.addr %s520, 8
      %s522 = scalar_lea.vmem %s0, %s521
      %p523 = pneg %p50
      %p524 = pneg %p47
      %p525 = pneg %p71
      %p526 = pneg %p68
      %p527 = pneg %p92
      %p528 = pneg %p89
      %p529 = pneg %p113
      %p530 = pneg %p110
      %p531 = pneg %p134
      %p532 = pneg %p131
      %p533 = pneg %p155
      %p534 = pneg %p152
      %p535 = pneg %p176
      %p536 = pneg %p173
      %p537 = pneg %p197
      %p538 = pneg %p194
      %p539 = pneg %p218
      %p540 = pneg %p215
      %p541 = pneg %p239
      %p542 = pneg %p236
      %p543 = pneg %p260
      %p544 = pneg %p257
      %p545 = pneg %p281
      %p546 = pneg %p278
      %p547 = pneg %p302
      %p548 = pneg %p299
      %p549 = pneg %p323
      %p550 = pneg %p320
      %p551 = pneg %p344
      %p552 = pneg %p341
      %p553 = pneg %p365
      %p554 = pneg %p362
      %p555 = pneg %p386
      %p556 = pneg %p383
      %p557 = pneg %p407
      %p558 = pneg %p404
      %p559 = pneg %p433
      %p560 = pneg %p430
      %p561 = scmp.lt.s32.totalorder %s29, 1
      %s562 = scalar_select %p561, %s29, 1
      %s563 = smul.addr %s562, 2
      %s564 = smul.addr %s563, 8
      %s565 = scalar_lea.vmem %s18, %s564
      %p566 = scmp.lt.s32.totalorder %s29, 1
      %s567 = scalar_select %p566, %s29, 1
      %s568 = smul.addr %s567, 2
      %s569 = smul.addr %s568, 8
      %s570 = scalar_lea.vmem %s0, %s569
      %p571 = scmp.lt.s32.totalorder %s29, 1
      %s572 = scalar_select %p571, %s29, 1
      %s573 = smul.addr %s572, 2
      %s574 = smul.addr %s573, 8
      %s575 = scalar_lea.vmem %s18, %s574
      %v576 = vld [vmem:[%s570] sm:$0xff]
      %v577 = vld [vmem:[%s570 + $0x8] sm:$0xff]
      %v578 = vld [vmem:[%s1] sm:$0xff]
      %v579 = vld [vmem:[%s1 + $0x8] sm:$0xff]
      %v580 = vadd.f32 %v576, %v578
      %v581 = vadd.f32 %v577, %v579
      %v582 = vld [vmem:[%s2] sm:$0xff]
      %v583 = vld [vmem:[%s2 + $0x8] sm:$0xff]
      %v584 = vld [vmem:[%s3] sm:$0xff]
      %v585 = vld [vmem:[%s3 + $0x8] sm:$0xff]
      %vm586 = vcmask 130048
      %v587 = vsel %vm586, %v580, 0.0
      %v588 = vsel %vm586, %v581, 0.0
      %v589 = vadd.f32 %v587, %v588
      %v590 = vrot.slane %v589, 4
      %v591 = vadd.f32 %v589, %v590
      %v592 = vrot.slane %v591, 2
      %v593 = vadd.f32 %v591, %v592
      %v594 = vrot.slane %v593, 1
      %v595 = vadd.f32 %v593, %v594
      %v596 = vrcp.pop 16.0
      %v597 = vmul.f32 16.0, %v596
      %v598 = vsub.f32 1.0, %v597
      %v599 = vmul.f32 %v596, %v598
      %v600 = vadd.f32 %v596, %v599
      %vm601 = vweird.f32 %v596
      %v602 = vsel %vm601, %v596, %v600
      %v603 = vmul.f32 %v595, %v602
      %v604 = vsub.f32 %v580, %v603
      %v605 = vsub.f32 %v581, %v603
      %v606 = vmul.f32 %v604, %v604
      %v607 = vmul.f32 %v605, %v605
      %v608 = vsel %vm586, %v606, 0.0
      %v609 = vsel %vm586, %v607, 0.0
      %v610 = vadd.f32 %v608, %v609
      %v611 = vrot.slane %v610, 4
      %v612 = vadd.f32 %v610, %v611
      %v613 = vrot.slane %v612, 2
      %v614 = vadd.f32 %v612, %v613
      %v615 = vrot.slane %v614, 1
      %v616 = vadd.f32 %v614, %v615
      %v617 = vmul.f32 %v616, %v602
      %v618 = vadd.f32 %v617, 1e-05
      %v619 = vrsqrt.pop %v618
      %v620 = vmul.f32 %v619, %v618
      %v621 = vmul.f32 %v620, %v619
      %v622 = vmul.f32 0.5, %v621
      %v623 = vsub.f32 1.5, %v622
      %v624 = vmul.f32 %v619, %v623
      %vm625 = vweird.f32 %v618
      %vm626 = vweird.f32 %v619
      %vm627 = vmor %vm625, %vm626
      %v628 = vsel %vm627, %v619, %v624
      %v629 = vmul.f32 %v604, %v628
      %v630 = vmul.f32 %v605, %v628
      %632 = vset.pattern.permute.xlu0 0
      %633 = vperm.xlu0 %632, %v582
      %v634 = vpop.permute.xlu0 %633
      %637 = vset.pattern.permute.xlu0 0
      %638 = vperm.xlu0 %637, %v583
      %v639 = vpop.permute.xlu0 %638
      %v641 = vmul.f32 %v629, %v634
      %v642 = vmul.f32 %v630, %v639
      %644 = vset.pattern.permute.xlu0 0
      %645 = vperm.xlu0 %644, %v584
      %v646 = vpop.permute.xlu0 %645
      %649 = vset.pattern.permute.xlu0 0
      %650 = vperm.xlu0 %649, %v585
      %v651 = vpop.permute.xlu0 %650
      %v653 = vadd.f32 %v641, %v646
      %v654 = vadd.f32 %v642, %v651
      %v655 = vld [vmem:[%s4] sm:$0xff]
      %v656 = vld [vmem:[%s4 + $0x8] sm:$0xff]
      %v657 = vld [vmem:[%s5] sm:$0xff]
      %v658 = vld [vmem:[%s5 + $0x8] sm:$0xff]
      %660 = vset.pattern.permute.xlu0 0
      %661 = vperm.xlu0 %660, %v657
      %v662 = vpop.permute.xlu0 %661
      %665 = vset.pattern.permute.xlu0 0
      %666 = vperm.xlu0 %665, %v658
      %v667 = vpop.permute.xlu0 %666
      %v670 = vsel %vm586, %v655, 0
      %v673 = vsel %vm586, %v656, 0
      %675 = vmatpush.msra.mxu0 0.0
      %676 = vmatpush.msra.mxu0 0.0
      %677 = vmatpush.msra.mxu0 0.0
      %678 = vmatpush.msra.mxu0 0.0
      %679 = vmatpush.msra.mxu0 0.0
      %680 = vmatpush.msra.mxu0 0.0
      %681 = vmatpush.msra.mxu0 0.0
      %682 = vmatpush.msra.mxu0 0.0
      %683 = vmatpush.msra.mxu0 0.0
      %684 = vmatpush.msra.mxu0 0.0
      %685 = vmatpush.msra.mxu0 0.0
      %686 = vmatpush.msra.mxu0 0.0
      %687 = vmatpush.msra.mxu0 0.0
      %688 = vmatpush.msra.mxu0 0.0
      %689 = vmatpush.msra.mxu0 %v654
      %690 = vmatpush.msra.mxu0 %v653
      %691 = vmatmul.f32.gmra.mxu0 %v670
      %v692 = vpop.f32.mrf.mxu0
      %v693 = vadd.f32 %v662, %v692
      %694 = vmatmul.f32.gmra.mxu0 %v673
      %v695 = vpop.f32.mrf.mxu0
      %v696 = vadd.f32 %v667, %v695
      %697 = vdwg.mxu0
      %v698 = vld [vmem:[%s6] sm:$0xff]
      %v699 = vld [vmem:[%s6 + $0x8] sm:$0xff]
      %v700 = vld [vmem:[%s7] sm:$0xff]
      %v701 = vld [vmem:[%s7 + $0x8] sm:$0xff]
      %703 = vset.pattern.permute.xlu0 0
      %704 = vperm.xlu0 %703, %v700
      %v705 = vpop.permute.xlu0 %704
      %708 = vset.pattern.permute.xlu0 0
      %709 = vperm.xlu0 %708, %v701
      %v710 = vpop.permute.xlu0 %709
      %v713 = vsel %vm586, %v698, 0
      %v716 = vsel %vm586, %v699, 0
      %718 = vmatpush.msra.mxu0 0.0
      %719 = vmatpush.msra.mxu0 0.0
      %720 = vmatpush.msra.mxu0 0.0
      %721 = vmatpush.msra.mxu0 0.0
      %722 = vmatpush.msra.mxu0 0.0
      %723 = vmatpush.msra.mxu0 0.0
      %724 = vmatpush.msra.mxu0 0.0
      %725 = vmatpush.msra.mxu0 0.0
      %726 = vmatpush.msra.mxu0 0.0
      %727 = vmatpush.msra.mxu0 0.0
      %728 = vmatpush.msra.mxu0 0.0
      %729 = vmatpush.msra.mxu0 0.0
      %730 = vmatpush.msra.mxu0 0.0
      %731 = vmatpush.msra.mxu0 0.0
      %732 = vmatpush.msra.mxu0 %v654
      %733 = vmatpush.msra.mxu0 %v653
      %734 = vmatmul.f32.gmra.mxu0 %v713
      %v735 = vpop.f32.mrf.mxu0
      %v736 = vadd.f32 %v705, %v735
      %737 = vmatmul.f32.gmra.mxu0 %v716
      %v738 = vpop.f32.mrf.mxu0
      %v739 = vadd.f32 %v710, %v738
      %740 = vdwg.mxu0
      %v741 = vld [vmem:[%s8] sm:$0xff]
      %v742 = vld [vmem:[%s8 + $0x8] sm:$0xff]
      %v743 = vld [vmem:[%s9] sm:$0xff]
      %v744 = vld [vmem:[%s9 + $0x8] sm:$0xff]
      %746 = vset.pattern.permute.xlu0 0
      %747 = vperm.xlu0 %746, %v743
      %v748 = vpop.permute.xlu0 %747
      %751 = vset.pattern.permute.xlu0 0
      %752 = vperm.xlu0 %751, %v744
      %v753 = vpop.permute.xlu0 %752
      %v756 = vsel %vm586, %v741, 0
      %v759 = vsel %vm586, %v742, 0
      %761 = vmatpush.msra.mxu0 0.0
      %762 = vmatpush.msra.mxu0 0.0
      %763 = vmatpush.msra.mxu0 0.0
      %764 = vmatpush.msra.mxu0 0.0
      %765 = vmatpush.msra.mxu0 0.0
      %766 = vmatpush.msra.mxu0 0.0
      %767 = vmatpush.msra.mxu0 0.0
      %768 = vmatpush.msra.mxu0 0.0
      %769 = vmatpush.msra.mxu0 0.0
      %770 = vmatpush.msra.mxu0 0.0
      %771 = vmatpush.msra.mxu0 0.0
      %772 = vmatpush.msra.mxu0 0.0
      %773 = vmatpush.msra.mxu0 0.0
      %774 = vmatpush.msra.mxu0 0.0
      %775 = vmatpush.msra.mxu0 %v654
      %776 = vmatpush.msra.mxu0 %v653
      %777 = vmatmul.f32.gmra.mxu0 %v756
      %v778 = vpop.f32.mrf.mxu0
      %v779 = vadd.f32 %v748, %v778
      %780 = vmatmul.f32.gmra.mxu0 %v759
      %v781 = vpop.f32.mrf.mxu0
      %v782 = vadd.f32 %v753, %v781
      %783 = vdwg.mxu0
      %784 = vxpose.xlu0.b32.start [1/16] %v693, 128
      %785 = vxpose.xlu0.b32.cont [2/16] %v696, 128
      %786 = vxpose.xlu0.b32.cont [3/16] 0.0, 128
      %787 = vxpose.xlu0.b32.cont [4/16] 0.0, 128
      %788 = vxpose.xlu0.b32.cont [5/16] 0.0, 128
      %789 = vxpose.xlu0.b32.cont [6/16] 0.0, 128
      %790 = vxpose.xlu0.b32.cont [7/16] 0.0, 128
      %791 = vxpose.xlu0.b32.cont [8/16] 0.0, 128
      %792 = vxpose.xlu0.b32.cont [9/16] 0.0, 128
      %793 = vxpose.xlu0.b32.cont [10/16] 0.0, 128
      %794 = vxpose.xlu0.b32.cont [11/16] 0.0, 128
      %795 = vxpose.xlu0.b32.cont [12/16] 0.0, 128
      %796 = vxpose.xlu0.b32.cont [13/16] 0.0, 128
      %797 = vxpose.xlu0.b32.cont [14/16] 0.0, 128
      %798 = vxpose.xlu0.b32.cont [15/16] 0.0, 128
      %799 = vxpose.xlu0.b32.end [16/16] 0.0, 128
      %v800 = vpop.trf.xlu0
      %v801 = vpop.trf.xlu0
      %v802 = vpop.trf.xlu0
      %v803 = vpop.trf.xlu0
      %v804 = vpop.trf.xlu0
      %v805 = vpop.trf.xlu0
      %v806 = vpop.trf.xlu0
      %v807 = vpop.trf.xlu0
      %v808 = vpop.trf.xlu0
      %v809 = vpop.trf.xlu0
      %v810 = vpop.trf.xlu0
      %v811 = vpop.trf.xlu0
      %v812 = vpop.trf.xlu0
      %v813 = vpop.trf.xlu0
      %v814 = vpop.trf.xlu0
      %v815 = vpop.trf.xlu0
      %v817 = vsel %vm586, %v800, 0
      %v820 = vsel %vm586, %v801, 0
      %822 = vmatpush.msra.mxu0 0.0
      %823 = vmatpush.msra.mxu0 0.0
      %824 = vmatpush.msra.mxu0 0.0
      %825 = vmatpush.msra.mxu0 0.0
      %826 = vmatpush.msra.mxu0 0.0
      %827 = vmatpush.msra.mxu0 0.0
      %828 = vmatpush.msra.mxu0 0.0
      %829 = vmatpush.msra.mxu0 0.0
      %830 = vmatpush.msra.mxu0 0.0
      %831 = vmatpush.msra.mxu0 0.0
      %832 = vmatpush.msra.mxu0 0.0
      %833 = vmatpush.msra.mxu0 0.0
      %834 = vmatpush.msra.mxu0 0.0
      %835 = vmatpush.msra.mxu0 0.0
      %836 = vmatpush.msra.mxu0 %v739
      %837 = vmatpush.msra.mxu0 %v736
      %838 = vmatmul.f32.gmra.mxu0 %v817
      %v839 = vpop.f32.mrf.mxu0
      %v840 = vadd.f32 0.0, %v839
      %841 = vmatmul.f32.gmra.mxu0 %v820
      %v842 = vpop.f32.mrf.mxu0
      %v843 = vadd.f32 0.0, %v842
      %844 = vdwg.mxu0
      %v845 = vmul.f32 %v840, 0.25
      %v846 = vmul.f32 %v843, 0.25
      %v847 = vsel %vm586, %v845, -inf
      %848 = vmax.xlane.f32.xlu0 %v847
      %v849 = vpop.xlane.xlu0 %848
      %v850 = vsel %vm586, %v846, -inf
      %851 = vmax.xlane.f32.xlu0 %v850
      %v852 = vpop.xlane.xlu0 %851
      %v853 = vsub.f32 %v845, %v849
      %v854 = vsub.f32 %v846, %v852
      %v855 = vmul.f32 %v853, 1.442695
      %v856 = vpow.pop %v855
      %v857 = vmul.f32 %v854, 1.442695
      %v858 = vpow.pop %v857
      %v859 = vsel %vm586, %v856, 0.0
      %860 = vadd.xlane.f32.xlu0 %v859
      %v861 = vpop.xlane.xlu0 %860
      %v862 = vsel %vm586, %v858, 0.0
      %863 = vadd.xlane.f32.xlu0 %v862
      %v864 = vpop.xlane.xlu0 %863
      %v865 = vrcp.pop %v861
      %v866 = vrcp.pop %v864
      %v867 = vmul.f32 %v856, %v865
      %v868 = vmul.f32 %v858, %v866
      %v870 = vsel %vm586, %v779, 0
      %v873 = vsel %vm586, %v782, 0
      %v876 = vsel %vm586, %v867, 0
      %v879 = vsel %vm586, %v868, 0
      %881 = vmatpush.xpose.msra.mxu0 0.0
      %882 = vmatpush.xpose.msra.mxu0 0.0
      %883 = vmatpush.xpose.msra.mxu0 0.0
      %884 = vmatpush.xpose.msra.mxu0 0.0
      %885 = vmatpush.xpose.msra.mxu0 0.0
      %886 = vmatpush.xpose.msra.mxu0 0.0
      %887 = vmatpush.xpose.msra.mxu0 0.0
      %888 = vmatpush.xpose.msra.mxu0 0.0
      %889 = vmatpush.xpose.msra.mxu0 0.0
      %890 = vmatpush.xpose.msra.mxu0 0.0
      %891 = vmatpush.xpose.msra.mxu0 0.0
      %892 = vmatpush.xpose.msra.mxu0 0.0
      %893 = vmatpush.xpose.msra.mxu0 0.0
      %894 = vmatpush.xpose.msra.mxu0 0.0
      %895 = vmatpush.xpose.msra.mxu0 %v879
      %896 = vmatpush.xpose.msra.mxu0 %v876
      %897 = vmatmul.f32.gmra.mxu0 %v870
      %v898 = vpop.f32.mrf.mxu0
      %v899 = vadd.f32 0.0, %v898
      %900 = vmatmul.f32.gmra.mxu0 %v873
      %v901 = vpop.f32.mrf.mxu0
      %v902 = vadd.f32 0.0, %v901
      %903 = vdwg.mxu0
      %v904 = vld [vmem:[%s10] sm:$0xff]
      %v905 = vld [vmem:[%s10 + $0x8] sm:$0xff]
      %v906 = vld [vmem:[%s11] sm:$0xff]
      %v907 = vld [vmem:[%s11 + $0x8] sm:$0xff]
      %909 = vset.pattern.permute.xlu0 0
      %910 = vperm.xlu0 %909, %v906
      %v911 = vpop.permute.xlu0 %910
      %914 = vset.pattern.permute.xlu0 0
      %915 = vperm.xlu0 %914, %v907
      %v916 = vpop.permute.xlu0 %915
      %v919 = vsel %vm586, %v904, 0
      %v922 = vsel %vm586, %v905, 0
      %924 = vmatpush.msra.mxu0 0.0
      %925 = vmatpush.msra.mxu0 0.0
      %926 = vmatpush.msra.mxu0 0.0
      %927 = vmatpush.msra.mxu0 0.0
      %928 = vmatpush.msra.mxu0 0.0
      %929 = vmatpush.msra.mxu0 0.0
      %930 = vmatpush.msra.mxu0 0.0
      %931 = vmatpush.msra.mxu0 0.0
      %932 = vmatpush.msra.mxu0 0.0
      %933 = vmatpush.msra.mxu0 0.0
      %934 = vmatpush.msra.mxu0 0.0
      %935 = vmatpush.msra.mxu0 0.0
      %936 = vmatpush.msra.mxu0 0.0
      %937 = vmatpush.msra.mxu0 0.0
      %938 = vmatpush.msra.mxu0 %v902
      %939 = vmatpush.msra.mxu0 %v899
      %940 = vmatmul.f32.gmra.mxu0 %v919
      %v941 = vpop.f32.mrf.mxu0
      %v942 = vadd.f32 %v911, %v941
      %943 = vmatmul.f32.gmra.mxu0 %v922
      %v944 = vpop.f32.mrf.mxu0
      %v945 = vadd.f32 %v916, %v944
      %946 = vdwg.mxu0
      %v947 = vadd.f32 %v580, %v942
      %v948 = vadd.f32 %v581, %v945
      %v949 = vld [vmem:[%s12] sm:$0xff]
      %v950 = vld [vmem:[%s12 + $0x8] sm:$0xff]
      %v951 = vld [vmem:[%s13] sm:$0xff]
      %v952 = vld [vmem:[%s13 + $0x8] sm:$0xff]
      %v953 = vsel %vm586, %v947, 0.0
      %v954 = vsel %vm586, %v948, 0.0
      %v955 = vadd.f32 %v953, %v954
      %v956 = vrot.slane %v955, 4
      %v957 = vadd.f32 %v955, %v956
      %v958 = vrot.slane %v957, 2
      %v959 = vadd.f32 %v957, %v958
      %v960 = vrot.slane %v959, 1
      %v961 = vadd.f32 %v959, %v960
      %v962 = vmul.f32 %v961, %v602
      %v963 = vsub.f32 %v947, %v962
      %v964 = vsub.f32 %v948, %v962
      %v965 = vmul.f32 %v963, %v963
      %v966 = vmul.f32 %v964, %v964
      %v967 = vsel %vm586, %v965, 0.0
      %v968 = vsel %vm586, %v966, 0.0
      %v969 = vadd.f32 %v967, %v968
      %v970 = vrot.slane %v969, 4
      %v971 = vadd.f32 %v969, %v970
      %v972 = vrot.slane %v971, 2
      %v973 = vadd.f32 %v971, %v972
      %v974 = vrot.slane %v973, 1
      %v975 = vadd.f32 %v973, %v974
      %v976 = vmul.f32 %v975, %v602
      %v977 = vadd.f32 %v976, 1e-05
      %v978 = vrsqrt.pop %v977
      %v979 = vmul.f32 %v978, %v977
      %v980 = vmul.f32 %v979, %v978
      %v981 = vmul.f32 0.5, %v980
      %v982 = vsub.f32 1.5, %v981
      %v983 = vmul.f32 %v978, %v982
      %vm984 = vweird.f32 %v977
      %vm985 = vweird.f32 %v978
      %vm986 = vmor %vm984, %vm985
      %v987 = vsel %vm986, %v978, %v983
      %v988 = vmul.f32 %v963, %v987
      %v989 = vmul.f32 %v964, %v987
      %991 = vset.pattern.permute.xlu0 0
      %992 = vperm.xlu0 %991, %v949
      %v993 = vpop.permute.xlu0 %992
      %996 = vset.pattern.permute.xlu0 0
      %997 = vperm.xlu0 %996, %v950
      %v998 = vpop.permute.xlu0 %997
      %v1000 = vmul.f32 %v988, %v993
      %v1001 = vmul.f32 %v989, %v998
      %1003 = vset.pattern.permute.xlu0 0
      %1004 = vperm.xlu0 %1003, %v951
      %v1005 = vpop.permute.xlu0 %1004
      %1008 = vset.pattern.permute.xlu0 0
      %1009 = vperm.xlu0 %1008, %v952
      %v1010 = vpop.permute.xlu0 %1009
      %v1012 = vadd.f32 %v1000, %v1005
      %v1013 = vadd.f32 %v1001, %v1010
      %v1014 = vld [vmem:[%s14] sm:$0xff]
      %v1015 = vld [vmem:[%s14 + $0x8] sm:$0xff]
      %v1016 = vld [vmem:[%s14 + $0x10] sm:$0xff]
      %v1017 = vld [vmem:[%s14 + $0x18] sm:$0xff]
      %v1018 = vld [vmem:[%s14 + $0x20] sm:$0xff]
      %v1019 = vld [vmem:[%s14 + $0x28] sm:$0xff]
      %v1020 = vld [vmem:[%s14 + $0x30] sm:$0xff]
      %v1021 = vld [vmem:[%s14 + $0x38] sm:$0xff]
      %v1022 = vld [vmem:[%s15] sm:$0xff]
      %v1023 = vld [vmem:[%s15 + $0x8] sm:$0xff]
      %v1024 = vld [vmem:[%s15 + $0x10] sm:$0xff]
      %v1025 = vld [vmem:[%s15 + $0x18] sm:$0xff]
      %v1026 = vld [vmem:[%s15 + $0x20] sm:$0xff]
      %v1027 = vld [vmem:[%s15 + $0x28] sm:$0xff]
      %v1028 = vld [vmem:[%s15 + $0x30] sm:$0xff]
      %v1029 = vld [vmem:[%s15 + $0x38] sm:$0xff]
      %1031 = vset.pattern.permute.xlu0 0
      %1032 = vperm.xlu0 %1031, %v1022
      %v1033 = vpop.permute.xlu0 %1032
      %1036 = vset.pattern.permute.xlu0 0
      %1037 = vperm.xlu0 %1036, %v1023
      %v1038 = vpop.permute.xlu0 %1037
      %1041 = vset.pattern.permute.xlu0 0
      %1042 = vperm.xlu0 %1041, %v1024
      %v1043 = vpop.permute.xlu0 %1042
      %1046 = vset.pattern.permute.xlu0 0
      %1047 = vperm.xlu0 %1046, %v1025
      %v1048 = vpop.permute.xlu0 %1047
      %1051 = vset.pattern.permute.xlu0 0
      %1052 = vperm.xlu0 %1051, %v1026
      %v1053 = vpop.permute.xlu0 %1052
      %1056 = vset.pattern.permute.xlu0 0
      %1057 = vperm.xlu0 %1056, %v1027
      %v1058 = vpop.permute.xlu0 %1057
      %1061 = vset.pattern.permute.xlu0 0
      %1062 = vperm.xlu0 %1061, %v1028
      %v1063 = vpop.permute.xlu0 %1062
      %1066 = vset.pattern.permute.xlu0 0
      %1067 = vperm.xlu0 %1066, %v1029
      %v1068 = vpop.permute.xlu0 %1067
      %v1071 = vsel %vm586, %v1014, 0
      %v1074 = vsel %vm586, %v1015, 0
      %v1077 = vsel %vm586, %v1016, 0
      %v1080 = vsel %vm586, %v1017, 0
      %v1083 = vsel %vm586, %v1018, 0
      %v1086 = vsel %vm586, %v1019, 0
      %v1089 = vsel %vm586, %v1020, 0
      %v1092 = vsel %vm586, %v1021, 0
      %1094 = vmatpush.msra.mxu0 0.0
      %1095 = vmatpush.msra.mxu0 0.0
      %1096 = vmatpush.msra.mxu0 0.0
      %1097 = vmatpush.msra.mxu0 0.0
      %1098 = vmatpush.msra.mxu0 0.0
      %1099 = vmatpush.msra.mxu0 0.0
      %1100 = vmatpush.msra.mxu0 0.0
      %1101 = vmatpush.msra.mxu0 0.0
      %1102 = vmatpush.msra.mxu0 0.0
      %1103 = vmatpush.msra.mxu0 0.0
      %1104 = vmatpush.msra.mxu0 0.0
      %1105 = vmatpush.msra.mxu0 0.0
      %1106 = vmatpush.msra.mxu0 0.0
      %1107 = vmatpush.msra.mxu0 0.0
      %1108 = vmatpush.msra.mxu0 %v1013
      %1109 = vmatpush.msra.mxu0 %v1012
      %1110 = vmatmul.f32.gmra.mxu0 %v1071
      %v1111 = vpop.f32.mrf.mxu0
      %v1112 = vadd.f32 %v1033, %v1111
      %1113 = vmatmul.f32.gmra.mxu0 %v1074
      %v1114 = vpop.f32.mrf.mxu0
      %v1115 = vadd.f32 %v1038, %v1114
      %1116 = vmatmul.f32.gmra.mxu0 %v1077
      %v1117 = vpop.f32.mrf.mxu0
      %v1118 = vadd.f32 %v1043, %v1117
      %1119 = vmatmul.f32.gmra.mxu0 %v1080
      %v1120 = vpop.f32.mrf.mxu0
      %v1121 = vadd.f32 %v1048, %v1120
      %1122 = vmatmul.f32.gmra.mxu0 %v1083
      %v1123 = vpop.f32.mrf.mxu0
      %v1124 = vadd.f32 %v1053, %v1123
      %1125 = vmatmul.f32.gmra.mxu0 %v1086
      %v1126 = vpop.f32.mrf.mxu0
      %v1127 = vadd.f32 %v1058, %v1126
      %1128 = vmatmul.f32.gmra.mxu0 %v1089
      %v1129 = vpop.f32.mrf.mxu0
      %v1130 = vadd.f32 %v1063, %v1129
      %1131 = vmatmul.f32.gmra.mxu0 %v1092
      %v1132 = vpop.f32.mrf.mxu0
      %v1133 = vadd.f32 %v1068, %v1132
      %1134 = vdwg.mxu0
      %v1135 = vmul.f32 %v1112, 0.70710677
      %v1136 = vmul.f32 %v1115, 0.70710677
      %v1137 = vmul.f32 %v1118, 0.70710677
      %v1138 = vmul.f32 %v1121, 0.70710677
      %v1139 = vmul.f32 %v1124, 0.70710677
      %v1140 = vmul.f32 %v1127, 0.70710677
      %v1141 = vmul.f32 %v1130, 0.70710677
      %v1142 = vmul.f32 %v1133, 0.70710677
      %vm1143 = vcmp.ge.f32.partialorder %v1135, 0.0
      %vm1144 = vcmp.ge.f32.partialorder %v1136, 0.0
      %vm1145 = vcmp.ge.f32.partialorder %v1137, 0.0
      %vm1146 = vcmp.ge.f32.partialorder %v1138, 0.0
      %vm1147 = vcmp.ge.f32.partialorder %v1139, 0.0
      %vm1148 = vcmp.ge.f32.partialorder %v1140, 0.0
      %vm1149 = vcmp.ge.f32.partialorder %v1141, 0.0
      %vm1150 = vcmp.ge.f32.partialorder %v1142, 0.0
      %v1151 = vsel %vm1143, 1.0, -1.0
      %v1152 = vsel %vm1144, 1.0, -1.0
      %v1153 = vsel %vm1145, 1.0, -1.0
      %v1154 = vsel %vm1146, 1.0, -1.0
      %v1155 = vsel %vm1147, 1.0, -1.0
      %v1156 = vsel %vm1148, 1.0, -1.0
      %v1157 = vsel %vm1149, 1.0, -1.0
      %v1158 = vsel %vm1150, 1.0, -1.0
      %v1159 = vand.u32 2147483647, %v1135
      %v1160 = vand.u32 2147483647, %v1136
      %v1161 = vand.u32 2147483647, %v1137
      %v1162 = vand.u32 2147483647, %v1138
      %v1163 = vand.u32 2147483647, %v1139
      %v1164 = vand.u32 2147483647, %v1140
      %v1165 = vand.u32 2147483647, %v1141
      %v1166 = vand.u32 2147483647, %v1142
      %v1167 = vmul.f32 %v1159, 0.3275911
      %v1168 = vmul.f32 %v1160, 0.3275911
      %v1169 = vmul.f32 %v1161, 0.3275911
      %v1170 = vmul.f32 %v1162, 0.3275911
      %v1171 = vmul.f32 %v1163, 0.3275911
      %v1172 = vmul.f32 %v1164, 0.3275911
      %v1173 = vmul.f32 %v1165, 0.3275911
      %v1174 = vmul.f32 %v1166, 0.3275911
      %v1175 = vadd.f32 %v1167, 1.0
      %v1176 = vadd.f32 %v1168, 1.0
      %v1177 = vadd.f32 %v1169, 1.0
      %v1178 = vadd.f32 %v1170, 1.0
      %v1179 = vadd.f32 %v1171, 1.0
      %v1180 = vadd.f32 %v1172, 1.0
      %v1181 = vadd.f32 %v1173, 1.0
      %v1182 = vadd.f32 %v1174, 1.0
      %v1183 = vrcp.pop %v1175
      %v1184 = vrcp.pop %v1176
      %v1185 = vrcp.pop %v1177
      %v1186 = vrcp.pop %v1178
      %v1187 = vrcp.pop %v1179
      %v1188 = vrcp.pop %v1180
      %v1189 = vrcp.pop %v1181
      %v1190 = vrcp.pop %v1182
      %v1191 = vmul.f32 %v1183, 1.0614054
      %v1192 = vmul.f32 %v1184, 1.0614054
      %v1193 = vmul.f32 %v1185, 1.0614054
      %v1194 = vmul.f32 %v1186, 1.0614054
      %v1195 = vmul.f32 %v1187, 1.0614054
      %v1196 = vmul.f32 %v1188, 1.0614054
      %v1197 = vmul.f32 %v1189, 1.0614054
      %v1198 = vmul.f32 %v1190, 1.0614054
      %v1199 = vadd.f32 %v1191, -1.4531521
      %v1200 = vadd.f32 %v1192, -1.4531521
      %v1201 = vadd.f32 %v1193, -1.4531521
      %v1202 = vadd.f32 %v1194, -1.4531521
      %v1203 = vadd.f32 %v1195, -1.4531521
      %v1204 = vadd.f32 %v1196, -1.4531521
      %v1205 = vadd.f32 %v1197, -1.4531521
      %v1206 = vadd.f32 %v1198, -1.4531521
      %v1207 = vmul.f32 %v1199, %v1183
      %v1208 = vmul.f32 %v1200, %v1184
      %v1209 = vmul.f32 %v1201, %v1185
      %v1210 = vmul.f32 %v1202, %v1186
      %v1211 = vmul.f32 %v1203, %v1187
      %v1212 = vmul.f32 %v1204, %v1188
      %v1213 = vmul.f32 %v1205, %v1189
      %v1214 = vmul.f32 %v1206, %v1190
      %v1215 = vadd.f32 %v1207, 1.4214138
      %v1216 = vadd.f32 %v1208, 1.4214138
      %v1217 = vadd.f32 %v1209, 1.4214138
      %v1218 = vadd.f32 %v1210, 1.4214138
      %v1219 = vadd.f32 %v1211, 1.4214138
      %v1220 = vadd.f32 %v1212, 1.4214138
      %v1221 = vadd.f32 %v1213, 1.4214138
      %v1222 = vadd.f32 %v1214, 1.4214138
      %v1223 = vmul.f32 %v1215, %v1183
      %v1224 = vmul.f32 %v1216, %v1184
      %v1225 = vmul.f32 %v1217, %v1185
      %v1226 = vmul.f32 %v1218, %v1186
      %v1227 = vmul.f32 %v1219, %v1187
      %v1228 = vmul.f32 %v1220, %v1188
      %v1229 = vmul.f32 %v1221, %v1189
      %v1230 = vmul.f32 %v1222, %v1190
      %v1231 = vadd.f32 %v1223, -0.28449672
      %v1232 = vadd.f32 %v1224, -0.28449672
      %v1233 = vadd.f32 %v1225, -0.28449672
      %v1234 = vadd.f32 %v1226, -0.28449672
      %v1235 = vadd.f32 %v1227, -0.28449672
      %v1236 = vadd.f32 %v1228, -0.28449672
      %v1237 = vadd.f32 %v1229, -0.28449672
      %v1238 = vadd.f32 %v1230, -0.28449672
      %v1239 = vmul.f32 %v1231, %v1183
      %v1240 = vmul.f32 %v1232, %v1184
      %v1241 = vmul.f32 %v1233, %v1185
      %v1242 = vmul.f32 %v1234, %v1186
      %v1243 = vmul.f32 %v1235, %v1187
      %v1244 = vmul.f32 %v1236, %v1188
      %v1245 = vmul.f32 %v1237, %v1189
      %v1246 = vmul.f32 %v1238, %v1190
      %v1247 = vadd.f32 %v1239, 0.2548296
      %v1248 = vadd.f32 %v1240, 0.2548296
      %v1249 = vadd.f32 %v1241, 0.2548296
      %v1250 = vadd.f32 %v1242, 0.2548296
      %v1251 = vadd.f32 %v1243, 0.2548296
      %v1252 = vadd.f32 %v1244, 0.2548296
      %v1253 = vadd.f32 %v1245, 0.2548296
      %v1254 = vadd.f32 %v1246, 0.2548296
      %v1255 = vmul.f32 %v1247, %v1183
      %v1256 = vmul.f32 %v1248, %v1184
      %v1257 = vmul.f32 %v1249, %v1185
      %v1258 = vmul.f32 %v1250, %v1186
      %v1259 = vmul.f32 %v1251, %v1187
      %v1260 = vmul.f32 %v1252, %v1188
      %v1261 = vmul.f32 %v1253, %v1189
      %v1262 = vmul.f32 %v1254, %v1190
      %v1263 = vsub.f32 0.0, %v1159
      %v1264 = vsub.f32 0.0, %v1160
      %v1265 = vsub.f32 0.0, %v1161
      %v1266 = vsub.f32 0.0, %v1162
      %v1267 = vsub.f32 0.0, %v1163
      %v1268 = vsub.f32 0.0, %v1164
      %v1269 = vsub.f32 0.0, %v1165
      %v1270 = vsub.f32 0.0, %v1166
      %v1271 = vmul.f32 %v1263, %v1159
      %v1272 = vmul.f32 %v1264, %v1160
      %v1273 = vmul.f32 %v1265, %v1161
      %v1274 = vmul.f32 %v1266, %v1162
      %v1275 = vmul.f32 %v1267, %v1163
      %v1276 = vmul.f32 %v1268, %v1164
      %v1277 = vmul.f32 %v1269, %v1165
      %v1278 = vmul.f32 %v1270, %v1166
      %v1279 = vmul.f32 %v1271, 1.442695
      %v1280 = vpow.pop %v1279
      %v1281 = vmul.f32 %v1272, 1.442695
      %v1282 = vpow.pop %v1281
      %v1283 = vmul.f32 %v1273, 1.442695
      %v1284 = vpow.pop %v1283
      %v1285 = vmul.f32 %v1274, 1.442695
      %v1286 = vpow.pop %v1285
      %v1287 = vmul.f32 %v1275, 1.442695
      %v1288 = vpow.pop %v1287
      %v1289 = vmul.f32 %v1276, 1.442695
      %v1290 = vpow.pop %v1289
      %v1291 = vmul.f32 %v1277, 1.442695
      %v1292 = vpow.pop %v1291
      %v1293 = vmul.f32 %v1278, 1.442695
      %v1294 = vpow.pop %v1293
      %v1295 = vmul.f32 %v1255, %v1280
      %v1296 = vmul.f32 %v1256, %v1282
      %v1297 = vmul.f32 %v1257, %v1284
      %v1298 = vmul.f32 %v1258, %v1286
      %v1299 = vmul.f32 %v1259, %v1288
      %v1300 = vmul.f32 %v1260, %v1290
      %v1301 = vmul.f32 %v1261, %v1292
      %v1302 = vmul.f32 %v1262, %v1294
      %v1303 = vsub.f32 1.0, %v1295
      %v1304 = vsub.f32 1.0, %v1296
      %v1305 = vsub.f32 1.0, %v1297
      %v1306 = vsub.f32 1.0, %v1298
      %v1307 = vsub.f32 1.0, %v1299
      %v1308 = vsub.f32 1.0, %v1300
      %v1309 = vsub.f32 1.0, %v1301
      %v1310 = vsub.f32 1.0, %v1302
      %v1311 = vmul.f32 %v1151, %v1303
      %v1312 = vmul.f32 %v1152, %v1304
      %v1313 = vmul.f32 %v1153, %v1305
      %v1314 = vmul.f32 %v1154, %v1306
      %v1315 = vmul.f32 %v1155, %v1307
      %v1316 = vmul.f32 %v1156, %v1308
      %v1317 = vmul.f32 %v1157, %v1309
      %v1318 = vmul.f32 %v1158, %v1310
      %v1319 = vmul.f32 %v1112, 0.5
      %v1320 = vmul.f32 %v1115, 0.5
      %v1321 = vmul.f32 %v1118, 0.5
      %v1322 = vmul.f32 %v1121, 0.5
      %v1323 = vmul.f32 %v1124, 0.5
      %v1324 = vmul.f32 %v1127, 0.5
      %v1325 = vmul.f32 %v1130, 0.5
      %v1326 = vmul.f32 %v1133, 0.5
      %v1327 = vadd.f32 %v1311, 1.0
      %v1328 = vadd.f32 %v1312, 1.0
      %v1329 = vadd.f32 %v1313, 1.0
      %v1330 = vadd.f32 %v1314, 1.0
      %v1331 = vadd.f32 %v1315, 1.0
      %v1332 = vadd.f32 %v1316, 1.0
      %v1333 = vadd.f32 %v1317, 1.0
      %v1334 = vadd.f32 %v1318, 1.0
      %v1335 = vmul.f32 %v1319, %v1327
      %v1336 = vmul.f32 %v1320, %v1328
      %v1337 = vmul.f32 %v1321, %v1329
      %v1338 = vmul.f32 %v1322, %v1330
      %v1339 = vmul.f32 %v1323, %v1331
      %v1340 = vmul.f32 %v1324, %v1332
      %v1341 = vmul.f32 %v1325, %v1333
      %v1342 = vmul.f32 %v1326, %v1334
      %v1343 = vld [vmem:[%s16] sm:$0xff]
      %v1344 = vld [vmem:[%s16 + $0x8] sm:$0xff]
      %v1345 = vld [vmem:[%s17] sm:$0xff]
      %v1346 = vld [vmem:[%s17 + $0x8] sm:$0xff]
      %1348 = vset.pattern.permute.xlu0 0
      %1349 = vperm.xlu0 %1348, %v1345
      %v1350 = vpop.permute.xlu0 %1349
      %1353 = vset.pattern.permute.xlu0 0
      %1354 = vperm.xlu0 %1353, %v1346
      %v1355 = vpop.permute.xlu0 %1354
      %vm1357 = vcmask 523264
      %v1359 = vsel %vm1357, %v1343, 0
      %v1362 = vsel %vm1357, %v1344, 0
      %1364 = vmatpush.msra.mxu0 0.0
      %1365 = vmatpush.msra.mxu0 0.0
      %1366 = vmatpush.msra.mxu0 0.0
      %1367 = vmatpush.msra.mxu0 0.0
      %1368 = vmatpush.msra.mxu0 0.0
      %1369 = vmatpush.msra.mxu0 0.0
      %1370 = vmatpush.msra.mxu0 0.0
      %1371 = vmatpush.msra.mxu0 0.0
      %1372 = vmatpush.msra.mxu0 %v1342
      %1373 = vmatpush.msra.mxu0 %v1341
      %1374 = vmatpush.msra.mxu0 %v1340
      %1375 = vmatpush.msra.mxu0 %v1339
      %1376 = vmatpush.msra.mxu0 %v1338
      %1377 = vmatpush.msra.mxu0 %v1337
      %1378 = vmatpush.msra.mxu0 %v1336
      %1379 = vmatpush.msra.mxu0 %v1335
      %1380 = vmatmul.f32.gmra.mxu0 %v1359
      %v1381 = vpop.f32.mrf.mxu0
      %v1382 = vadd.f32 %v1350, %v1381
      %1383 = vmatmul.f32.gmra.mxu0 %v1362
      %v1384 = vpop.f32.mrf.mxu0
      %v1385 = vadd.f32 %v1355, %v1384
      %1386 = vdwg.mxu0
      %v1387 = vadd.f32 %v947, %v1382
      %v1388 = vadd.f32 %v948, %v1385
      %v1389 = vadd.f32 %v1387, %v576
      %v1390 = vadd.f32 %v1388, %v577
      %1391 = vst.msk [vmem:[%s575] sm:$0xff] %vm586, %v1389
      %1392 = vst.msk [vmem:[%s575 + $0x8] sm:$0xff] %vm586, %v1390
      %p1393 = scmp.lt.s32.totalorder %s29, 1
      %s1394 = scalar_select %p1393, %s29, 1
      %s1395 = smul.addr %s1394, 2
      %s1396 = smul.addr %s1395, 8
      %s1397 = scalar_lea.vmem %s18, %s1396
      // Predicated region
      $region93: #{hybrid_transformer_forward.8} parent=91 // pred_check
        %p1398 = pneg %p430
      $region94: #{hybrid_transformer_forward.8} parent=91 // pred_check_branch
        %1400 = sbr.rel (%p1398) target = $region96
      $region95: #{hybrid_transformer_forward.8} parent=91 // pred_region
        _
      $region96: #{hybrid_transformer_forward.8} parent=91 // pred_fallthru
        _
    $region92: #{hybrid_transformer_forward.8} parent=5 // pred_fallthru
      _
    %p1401 = scmp.le.s32.totalorder 2, %s24
    // Predicated region
    $region97: #{hybrid_transformer_forward.8} parent=5 // pred_check
      %p1402 = pneg %p1401
    $region98: #{hybrid_transformer_forward.8} parent=5 // pred_check_branch
      %1404 = sbr.rel (%p1402) target = $region100
    $region99: #{hybrid_transformer_forward.8} parent=5 // pred_region
      %s1405 = ssub.s32 %s24, 2
      // Predicated region
      $region101: #{hybrid_transformer_forward.8} parent=99 // pred_check
        %p1406 = pneg %p436
      $region102: #{hybrid_transformer_forward.8} parent=99 // pred_check_branch
        %1408 = sbr.rel (%p1406) target = $region104
      $region103: #{hybrid_transformer_forward.8} parent=99 // pred_region
        %p1409 = scmp.lt.s32.totalorder %s30, 1
        %s1410 = scalar_select %p1409, %s30, 1
        %s1411 = smul.addr %s1410, 2
        %s1412 = smul.addr %s1411, 8
        %s1413 = scalar_lea.vmem %s18, %s1412
      $region104: #{hybrid_transformer_forward.8} parent=99 // pred_fallthru
        _
    $region100: #{hybrid_transformer_forward.8} parent=5 // pred_fallthru
      _
  $region6: #{hybrid_transformer_forward.8} parent=0 // loop_footer
    %s28 = sadd.s32 1, %s24
  $region7: #{hybrid_transformer_forward.8} parent=0 // loop_footer_branch
    %23 = sbr.rel target = $region3
  $region8: #{hybrid_transformer_forward.8} parent=0 // loop_exit
    _

// kernel: tile.17
$region0: #{tile.17}
  #allocation0 [shape = 's32[1]{0}', space=sflag, size = 0x4, scoped, tag = 'scoped memory for tile.17']
  %s0 = inlined_call_operand.vmem [shape: f32[8], index: 0, kind: input, shape index: {}]
  %s1 = inlined_call_operand.vmem [shape: f32[4,8], index: 1, kind: output, shape index: {}]
  // Predicated region
  $region2: #{tile.17} parent=0 // pred_check
    _
  $region3: #{tile.17} parent=0 // pred_check_branch
    %3 = sbr.rel (0) target = $region5
  $region4: #{tile.17} parent=0 // pred_region
    _
  $region5: #{tile.17} parent=0 // pred_fallthru
    _
  %v4 = vld [vmem:[%s0] ss:$0 sm:$0xff]
  %5 = vst [vmem:[%s1] sm:$0xf] %v4

// kernel: tile.0
$region0: #{tile.0}
  %s0 = inlined_call_operand.vmem [shape: f32[4,8], index: 0, kind: input, shape index: {}]
  %s1 = inlined_call_operand.vmem [shape: f32[32,1], index: 1, kind: output, shape index: {}]
  $region1: #{tile.0} parent=0
    #allocation0 [shape = 'u8[4096]{0}', space=vmem, size = 0x1000, scoped, tag = 'scoped mem for input reshape']
    %s3 = ssub.s32 16, 1
    %v4 = vld [vmem:[%s0] sm:%s3]
    %5 = vst [vmem:[#allocation0] sm:%s3] %v4
    %v6 = vld [vmem:[#allocation0] sm:$0xf]
    %vm7 = vcmask 7168
    %8 = vst.msk [vmem:[%s1] ss:$8 sm:$0xf] %vm7, %v6
    %v9 = vld [vmem:[#allocation0] sm:$0xf]
    %10 = vrot.lane.b32.xlu0 %v9, 127
    %v11 = vpop.permute.xlu0 %10
    %vm12 = vcmask 7168
    %s13 = scalar_lea.vmem %s1, 1
    %14 = vst.msk [vmem:[%s13] ss:$8 sm:$0xf] %vm12, %v11
    %v15 = vld [vmem:[#allocation0] sm:$0xf]
    %16 = vrot.lane.b32.xlu0 %v15, 126
    %v17 = vpop.permute.xlu0 %16
    %vm18 = vcmask 7168
    %s19 = scalar_lea.vmem %s1, 2
    %20 = vst.msk [vmem:[%s19] ss:$8 sm:$0xf] %vm18, %v17
    %v21 = vld [vmem:[#allocation0] sm:$0xf]
    %22 = vrot.lane.b32.xlu0 %v21, 125
    %v23 = vpop.permute.xlu0 %22
    %vm24 = vcmask 7168
    %s25 = scalar_lea.vmem %s1, 3
    %26 = vst.msk [vmem:[%s25] ss:$8 sm:$0xf] %vm24, %v23
    %v27 = vld [vmem:[#allocation0] sm:$0xf]
    %28 = vrot.lane.b32.xlu0 %v27, 124
    %v29 = vpop.permute.xlu0 %28
    %vm30 = vcmask 7168
    %s31 = scalar_lea.vmem %s1, 4
    %32 = vst.msk [vmem:[%s31] ss:$8 sm:$0xf] %vm30, %v29
    %v33 = vld [vmem:[#allocation0] sm:$0xf]
    %34 = vrot.lane.b32.xlu0 %v33, 123
    %v35 = vpop.permute.xlu0 %34
    %vm36 = vcmask 7168
    %s37 = scalar_lea.vmem %s1, 5
    %38 = vst.msk [vmem:[%s37] ss:$8 sm:$0xf] %vm36, %v35
    %v39 = vld [vmem:[#allocation0] sm:$0xf]
    %40 = vrot.lane.b32.xlu0 %v39, 122
    %v41 = vpop.permute.xlu0 %40
    %vm42 = vcmask 7168
    %s43 = scalar_lea.vmem %s1, 6
    %44 = vst.msk [vmem:[%s43] ss:$8 sm:$0xf] %vm42, %v41
    %v45 = vld [vmem:[#allocation0] sm:$0xf]
    %46 = vrot.lane.b32.xlu0 %v45, 121
    %v47 = vpop.permute.xlu0 %46
    %vm48 = vcmask 7168
    %s49 = scalar_lea.vmem %s1, 7
    %50 = vst.msk [vmem:[%s49] ss:$8 sm:$0xf] %vm48, %v47

// kernel: hybrid_transformer_forward.9
$region0: #{hybrid_transformer_forward.9}
  #allocation0 [shape = 'u32[]', space=smem, size = 0x4, offset = 0x4, fixed_abs, tag = 'smem constant byte address 0x4 - core index']
  #allocation1 [shape = 'u32[72,128]{1,0:T(1,128)}', space=vmem, size = 0x9000, scoped, tag = 'internal scratch']
  %s0 = inlined_call_operand.vmem [shape: f32[144,128], index: 0, kind: input, shape index: {}]
  %s1 = inlined_call_operand.vmem [shape: f32[16,144], index: 1, kind: input, shape index: {}]
  %s2 = inlined_call_operand.vmem [shape: f32[16,1], index: 2, kind: input, shape index: {}]
  %s3 = inlined_call_operand.vmem [shape: f32[16,1], index: 3, kind: input, shape index: {}]
  %s4 = inlined_call_operand.vmem [shape: f32[16,128], index: 4, kind: output, shape index: {}]
  %s5 = sld [smem:[#allocation0]]
  $region26: #{hybrid_transformer_forward.9} parent=0
    _
  %s7 = ssub.s32 1, %s5
  %s8 = scalar_select 0, %s7, %s5
  // Predicated region
  $region2: #{hybrid_transformer_forward.9} parent=0 // pred_check
    _
  $region3: #{hybrid_transformer_forward.9} parent=0 // pred_check_branch
    %10 = sbr.rel (0) target = $region5
  $region4: #{hybrid_transformer_forward.9} parent=0 // pred_region
    _
  $region5: #{hybrid_transformer_forward.9} parent=0 // pred_fallthru
    _
  // Predicated region
  $region6: #{hybrid_transformer_forward.9} parent=0 // pred_check
    _
  $region7: #{hybrid_transformer_forward.9} parent=0 // pred_check_branch
    %12 = sbr.rel (0) target = $region9
  $region8: #{hybrid_transformer_forward.9} parent=0 // pred_region
    _
  $region9: #{hybrid_transformer_forward.9} parent=0 // pred_fallthru
    _
  // Predicated region
  $region10: #{hybrid_transformer_forward.9} parent=0 // pred_check
    _
  $region11: #{hybrid_transformer_forward.9} parent=0 // pred_check_branch
    %14 = sbr.rel (0) target = $region13
  $region12: #{hybrid_transformer_forward.9} parent=0 // pred_region
    _
  $region13: #{hybrid_transformer_forward.9} parent=0 // pred_fallthru
    _
  // Predicated region
  $region14: #{hybrid_transformer_forward.9} parent=0 // pred_check
    _
  $region15: #{hybrid_transformer_forward.9} parent=0 // pred_check_branch
    %16 = sbr.rel (0) target = $region17
  $region16: #{hybrid_transformer_forward.9} parent=0 // pred_region
    _
  $region17: #{hybrid_transformer_forward.9} parent=0 // pred_fallthru
    _
  %v17 = vld [vmem:[%s1] sm:$0xff]
  %v18 = vld [vmem:[%s1 + $0x8] sm:$0xff]
  %v19 = vld [vmem:[%s1 + $0x10] sm:$0xff]
  %v20 = vld [vmem:[%s1 + $0x18] sm:$0xff]
  %v21 = vld [vmem:[%s0] sm:$0xff]
  %v22 = vld [vmem:[%s0 + $0x8] sm:$0xff]
  %v23 = vld [vmem:[%s0 + $0x10] sm:$0xff]
  %v24 = vld [vmem:[%s0 + $0x18] sm:$0xff]
  %v25 = vld [vmem:[%s0 + $0x20] sm:$0xff]
  %v26 = vld [vmem:[%s0 + $0x28] sm:$0xff]
  %v27 = vld [vmem:[%s0 + $0x30] sm:$0xff]
  %v28 = vld [vmem:[%s0 + $0x38] sm:$0xff]
  %v29 = vld [vmem:[%s0 + $0x40] sm:$0xff]
  %v30 = vld [vmem:[%s0 + $0x48] sm:$0xff]
  %v31 = vld [vmem:[%s0 + $0x50] sm:$0xff]
  %v32 = vld [vmem:[%s0 + $0x58] sm:$0xff]
  %v33 = vld [vmem:[%s0 + $0x60] sm:$0xff]
  %v34 = vld [vmem:[%s0 + $0x68] sm:$0xff]
  %v35 = vld [vmem:[%s0 + $0x70] sm:$0xff]
  %v36 = vld [vmem:[%s0 + $0x78] sm:$0xff]
  %v37 = vld [vmem:[%s0 + $0x80] sm:$0xff]
  %v38 = vld [vmem:[%s0 + $0x88] sm:$0xff]
  %vm39 = vcmask 130048
  %v41 = vsel %vm39, %v18, 0
  %v44 = vsel %vm39, %v20, 0
  %46 = vmatpush.msra.mxu0 %v36
  %47 = vmatpush.msra.mxu0 %v35
  %48 = vmatpush.msra.mxu0 %v34
  %49 = vmatpush.msra.mxu0 %v33
  %50 = vmatpush.msra.mxu0 %v32
  %51 = vmatpush.msra.mxu0 %v31
  %52 = vmatpush.msra.mxu0 %v30
  %53 = vmatpush.msra.mxu0 %v29
  %54 = vmatpush.msra.mxu0 %v28
  %55 = vmatpush.msra.mxu0 %v27
  %56 = vmatpush.msra.mxu0 %v26
  %57 = vmatpush.msra.mxu0 %v25
  %58 = vmatpush.msra.mxu0 %v24
  %59 = vmatpush.msra.mxu0 %v23
  %60 = vmatpush.msra.mxu0 %v22
  %61 = vmatpush.msra.mxu0 %v21
  %62 = vmatmul.f32.gmra.mxu0 %v17
  %v63 = vpop.f32.mrf.mxu0
  %v64 = vadd.f32 0.0, %v63
  %65 = vmatmul.f32.gmra.mxu0 %v19
  %v66 = vpop.f32.mrf.mxu0
  %v67 = vadd.f32 0.0, %v66
  %68 = vdwg.mxu0
  %69 = vmatpush.msra.mxu0 0.0
  %70 = vmatpush.msra.mxu0 0.0
  %71 = vmatpush.msra.mxu0 0.0
  %72 = vmatpush.msra.mxu0 0.0
  %73 = vmatpush.msra.mxu0 0.0
  %74 = vmatpush.msra.mxu0 0.0
  %75 = vmatpush.msra.mxu0 0.0
  %76 = vmatpush.msra.mxu0 0.0
  %77 = vmatpush.msra.mxu0 0.0
  %78 = vmatpush.msra.mxu0 0.0
  %79 = vmatpush.msra.mxu0 0.0
  %80 = vmatpush.msra.mxu0 0.0
  %81 = vmatpush.msra.mxu0 0.0
  %82 = vmatpush.msra.mxu0 0.0
  %83 = vmatpush.msra.mxu0 %v38
  %84 = vmatpush.msra.mxu0 %v37
  %85 = vmatmul.f32.gmra.mxu0 %v41
  %v86 = vpop.f32.mrf.mxu0
  %v87 = vadd.f32 %v64, %v86
  %88 = vmatmul.f32.gmra.mxu0 %v44
  %v89 = vpop.f32.mrf.mxu0
  %v90 = vadd.f32 %v67, %v89
  %91 = vdwg.mxu0
  %v92 = vld [vmem:[%s2] sm:$0xff]
  %v93 = vld [vmem:[%s2 + $0x8] sm:$0xff]
  %95 = vset.pattern.permute.xlu0 0
  %96 = vperm.xlu0 %95, %v92
  %v97 = vpop.permute.xlu0 %96
  %100 = vset.pattern.permute.xlu0 0
  %101 = vperm.xlu0 %100, %v93
  %v102 = vpop.permute.xlu0 %101
  %v104 = vmul.f32 %v87, %v97
  %v105 = vmul.f32 %v90, %v102
  %v106 = vld [vmem:[%s3] sm:$0xff]
  %v107 = vld [vmem:[%s3 + $0x8] sm:$0xff]
  %109 = vset.pattern.permute.xlu0 0
  %110 = vperm.xlu0 %109, %v106
  %v111 = vpop.permute.xlu0 %110
  %114 = vset.pattern.permute.xlu0 0
  %115 = vperm.xlu0 %114, %v107
  %v116 = vpop.permute.xlu0 %115
  %v118 = vadd.f32 %v104, %v111
  %v119 = vadd.f32 %v105, %v116
  %v120 = vmul.f32 %v118, 0.70710677
  %v121 = vmul.f32 %v119, 0.70710677
  %vm122 = vcmp.ge.f32.partialorder %v120, 0.0
  %vm123 = vcmp.ge.f32.partialorder %v121, 0.0
  %v124 = vsel %vm122, 1.0, -1.0
  %v125 = vsel %vm123, 1.0, -1.0
  %v126 = vand.u32 2147483647, %v120
  %v127 = vand.u32 2147483647, %v121
  %v128 = vmul.f32 %v126, 0.3275911
  %v129 = vmul.f32 %v127, 0.3275911
  %v130 = vadd.f32 %v128, 1.0
  %v131 = vadd.f32 %v129, 1.0
  %v132 = vrcp.pop %v130
  %v133 = vrcp.pop %v131
  %v134 = vmul.f32 %v132, 1.0614054
  %v135 = vmul.f32 %v133, 1.0614054
  %v136 = vadd.f32 %v134, -1.4531521
  %v137 = vadd.f32 %v135, -1.4531521
  %v138 = vmul.f32 %v136, %v132
  %v139 = vmul.f32 %v137, %v133
  %v140 = vadd.f32 %v138, 1.4214138
  %v141 = vadd.f32 %v139, 1.4214138
  %v142 = vmul.f32 %v140, %v132
  %v143 = vmul.f32 %v141, %v133
  %v144 = vadd.f32 %v142, -0.28449672
  %v145 = vadd.f32 %v143, -0.28449672
  %v146 = vmul.f32 %v144, %v132
  %v147 = vmul.f32 %v145, %v133
  %v148 = vadd.f32 %v146, 0.2548296
  %v149 = vadd.f32 %v147, 0.2548296
  %v150 = vmul.f32 %v148, %v132
  %v151 = vmul.f32 %v149, %v133
  %v152 = vsub.f32 0.0, %v126
  %v153 = vsub.f32 0.0, %v127
  %v154 = vmul.f32 %v152, %v126
  %v155 = vmul.f32 %v153, %v127
  %v156 = vmul.f32 %v154, 1.442695
  %v157 = vpow.pop %v156
  %v158 = vmul.f32 %v155, 1.442695
  %v159 = vpow.pop %v158
  %v160 = vmul.f32 %v150, %v157
  %v161 = vmul.f32 %v151, %v159
  %v162 = vsub.f32 1.0, %v160
  %v163 = vsub.f32 1.0, %v161
  %v164 = vmul.f32 %v124, %v162
  %v165 = vmul.f32 %v125, %v163
  %v166 = vmul.f32 %v118, 0.5
  %v167 = vmul.f32 %v119, 0.5
  %v168 = vadd.f32 %v164, 1.0
  %v169 = vadd.f32 %v165, 1.0
  %v170 = vmul.f32 %v166, %v168
  %v171 = vmul.f32 %v167, %v169
  %172 = vst [vmem:[%s4] sm:$0xff] %v170
  %173 = vst [vmem:[%s4 + $0x8] sm:$0xff] %v171
  // Predicated region
  $region18: #{hybrid_transformer_forward.9} parent=0 // pred_check
    _
  $region19: #{hybrid_transformer_forward.9} parent=0 // pred_check_branch
    %175 = sbr.rel (0) target = $region21
  $region20: #{hybrid_transformer_forward.9} parent=0 // pred_region
    _
  $region21: #{hybrid_transformer_forward.9} parent=0 // pred_fallthru
    _
  // Predicated region
  $region22: #{hybrid_transformer_forward.9} parent=0 // pred_check
    _
  $region23: #{hybrid_transformer_forward.9} parent=0 // pred_check_branch
    %177 = sbr.rel (0) target = $region25
  $region24: #{hybrid_transformer_forward.9} parent=0 // pred_region
    _
  $region25: #{hybrid_transformer_forward.9} parent=0 // pred_fallthru
    _

// kernel: tile.27
$region0: #{tile.27}
  #allocation0 [shape = 's32[1]{0}', space=sflag, size = 0x4, scoped, tag = 'scoped memory for tile.27']
  %s0 = inlined_call_operand.<no memory space> [shape: f32[], index: 0, kind: input, shape index: {}]
  %s1 = inlined_call_operand.vmem [shape: f32[4,1], index: 1, kind: output, shape index: {}]
  %v2 = vstv %s0
  %3 = vst [vmem:[%s1] sm:$0xf] %v2

// kernel: hybrid_transformer_forward.10
$region0: #{hybrid_transformer_forward.10}
  #allocation0 [shape = 'u32[]', space=smem, size = 0x4, offset = 0x4, fixed_abs, tag = 'smem constant byte address 0x4 - core index']
  #allocation1 [shape = 'u32[72,128]{1,0:T(1,128)}', space=vmem, size = 0x9000, scoped, tag = 'internal scratch']
  %s0 = inlined_call_operand.vmem [shape: f32[64,128], index: 0, kind: input, shape index: {}]
  %s1 = inlined_call_operand.vmem [shape: f32[32,64], index: 1, kind: input, shape index: {}]
  %s2 = inlined_call_operand.vmem [shape: f32[32,1], index: 2, kind: input, shape index: {}]
  %s3 = inlined_call_operand.vmem [shape: f32[32,1], index: 3, kind: input, shape index: {}]
  %s4 = inlined_call_operand.vmem [shape: f32[32,128], index: 4, kind: output, shape index: {}]
  %s5 = sld [smem:[#allocation0]]
  $region26: #{hybrid_transformer_forward.10} parent=0
    _
  %s7 = ssub.s32 1, %s5
  %s8 = scalar_select 0, %s7, %s5
  // Predicated region
  $region2: #{hybrid_transformer_forward.10} parent=0 // pred_check
    _
  $region3: #{hybrid_transformer_forward.10} parent=0 // pred_check_branch
    %10 = sbr.rel (0) target = $region5
  $region4: #{hybrid_transformer_forward.10} parent=0 // pred_region
    _
  $region5: #{hybrid_transformer_forward.10} parent=0 // pred_fallthru
    _
  // Predicated region
  $region6: #{hybrid_transformer_forward.10} parent=0 // pred_check
    _
  $region7: #{hybrid_transformer_forward.10} parent=0 // pred_check_branch
    %12 = sbr.rel (0) target = $region9
  $region8: #{hybrid_transformer_forward.10} parent=0 // pred_region
    _
  $region9: #{hybrid_transformer_forward.10} parent=0 // pred_fallthru
    _
  // Predicated region
  $region10: #{hybrid_transformer_forward.10} parent=0 // pred_check
    _
  $region11: #{hybrid_transformer_forward.10} parent=0 // pred_check_branch
    %14 = sbr.rel (0) target = $region13
  $region12: #{hybrid_transformer_forward.10} parent=0 // pred_region
    _
  $region13: #{hybrid_transformer_forward.10} parent=0 // pred_fallthru
    _
  // Predicated region
  $region14: #{hybrid_transformer_forward.10} parent=0 // pred_check
    _
  $region15: #{hybrid_transformer_forward.10} parent=0 // pred_check_branch
    %16 = sbr.rel (0) target = $region17
  $region16: #{hybrid_transformer_forward.10} parent=0 // pred_region
    _
  $region17: #{hybrid_transformer_forward.10} parent=0 // pred_fallthru
    _
  %v17 = vld [vmem:[%s1] sm:$0xff]
  %v18 = vld [vmem:[%s1 + $0x8] sm:$0xff]
  %v19 = vld [vmem:[%s1 + $0x10] sm:$0xff]
  %v20 = vld [vmem:[%s1 + $0x18] sm:$0xff]
  %v21 = vld [vmem:[%s0] sm:$0xff]
  %v22 = vld [vmem:[%s0 + $0x8] sm:$0xff]
  %v23 = vld [vmem:[%s0 + $0x10] sm:$0xff]
  %v24 = vld [vmem:[%s0 + $0x18] sm:$0xff]
  %v25 = vld [vmem:[%s0 + $0x20] sm:$0xff]
  %v26 = vld [vmem:[%s0 + $0x28] sm:$0xff]
  %v27 = vld [vmem:[%s0 + $0x30] sm:$0xff]
  %v28 = vld [vmem:[%s0 + $0x38] sm:$0xff]
  %vm29 = vcmask 523264
  %v31 = vsel %vm29, %v17, 0
  %v34 = vsel %vm29, %v18, 0
  %v37 = vsel %vm29, %v19, 0
  %v40 = vsel %vm29, %v20, 0
  %42 = vmatpush.msra.mxu0 0.0
  %43 = vmatpush.msra.mxu0 0.0
  %44 = vmatpush.msra.mxu0 0.0
  %45 = vmatpush.msra.mxu0 0.0
  %46 = vmatpush.msra.mxu0 0.0
  %47 = vmatpush.msra.mxu0 0.0
  %48 = vmatpush.msra.mxu0 0.0
  %49 = vmatpush.msra.mxu0 0.0
  %50 = vmatpush.msra.mxu0 %v28
  %51 = vmatpush.msra.mxu0 %v27
  %52 = vmatpush.msra.mxu0 %v26
  %53 = vmatpush.msra.mxu0 %v25
  %54 = vmatpush.msra.mxu0 %v24
  %55 = vmatpush.msra.mxu0 %v23
  %56 = vmatpush.msra.mxu0 %v22
  %57 = vmatpush.msra.mxu0 %v21
  %58 = vmatmul.f32.gmra.mxu0 %v31
  %v59 = vpop.f32.mrf.mxu0
  %v60 = vadd.f32 0.0, %v59
  %61 = vmatmul.f32.gmra.mxu0 %v34
  %v62 = vpop.f32.mrf.mxu0
  %v63 = vadd.f32 0.0, %v62
  %64 = vmatmul.f32.gmra.mxu0 %v37
  %v65 = vpop.f32.mrf.mxu0
  %v66 = vadd.f32 0.0, %v65
  %67 = vmatmul.f32.gmra.mxu0 %v40
  %v68 = vpop.f32.mrf.mxu0
  %v69 = vadd.f32 0.0, %v68
  %70 = vdwg.mxu0
  %v71 = vld [vmem:[%s2] sm:$0xff]
  %v72 = vld [vmem:[%s2 + $0x8] sm:$0xff]
  %v73 = vld [vmem:[%s2 + $0x10] sm:$0xff]
  %v74 = vld [vmem:[%s2 + $0x18] sm:$0xff]
  %76 = vset.pattern.permute.xlu0 0
  %77 = vperm.xlu0 %76, %v71
  %v78 = vpop.permute.xlu0 %77
  %81 = vset.pattern.permute.xlu0 0
  %82 = vperm.xlu0 %81, %v72
  %v83 = vpop.permute.xlu0 %82
  %86 = vset.pattern.permute.xlu0 0
  %87 = vperm.xlu0 %86, %v73
  %v88 = vpop.permute.xlu0 %87
  %91 = vset.pattern.permute.xlu0 0
  %92 = vperm.xlu0 %91, %v74
  %v93 = vpop.permute.xlu0 %92
  %v95 = vmul.f32 %v60, %v78
  %v96 = vmul.f32 %v63, %v83
  %v97 = vmul.f32 %v66, %v88
  %v98 = vmul.f32 %v69, %v93
  %v99 = vld [vmem:[%s3] sm:$0xff]
  %v100 = vld [vmem:[%s3 + $0x8] sm:$0xff]
  %v101 = vld [vmem:[%s3 + $0x10] sm:$0xff]
  %v102 = vld [vmem:[%s3 + $0x18] sm:$0xff]
  %104 = vset.pattern.permute.xlu0 0
  %105 = vperm.xlu0 %104, %v99
  %v106 = vpop.permute.xlu0 %105
  %109 = vset.pattern.permute.xlu0 0
  %110 = vperm.xlu0 %109, %v100
  %v111 = vpop.permute.xlu0 %110
  %114 = vset.pattern.permute.xlu0 0
  %115 = vperm.xlu0 %114, %v101
  %v116 = vpop.permute.xlu0 %115
  %119 = vset.pattern.permute.xlu0 0
  %120 = vperm.xlu0 %119, %v102
  %v121 = vpop.permute.xlu0 %120
  %v123 = vadd.f32 %v95, %v106
  %v124 = vadd.f32 %v96, %v111
  %v125 = vadd.f32 %v97, %v116
  %v126 = vadd.f32 %v98, %v121
  %v127 = vmul.f32 %v123, 0.70710677
  %v128 = vmul.f32 %v124, 0.70710677
  %v129 = vmul.f32 %v125, 0.70710677
  %v130 = vmul.f32 %v126, 0.70710677
  %vm131 = vcmp.ge.f32.partialorder %v127, 0.0
  %vm132 = vcmp.ge.f32.partialorder %v128, 0.0
  %vm133 = vcmp.ge.f32.partialorder %v129, 0.0
  %vm134 = vcmp.ge.f32.partialorder %v130, 0.0
  %v135 = vsel %vm131, 1.0, -1.0
  %v136 = vsel %vm132, 1.0, -1.0
  %v137 = vsel %vm133, 1.0, -1.0
  %v138 = vsel %vm134, 1.0, -1.0
  %v139 = vand.u32 2147483647, %v127
  %v140 = vand.u32 2147483647, %v128
  %v141 = vand.u32 2147483647, %v129
  %v142 = vand.u32 2147483647, %v130
  %v143 = vmul.f32 %v139, 0.3275911
  %v144 = vmul.f32 %v140, 0.3275911
  %v145 = vmul.f32 %v141, 0.3275911
  %v146 = vmul.f32 %v142, 0.3275911
  %v147 = vadd.f32 %v143, 1.0
  %v148 = vadd.f32 %v144, 1.0
  %v149 = vadd.f32 %v145, 1.0
  %v150 = vadd.f32 %v146, 1.0
  %v151 = vrcp.pop %v147
  %v152 = vrcp.pop %v148
  %v153 = vrcp.pop %v149
  %v154 = vrcp.pop %v150
  %v155 = vmul.f32 %v151, 1.0614054
  %v156 = vmul.f32 %v152, 1.0614054
  %v157 = vmul.f32 %v153, 1.0614054
  %v158 = vmul.f32 %v154, 1.0614054
  %v159 = vadd.f32 %v155, -1.4531521
  %v160 = vadd.f32 %v156, -1.4531521
  %v161 = vadd.f32 %v157, -1.4531521
  %v162 = vadd.f32 %v158, -1.4531521
  %v163 = vmul.f32 %v159, %v151
  %v164 = vmul.f32 %v160, %v152
  %v165 = vmul.f32 %v161, %v153
  %v166 = vmul.f32 %v162, %v154
  %v167 = vadd.f32 %v163, 1.4214138
  %v168 = vadd.f32 %v164, 1.4214138
  %v169 = vadd.f32 %v165, 1.4214138
  %v170 = vadd.f32 %v166, 1.4214138
  %v171 = vmul.f32 %v167, %v151
  %v172 = vmul.f32 %v168, %v152
  %v173 = vmul.f32 %v169, %v153
  %v174 = vmul.f32 %v170, %v154
  %v175 = vadd.f32 %v171, -0.28449672
  %v176 = vadd.f32 %v172, -0.28449672
  %v177 = vadd.f32 %v173, -0.28449672
  %v178 = vadd.f32 %v174, -0.28449672
  %v179 = vmul.f32 %v175, %v151
  %v180 = vmul.f32 %v176, %v152
  %v181 = vmul.f32 %v177, %v153
  %v182 = vmul.f32 %v178, %v154
  %v183 = vadd.f32 %v179, 0.2548296
  %v184 = vadd.f32 %v180, 0.2548296
  %v185 = vadd.f32 %v181, 0.2548296
  %v186 = vadd.f32 %v182, 0.2548296
  %v187 = vmul.f32 %v183, %v151
  %v188 = vmul.f32 %v184, %v152
  %v189 = vmul.f32 %v185, %v153
  %v190 = vmul.f32 %v186, %v154
  %v191 = vsub.f32 0.0, %v139
  %v192 = vsub.f32 0.0, %v140
  %v193 = vsub.f32 0.0, %v141
  %v194 = vsub.f32 0.0, %v142
  %v195 = vmul.f32 %v191, %v139
  %v196 = vmul.f32 %v192, %v140
  %v197 = vmul.f32 %v193, %v141
  %v198 = vmul.f32 %v194, %v142
  %v199 = vmul.f32 %v195, 1.442695
  %v200 = vpow.pop %v199
  %v201 = vmul.f32 %v196, 1.442695
  %v202 = vpow.pop %v201
  %v203 = vmul.f32 %v197, 1.442695
  %v204 = vpow.pop %v203
  %v205 = vmul.f32 %v198, 1.442695
  %v206 = vpow.pop %v205
  %v207 = vmul.f32 %v187, %v200
  %v208 = vmul.f32 %v188, %v202
  %v209 = vmul.f32 %v189, %v204
  %v210 = vmul.f32 %v190, %v206
  %v211 = vsub.f32 1.0, %v207
  %v212 = vsub.f32 1.0, %v208
  %v213 = vsub.f32 1.0, %v209
  %v214 = vsub.f32 1.0, %v210
  %v215 = vmul.f32 %v135, %v211
  %v216 = vmul.f32 %v136, %v212
  %v217 = vmul.f32 %v137, %v213
  %v218 = vmul.f32 %v138, %v214
  %v219 = vmul.f32 %v123, 0.5
  %v220 = vmul.f32 %v124, 0.5
  %v221 = vmul.f32 %v125, 0.5
  %v222 = vmul.f32 %v126, 0.5
  %v223 = vadd.f32 %v215, 1.0
  %v224 = vadd.f32 %v216, 1.0
  %v225 = vadd.f32 %v217, 1.0
  %v226 = vadd.f32 %v218, 1.0
  %v227 = vmul.f32 %v219, %v223
  %v228 = vmul.f32 %v220, %v224
  %v229 = vmul.f32 %v221, %v225
  %v230 = vmul.f32 %v222, %v226
  %231 = vst [vmem:[%s4] sm:$0xff] %v227
  %232 = vst [vmem:[%s4 + $0x8] sm:$0xff] %v228
  %233 = vst [vmem:[%s4 + $0x10] sm:$0xff] %v229
  %234 = vst [vmem:[%s4 + $0x18] sm:$0xff] %v230
  // Predicated region
  $region18: #{hybrid_transformer_forward.10} parent=0 // pred_check
    _
  $region19: #{hybrid_transformer_forward.10} parent=0 // pred_check_branch
    %236 = sbr.rel (0) target = $region21
  $region20: #{hybrid_transformer_forward.10} parent=0 // pred_region
    _
  $region21: #{hybrid_transformer_forward.10} parent=0 // pred_fallthru
    _
  // Predicated region
  $region22: #{hybrid_transformer_forward.10} parent=0 // pred_check
    _
  $region23: #{hybrid_transformer_forward.10} parent=0 // pred_check_branch
    %238 = sbr.rel (0) target = $region25
  $region24: #{hybrid_transformer_forward.10} parent=0 // pred_region
    _
  $region25: #{hybrid_transformer_forward.10} parent=0 // pred_fallthru
    _

// kernel: hybrid_transformer_forward.11
$region0: #{hybrid_transformer_forward.11}
  #allocation0 [shape = 'u32[]', space=smem, size = 0x4, offset = 0x4, fixed_abs, tag = 'smem constant byte address 0x4 - core index']
  #allocation1 [shape = 'u32[72,128]{1,0:T(1,128)}', space=vmem, size = 0x9000, scoped, tag = 'internal scratch']
  %s0 = inlined_call_operand.vmem [shape: f32[32,128], index: 0, kind: input, shape index: {}]
  %s1 = inlined_call_operand.vmem [shape: f32[4,32], index: 1, kind: input, shape index: {}]
  %s2 = inlined_call_operand.vmem [shape: f32[4,1], index: 2, kind: input, shape index: {}]
  %s3 = inlined_call_operand.vmem [shape: f32[4,1], index: 3, kind: input, shape index: {}]
  %s4 = inlined_call_operand.vmem [shape: f32[4,128], index: 4, kind: output, shape index: {}]
  %s5 = sld [smem:[#allocation0]]
  $region26: #{hybrid_transformer_forward.11} parent=0
    _
  %s7 = ssub.s32 1, %s5
  %s8 = scalar_select 0, %s7, %s5
  // Predicated region
  $region2: #{hybrid_transformer_forward.11} parent=0 // pred_check
    _
  $region3: #{hybrid_transformer_forward.11} parent=0 // pred_check_branch
    %10 = sbr.rel (0) target = $region5
  $region4: #{hybrid_transformer_forward.11} parent=0 // pred_region
    _
  $region5: #{hybrid_transformer_forward.11} parent=0 // pred_fallthru
    _
  // Predicated region
  $region6: #{hybrid_transformer_forward.11} parent=0 // pred_check
    _
  $region7: #{hybrid_transformer_forward.11} parent=0 // pred_check_branch
    %12 = sbr.rel (0) target = $region9
  $region8: #{hybrid_transformer_forward.11} parent=0 // pred_region
    _
  $region9: #{hybrid_transformer_forward.11} parent=0 // pred_fallthru
    _
  // Predicated region
  $region10: #{hybrid_transformer_forward.11} parent=0 // pred_check
    _
  $region11: #{hybrid_transformer_forward.11} parent=0 // pred_check_branch
    %14 = sbr.rel (0) target = $region13
  $region12: #{hybrid_transformer_forward.11} parent=0 // pred_region
    _
  $region13: #{hybrid_transformer_forward.11} parent=0 // pred_fallthru
    _
  // Predicated region
  $region14: #{hybrid_transformer_forward.11} parent=0 // pred_check
    _
  $region15: #{hybrid_transformer_forward.11} parent=0 // pred_check_branch
    %16 = sbr.rel (0) target = $region17
  $region16: #{hybrid_transformer_forward.11} parent=0 // pred_region
    _
  $region17: #{hybrid_transformer_forward.11} parent=0 // pred_fallthru
    _
  %v17 = vld [vmem:[%s1] sm:$0xf]
  %v18 = vld [vmem:[%s0] sm:$0xff]
  %v19 = vld [vmem:[%s0 + $0x8] sm:$0xff]
  %v20 = vld [vmem:[%s0 + $0x10] sm:$0xff]
  %v21 = vld [vmem:[%s0 + $0x18] sm:$0xff]
  %vm22 = vcmask 261120
  %v24 = vsel %vm22, %v17, 0
  %26 = vmatpush.msra.mxu0 0.0
  %27 = vmatpush.msra.mxu0 0.0
  %28 = vmatpush.msra.mxu0 0.0
  %29 = vmatpush.msra.mxu0 0.0
  %30 = vmatpush.msra.mxu0 0.0
  %31 = vmatpush.msra.mxu0 0.0
  %32 = vmatpush.msra.mxu0 0.0
  %33 = vmatpush.msra.mxu0 0.0
  %34 = vmatpush.msra.mxu0 0.0
  %35 = vmatpush.msra.mxu0 0.0
  %36 = vmatpush.msra.mxu0 0.0
  %37 = vmatpush.msra.mxu0 0.0
  %38 = vmatpush.msra.mxu0 %v21
  %39 = vmatpush.msra.mxu0 %v20
  %40 = vmatpush.msra.mxu0 %v19
  %41 = vmatpush.msra.mxu0 %v18
  %42 = vmatmul.f32.gmra.mxu0 %v24
  %v43 = vpop.f32.mrf.mxu0
  %v44 = vadd.f32 0.0, %v43
  %45 = vdwg.mxu0
  %v46 = vld [vmem:[%s2] sm:$0xf]
  %48 = vset.pattern.permute.xlu0 0
  %49 = vperm.xlu0 %48, %v46
  %v50 = vpop.permute.xlu0 %49
  %v52 = vmul.f32 %v44, %v50
  %v53 = vld [vmem:[%s3] sm:$0xf]
  %55 = vset.pattern.permute.xlu0 0
  %56 = vperm.xlu0 %55, %v53
  %v57 = vpop.permute.xlu0 %56
  %v59 = vadd.f32 %v52, %v57
  %60 = vst [vmem:[%s4] sm:$0xf] %v59
  // Predicated region
  $region18: #{hybrid_transformer_forward.11} parent=0 // pred_check
    _
  $region19: #{hybrid_transformer_forward.11} parent=0 // pred_check_branch
    %62 = sbr.rel (0) target = $region21
  $region20: #{hybrid_transformer_forward.11} parent=0 // pred_region
    _
  $region21: #{hybrid_transformer_forward.11} parent=0 // pred_fallthru
    _
  // Predicated region
  $region22: #{hybrid_transformer_forward.11} parent=0 // pred_check
    _
  $region23: #{hybrid_transformer_forward.11} parent=0 // pred_check_branch
    %64 = sbr.rel (0) target = $region25
  $region24: #{hybrid_transformer_forward.11} parent=0 // pred_region
    _
  $region25: #{hybrid_transformer_forward.11} parent=0 // pred_fallthru
    _

</llo_original>
